<compile_context>
chip_gen: v6e
topology: v6e:2x2x1
jax: 0.10.0
libtpu: 0.0.40
codegen_flags: <defaults>
</compile_context>

<pallas_src>
import functools

import jax
import jax.numpy as jnp
import numpy as np
from jax.experimental import pallas as pl
from jax.experimental.pallas import tpu as pltpu


def _gabor_conv_fused_kernel(params_ref, coords_ref, x_ref, o_ref, xpad_ref, *,
                             k, pad, cin, cout, h, w, h_out, w_out):
    """One batch image per grid step.

    params_ref: (C_in*C_out, 7) f32, row = ci*C_out + co, cols =
                [psi_mu, psi_rho, eps, theta, sigma, lamda, gamma]
    coords_ref: (2, K*K) f32, [xg; yg] tap coordinates (t = i*K + j)
    x_ref:      (C_in, H*W) f32 activations (channels-first, flat spatial)
    o_ref:      (C_out, H_out*W_out) f32 output block (lane-dense)
    xpad_ref:   (C_in, H_pad*W_pad) f32 VMEM scratch for zero padding
    """
    pi = np.float32(np.pi)
    kk = k * k
    wp = w + 2 * pad
    l_span = (h_out - 1) * wp + w_out   # flat span covering every output tap

    # ---- 1) Bayesian sample + Gabor filter bank: (C_in*C_out, K*K) ---------
    p = params_ref[...]
    psi_mu, psi_rho, eps = p[:, 0:1], p[:, 1:2], p[:, 2:3]
    theta, sigma, lamda, gamma = p[:, 3:4], p[:, 4:5], p[:, 5:6], p[:, 6:7]

    # Reparameterised psi = mu + eps * softplus(rho); written as log(1+exp)
    # to mirror the PyTorch module's formulation.
    psi = psi_mu + eps * jnp.log(1.0 + jnp.exp(psi_rho))
    sigma_x = sigma
    sigma_y = sigma / gamma
    ct = jnp.cos(theta - pi)
    st = jnp.sin(theta - pi)

    xg = coords_ref[0:1, :]                       # (1, K*K)
    yg = coords_ref[1:2, :]

    rot_x = xg * ct + yg * st                     # (C_in*C_out, K*K)
    rot_y = -xg * st + yg * ct
    g = jnp.exp(-0.5 * (rot_x * rot_x / (sigma_x * sigma_x) +
                        rot_y * rot_y / (sigma_y * sigma_y)))
    g = g / (2.0 * pi * sigma_x * sigma_y)
    g = g * jnp.cos(2.0 * pi / lamda * rot_x + psi)

    # ---- 2) zero-padded activations in VMEM (no HBM pad pass) --------------
    if pad == 0:
        xpad_ref[...] = x_ref[...]
    else:
        xpad_ref[...] = jnp.zeros_like(xpad_ref)
        for r in range(h):
            dst = (r + pad) * wp + pad
            xpad_ref[:, dst:dst + w] = x_ref[:, r * w:(r + 1) * w]

    # ---- 3) conv = C_in*K*K lane-dense broadcast FMAs (pure VPU path) ------
    acc = jnp.zeros((cout, l_span), jnp.float32)
    for ci in range(cin):
        xrow = xpad_ref[ci:ci + 1, :]             # (1, H_pad*W_pad)
        wblk = g[ci * cout:(ci + 1) * cout, :]    # (C_out, K*K)
        for t in range(kk):
            i, j = divmod(t, k)
            off = i * wp + j
            acc = acc + wblk[:, t:t + 1] * xrow[:, off:off + l_span]

    # ---- 4) crop the W_pad-pitched accumulator into the dense output -------
    for oh in range(h_out):
        o_ref[:, oh * w_out:(oh + 1) * w_out] = (
            acc[:, oh * wp:oh * wp + w_out].astype(o_ref.dtype))


def bayesian_gabor2d_forward(x_nchw, params, eps, *, kernel_size,
                             stride=1, padding=0, dilation=1):
    """Forward pass of BayesianGabor2D (bias=False path). Returns NCHW output."""
    # TODO(synk): stride > 1, dilation > 1 and the optional bias are not
    # implemented in-kernel; the module defaults (1, 1, bias=False) are exact.
    assert stride == 1 and dilation == 1
    assert kernel_size % 2 == 1, "np.mgrid Gabor grid assumes odd kernel_size"

    psi_mu, psi_rho, theta, sigma, lamda, gamma = params
    oc, ic = psi_mu.shape
    k = kernel_size
    kk = k * k
    n, cin, h, w = x_nchw.shape
    assert cin == ic

    hp, wp = h + 2 * padding, w + 2 * padding
    h_out = h + 2 * padding - (k - 1)
    w_out = w + 2 * padding - (k - 1)
    hw_out = h_out * w_out

    # Pack the 6 Gabor parameters + eps into one tiny (C_in*C_out, 7) slab with
    # row index = ci*C_out + co (contiguous per-channel row blocks in-kernel).
    def col(a):
        return jnp.transpose(a.astype(jnp.float32)).reshape(ic * oc)

    packed = jnp.stack([col(psi_mu), col(psi_rho), col(eps), col(theta),
                        col(sigma), col(lamda), col(gamma)], axis=1)

    # Host-built tap coordinates (same np.mgrid construction as the module).
    half = int(np.floor(k / 2))
    yy, xx = np.mgrid[-half:half + 1, -half:half + 1]
    coords = jnp.asarray(np.stack([xx.reshape(-1), yy.reshape(-1)], axis=0),
                         jnp.float32)                      # (2, K*K)

    # Lane-dense channels-first activations: free reshape, no transpose/pad.
    x_flat = x_nchw.reshape(n, cin, h * w).astype(jnp.float32)

    kernel = functools.partial(
        _gabor_conv_fused_kernel, k=k, pad=padding, cin=cin, cout=oc,
        h=h, w=w, h_out=h_out, w_out=w_out)

    out_flat = pl.pallas_call(
        kernel,
        grid=(n,),
        in_specs=[
            pl.BlockSpec((ic * oc, 7), lambda b: (0, 0)),
            pl.BlockSpec((2, kk), lambda b: (0, 0)),
            pl.BlockSpec((None, cin, h * w), lambda b: (b, 0, 0)),
        ],
        out_specs=pl.BlockSpec((None, oc, hw_out), lambda b: (b, 0, 0)),
        out_shape=jax.ShapeDtypeStruct((n, oc, hw_out), jnp.float32),
        scratch_shapes=[pltpu.VMEM((cin, hp * wp), jnp.float32)],
        compiler_params=pltpu.CompilerParams(
            dimension_semantics=("parallel",)),
    )(packed, coords, x_flat)

    # Free reshape back to NCHW (no transpose HBM pass).
    return out_flat.reshape(n, oc, h_out, w_out)


def _reference_forward(x, params, eps, kernel_size, padding):
    """Pure-JAX mirror of the PyTorch module (same sampled eps)."""
    psi_mu, psi_rho, theta, sigma, lamda, gamma = params
    k = kernel_size
    half = int(np.floor(k / 2))
    yy, xx = np.mgrid[-half:half + 1, -half:half + 1]
    xg = jnp.asarray(xx, jnp.float32)[None, None]          # (1,1,K,K)
    yg = jnp.asarray(yy, jnp.float32)[None, None]

    psi = psi_mu + eps * jnp.log1p(jnp.exp(psi_rho))
    sigma_x, sigma_y = sigma, sigma / gamma
    ct = jnp.cos(theta - np.pi)[..., None, None]
    st = jnp.sin(theta - np.pi)[..., None, None]
    rot_x = xg * ct + yg * st
    rot_y = -xg * st + yg * ct
    sx = sigma_x[..., None, None]
    sy = sigma_y[..., None, None]
    gk = jnp.exp(-0.5 * (rot_x ** 2 / sx ** 2 + rot_y ** 2 / sy ** 2))
    gk = gk / (2.0 * np.pi * sx * sy)
    gk = gk * jnp.cos(2.0 * np.pi / lamda[..., None, None] * rot_x
                      + psi[..., None, None])              # (OC, IC, K, K)

    return jax.lax.conv_general_dilated(
        x.astype(jnp.float32), gk, window_strides=(1, 1),
        padding=((padding, padding), (padding, padding)),
        dimension_numbers=("NCHW", "OIHW", "NCHW"))


if __name__ == "__main__":
    in_channels, out_channels, kernel_size, padding = 4, 8, 3, 1
    key = jax.random.PRNGKey(0)
    ks = jax.random.split(key, 8)

    # Parameter init mirroring reset_parameters(); eps is the per-forward
    # reparameterisation noise (self.eps.normal_(0, 1)).
    psi_mu = jax.random.normal(ks[0], (out_channels, in_channels), jnp.float32)
    psi_rho = jax.random.normal(ks[1], (out_channels, in_channels), jnp.float32)
    theta = jax.random.uniform(ks[2], (out_channels, in_channels), jnp.float32)
    sigma = 5.0 + 1.5 * jax.random.normal(ks[3], (out_channels, in_channels), jnp.float32)
    lamda = 5.0 + 1.5 * jax.random.normal(ks[4], (out_channels, in_channels), jnp.float32)
    gamma = 1.5 + 0.4 * jax.random.normal(ks[5], (out_channels, in_channels), jnp.float32)
    eps = jax.random.normal(ks[6], (out_channels, in_channels), jnp.float32)

    x = jax.random.normal(ks[7], (2, in_channels, 16, 16), jnp.float32)
    params = (psi_mu, psi_rho, theta, sigma, lamda, gamma)

    out = bayesian_gabor2d_forward(
        x, params, eps, kernel_size=kernel_size, stride=1,
        padding=padding, dilation=1)
    out = jax.block_until_ready(out)

    ref = jax.block_until_ready(
        _reference_forward(x, params, eps, kernel_size, padding))

    assert out.shape == (2, out_channels, 16, 16), out.shape
    np.testing.assert_allclose(np.asarray(out), np.asarray(ref),
                               rtol=1e-3, atol=1e-3)
    print("KERNEL_OK")
</pallas_src>

<mosaic_0001>
module attributes {stable_mosaic.version = 11 : i64} {
  func.func @_gabor_conv_fused_kernel(%arg0: i32, %arg1: memref<32x7xf32, #tpu.memory_space<vmem>>, %arg2: memref<2x9xf32, #tpu.memory_space<vmem>>, %arg3: memref<1x4x256xf32, #tpu.memory_space<vmem>>, %arg4: memref<1x8x256xf32, #tpu.memory_space<vmem>>, %arg5: memref<4x324xf32, #tpu.memory_space<vmem>>) attributes {dimension_semantics = [#tpu.dimension_semantics<parallel>], iteration_bounds = array<i64: 2>, scalar_prefetch = 0 : i64, scratch_operands = 1 : i64, tpu.core_type = #tpu.core_type<tc>, window_params = [{pipeline_mode = #tpu.pipeline_mode<synchronous>, transform_indices = @transform_0, window_bounds = array<i64: 32, 7>}, {pipeline_mode = #tpu.pipeline_mode<synchronous>, transform_indices = @transform_1, window_bounds = array<i64: 2, 9>}, {transform_indices = @transform_2, window_bounds = array<i64: 1, 4, 256>}, {transform_indices = @transform_3, window_bounds = array<i64: 1, 8, 256>}]} {
    %c0 = arith.constant 0 : index
    %c0_0 = arith.constant 0 : index
    %0 = vector.load %arg1[%c0, %c0_0] : memref<32x7xf32, #tpu.memory_space<vmem>>, vector<32x7xf32>
    %1 = vector.extract_strided_slice %0 {offsets = [0, 0], sizes = [32, 1], strides = [1, 1]} : vector<32x7xf32> to vector<32x1xf32>
    %2 = vector.extract_strided_slice %0 {offsets = [0, 1], sizes = [32, 1], strides = [1, 1]} : vector<32x7xf32> to vector<32x1xf32>
    %3 = vector.extract_strided_slice %0 {offsets = [0, 2], sizes = [32, 1], strides = [1, 1]} : vector<32x7xf32> to vector<32x1xf32>
    %4 = vector.extract_strided_slice %0 {offsets = [0, 3], sizes = [32, 1], strides = [1, 1]} : vector<32x7xf32> to vector<32x1xf32>
    %5 = vector.extract_strided_slice %0 {offsets = [0, 4], sizes = [32, 1], strides = [1, 1]} : vector<32x7xf32> to vector<32x1xf32>
    %6 = vector.extract_strided_slice %0 {offsets = [0, 5], sizes = [32, 1], strides = [1, 1]} : vector<32x7xf32> to vector<32x1xf32>
    %7 = vector.extract_strided_slice %0 {offsets = [0, 6], sizes = [32, 1], strides = [1, 1]} : vector<32x7xf32> to vector<32x1xf32>
    %8 = math.exp %2 : vector<32x1xf32>
    %cst = arith.constant 1.000000e+00 : f32
    %9 = vector.broadcast %cst : f32 to vector<32x1xf32>
    %10 = arith.addf %9, %8 : vector<32x1xf32>
    %11 = math.log %10 : vector<32x1xf32>
    %12 = arith.mulf %3, %11 : vector<32x1xf32>
    %13 = arith.addf %1, %12 : vector<32x1xf32>
    %14 = arith.divf %5, %7 : vector<32x1xf32>
    %cst_1 = arith.constant 3.14159274 : f32
    %15 = vector.broadcast %cst_1 : f32 to vector<32x1xf32>
    %16 = arith.subf %4, %15 : vector<32x1xf32>
    %17 = math.cos %16 : vector<32x1xf32>
    %cst_2 = arith.constant 3.14159274 : f32
    %18 = vector.broadcast %cst_2 : f32 to vector<32x1xf32>
    %19 = arith.subf %4, %18 : vector<32x1xf32>
    %20 = math.sin %19 : vector<32x1xf32>
    %c0_3 = arith.constant 0 : index
    %c0_4 = arith.constant 0 : index
    %21 = vector.load %arg2[%c0_3, %c0_4] : memref<2x9xf32, #tpu.memory_space<vmem>>, vector<1x9xf32>
    %c1 = arith.constant 1 : index
    %c0_5 = arith.constant 0 : index
    %22 = vector.load %arg2[%c1, %c0_5] : memref<2x9xf32, #tpu.memory_space<vmem>>, vector<1x9xf32>
    %23 = vector.broadcast %21 : vector<1x9xf32> to vector<32x9xf32>
    %24 = vector.broadcast %17 : vector<32x1xf32> to vector<32x9xf32>
    %25 = arith.mulf %23, %24 : vector<32x9xf32>
    %26 = vector.broadcast %22 : vector<1x9xf32> to vector<32x9xf32>
    %27 = vector.broadcast %20 : vector<32x1xf32> to vector<32x9xf32>
    %28 = arith.mulf %26, %27 : vector<32x9xf32>
    %29 = arith.addf %25, %28 : vector<32x9xf32>
    %cst_6 = arith.constant 0.000000e+00 : f32
    %30 = vector.broadcast %cst_6 : f32 to vector<1x9xf32>
    %31 = arith.subf %30, %21 : vector<1x9xf32>
    %32 = vector.broadcast %31 : vector<1x9xf32> to vector<32x9xf32>
    %33 = vector.broadcast %20 : vector<32x1xf32> to vector<32x9xf32>
    %34 = arith.mulf %32, %33 : vector<32x9xf32>
    %35 = vector.broadcast %22 : vector<1x9xf32> to vector<32x9xf32>
    %36 = vector.broadcast %17 : vector<32x1xf32> to vector<32x9xf32>
    %37 = arith.mulf %35, %36 : vector<32x9xf32>
    %38 = arith.addf %34, %37 : vector<32x9xf32>
    %39 = arith.mulf %29, %29 : vector<32x9xf32>
    %40 = arith.mulf %5, %5 : vector<32x1xf32>
    %41 = vector.broadcast %40 : vector<32x1xf32> to vector<32x9xf32>
    %42 = arith.divf %39, %41 : vector<32x9xf32>
    %43 = arith.mulf %38, %38 : vector<32x9xf32>
    %44 = arith.mulf %14, %14 : vector<32x1xf32>
    %45 = vector.broadcast %44 : vector<32x1xf32> to vector<32x9xf32>
    %46 = arith.divf %43, %45 : vector<32x9xf32>
    %47 = arith.addf %42, %46 : vector<32x9xf32>
    %cst_7 = arith.constant -5.000000e-01 : f32
    %48 = vector.broadcast %cst_7 : f32 to vector<32x9xf32>
    %49 = arith.mulf %48, %47 : vector<32x9xf32>
    %50 = math.exp %49 : vector<32x9xf32>
    %cst_8 = arith.constant 6.28318548 : f32
    %51 = vector.broadcast %cst_8 : f32 to vector<32x1xf32>
    %52 = arith.mulf %51, %5 : vector<32x1xf32>
    %53 = arith.mulf %52, %14 : vector<32x1xf32>
    %54 = vector.broadcast %53 : vector<32x1xf32> to vector<32x9xf32>
    %55 = arith.divf %50, %54 : vector<32x9xf32>
    %cst_9 = arith.constant 6.28318548 : f32
    %56 = vector.broadcast %cst_9 : f32 to vector<32x1xf32>
    %57 = arith.divf %56, %6 : vector<32x1xf32>
    %58 = vector.broadcast %57 : vector<32x1xf32> to vector<32x9xf32>
    %59 = arith.mulf %58, %29 : vector<32x9xf32>
    %60 = vector.broadcast %13 : vector<32x1xf32> to vector<32x9xf32>
    %61 = arith.addf %59, %60 : vector<32x9xf32>
    %62 = math.cos %61 : vector<32x9xf32>
    %63 = arith.mulf %55, %62 : vector<32x9xf32>
    %cst_10 = arith.constant 0.000000e+00 : f32
    %64 = vector.broadcast %cst_10 : f32 to vector<4x324xf32>
    %c0_11 = arith.constant 0 : index
    %c0_12 = arith.constant 0 : index
    %65 = vector.load %arg5[%c0_11, %c0_12] : memref<4x324xf32, #tpu.memory_space<vmem>>, vector<4x324xf32>
    tpu.vector_store %arg5[%c0_11, %c0_12], %64 {strides = array<i32>} : memref<4x324xf32, #tpu.memory_space<vmem>>, vector<4x324xf32>,
    %c0_13 = arith.constant 0 : index
    %c0_14 = arith.constant 0 : index
    %c0_15 = arith.constant 0 : index
    %66 = vector.load %arg3[%c0_13, %c0_14, %c0_15] : memref<1x4x256xf32, #tpu.memory_space<vmem>>, vector<1x4x16xf32>
    %67 = vector.shape_cast %66 : vector<1x4x16xf32> to vector<4x16xf32>
    %c0_16 = arith.constant 0 : index
    %c19 = arith.constant 19 : index
    %68 = vector.load %arg5[%c0_16, %c19] : memref<4x324xf32, #tpu.memory_space<vmem>>, vector<4x16xf32>
    tpu.vector_store %arg5[%c0_16, %c19], %67 {strides = array<i32>} : memref<4x324xf32, #tpu.memory_space<vmem>>, vector<4x16xf32>,
    %c0_17 = arith.constant 0 : index
    %c0_18 = arith.constant 0 : index
    %c16 = arith.constant 16 : index
    %69 = vector.load %arg3[%c0_17, %c0_18, %c16] : memref<1x4x256xf32, #tpu.memory_space<vmem>>, vector<1x4x16xf32>
    %70 = vector.shape_cast %69 : vector<1x4x16xf32> to vector<4x16xf32>
    %c0_19 = arith.constant 0 : index
    %c37 = arith.constant 37 : index
    %71 = vector.load %arg5[%c0_19, %c37] : memref<4x324xf32, #tpu.memory_space<vmem>>, vector<4x16xf32>
    tpu.vector_store %arg5[%c0_19, %c37], %70 {strides = array<i32>} : memref<4x324xf32, #tpu.memory_space<vmem>>, vector<4x16xf32>,
    %c0_20 = arith.constant 0 : index
    %c0_21 = arith.constant 0 : index
    %c32 = arith.constant 32 : index
    %72 = vector.load %arg3[%c0_20, %c0_21, %c32] : memref<1x4x256xf32, #tpu.memory_space<vmem>>, vector<1x4x16xf32>
    %73 = vector.shape_cast %72 : vector<1x4x16xf32> to vector<4x16xf32>
    %c0_22 = arith.constant 0 : index
    %c55 = arith.constant 55 : index
    %74 = vector.load %arg5[%c0_22, %c55] : memref<4x324xf32, #tpu.memory_space<vmem>>, vector<4x16xf32>
    tpu.vector_store %arg5[%c0_22, %c55], %73 {strides = array<i32>} : memref<4x324xf32, #tpu.memory_space<vmem>>, vector<4x16xf32>,
    %c0_23 = arith.constant 0 : index
    %c0_24 = arith.constant 0 : index
    %c48 = arith.constant 48 : index
    %75 = vector.load %arg3[%c0_23, %c0_24, %c48] : memref<1x4x256xf32, #tpu.memory_space<vmem>>, vector<1x4x16xf32>
    %76 = vector.shape_cast %75 : vector<1x4x16xf32> to vector<4x16xf32>
    %c0_25 = arith.constant 0 : index
    %c73 = arith.constant 73 : index
    %77 = vector.load %arg5[%c0_25, %c73] : memref<4x324xf32, #tpu.memory_space<vmem>>, vector<4x16xf32>
    tpu.vector_store %arg5[%c0_25, %c73], %76 {strides = array<i32>} : memref<4x324xf32, #tpu.memory_space<vmem>>, vector<4x16xf32>,
    %c0_26 = arith.constant 0 : index
    %c0_27 = arith.constant 0 : index
    %c64 = arith.constant 64 : index
    %78 = vector.load %arg3[%c0_26, %c0_27, %c64] : memref<1x4x256xf32, #tpu.memory_space<vmem>>, vector<1x4x16xf32>
    %79 = vector.shape_cast %78 : vector<1x4x16xf32> to vector<4x16xf32>
    %c0_28 = arith.constant 0 : index
    %c91 = arith.constant 91 : index
    %80 = vector.load %arg5[%c0_28, %c91] : memref<4x324xf32, #tpu.memory_space<vmem>>, vector<4x16xf32>
    tpu.vector_store %arg5[%c0_28, %c91], %79 {strides = array<i32>} : memref<4x324xf32, #tpu.memory_space<vmem>>, vector<4x16xf32>,
    %c0_29 = arith.constant 0 : index
    %c0_30 = arith.constant 0 : index
    %c80 = arith.constant 80 : index
    %81 = vector.load %arg3[%c0_29, %c0_30, %c80] : memref<1x4x256xf32, #tpu.memory_space<vmem>>, vector<1x4x16xf32>
    %82 = vector.shape_cast %81 : vector<1x4x16xf32> to vector<4x16xf32>
    %c0_31 = arith.constant 0 : index
    %c109 = arith.constant 109 : index
    %83 = vector.load %arg5[%c0_31, %c109] : memref<4x324xf32, #tpu.memory_space<vmem>>, vector<4x16xf32>
    tpu.vector_store %arg5[%c0_31, %c109], %82 {strides = array<i32>} : memref<4x324xf32, #tpu.memory_space<vmem>>, vector<4x16xf32>,
    %c0_32 = arith.constant 0 : index
    %c0_33 = arith.constant 0 : index
    %c96 = arith.constant 96 : index
    %84 = vector.load %arg3[%c0_32, %c0_33, %c96] : memref<1x4x256xf32, #tpu.memory_space<vmem>>, vector<1x4x16xf32>
    %85 = vector.shape_cast %84 : vector<1x4x16xf32> to vector<4x16xf32>
    %c0_34 = arith.constant 0 : index
    %c127 = arith.constant 127 : index
    %86 = vector.load %arg5[%c0_34, %c127] : memref<4x324xf32, #tpu.memory_space<vmem>>, vector<4x16xf32>
    tpu.vector_store %arg5[%c0_34, %c127], %85 {strides = array<i32>} : memref<4x324xf32, #tpu.memory_space<vmem>>, vector<4x16xf32>,
    %c0_35 = arith.constant 0 : index
    %c0_36 = arith.constant 0 : index
    %c112 = arith.constant 112 : index
    %87 = vector.load %arg3[%c0_35, %c0_36, %c112] : memref<1x4x256xf32, #tpu.memory_space<vmem>>, vector<1x4x16xf32>
    %88 = vector.shape_cast %87 : vector<1x4x16xf32> to vector<4x16xf32>
    %c0_37 = arith.constant 0 : index
    %c145 = arith.constant 145 : index
    %89 = vector.load %arg5[%c0_37, %c145] : memref<4x324xf32, #tpu.memory_space<vmem>>, vector<4x16xf32>
    tpu.vector_store %arg5[%c0_37, %c145], %88 {strides = array<i32>} : memref<4x324xf32, #tpu.memory_space<vmem>>, vector<4x16xf32>,
    %c0_38 = arith.constant 0 : index
    %c0_39 = arith.constant 0 : index
    %c128 = arith.constant 128 : index
    %90 = vector.load %arg3[%c0_38, %c0_39, %c128] : memref<1x4x256xf32, #tpu.memory_space<vmem>>, vector<1x4x16xf32>
    %91 = vector.shape_cast %90 : vector<1x4x16xf32> to vector<4x16xf32>
    %c0_40 = arith.constant 0 : index
    %c163 = arith.constant 163 : index
    %92 = vector.load %arg5[%c0_40, %c163] : memref<4x324xf32, #tpu.memory_space<vmem>>, vector<4x16xf32>
    tpu.vector_store %arg5[%c0_40, %c163], %91 {strides = array<i32>} : memref<4x324xf32, #tpu.memory_space<vmem>>, vector<4x16xf32>,
    %c0_41 = arith.constant 0 : index
    %c0_42 = arith.constant 0 : index
    %c144 = arith.constant 144 : index
    %93 = vector.load %arg3[%c0_41, %c0_42, %c144] : memref<1x4x256xf32, #tpu.memory_space<vmem>>, vector<1x4x16xf32>
    %94 = vector.shape_cast %93 : vector<1x4x16xf32> to vector<4x16xf32>
    %c0_43 = arith.constant 0 : index
    %c181 = arith.constant 181 : index
    %95 = vector.load %arg5[%c0_43, %c181] : memref<4x324xf32, #tpu.memory_space<vmem>>, vector<4x16xf32>
    tpu.vector_store %arg5[%c0_43, %c181], %94 {strides = array<i32>} : memref<4x324xf32, #tpu.memory_space<vmem>>, vector<4x16xf32>,
    %c0_44 = arith.constant 0 : index
    %c0_45 = arith.constant 0 : index
    %c160 = arith.constant 160 : index
    %96 = vector.load %arg3[%c0_44, %c0_45, %c160] : memref<1x4x256xf32, #tpu.memory_space<vmem>>, vector<1x4x16xf32>
    %97 = vector.shape_cast %96 : vector<1x4x16xf32> to vector<4x16xf32>
    %c0_46 = arith.constant 0 : index
    %c199 = arith.constant 199 : index
    %98 = vector.load %arg5[%c0_46, %c199] : memref<4x324xf32, #tpu.memory_space<vmem>>, vector<4x16xf32>
    tpu.vector_store %arg5[%c0_46, %c199], %97 {strides = array<i32>} : memref<4x324xf32, #tpu.memory_space<vmem>>, vector<4x16xf32>,
    %c0_47 = arith.constant 0 : index
    %c0_48 = arith.constant 0 : index
    %c176 = arith.constant 176 : index
    %99 = vector.load %arg3[%c0_47, %c0_48, %c176] : memref<1x4x256xf32, #tpu.memory_space<vmem>>, vector<1x4x16xf32>
    %100 = vector.shape_cast %99 : vector<1x4x16xf32> to vector<4x16xf32>
    %c0_49 = arith.constant 0 : index
    %c217 = arith.constant 217 : index
    %101 = vector.load %arg5[%c0_49, %c217] : memref<4x324xf32, #tpu.memory_space<vmem>>, vector<4x16xf32>
    tpu.vector_store %arg5[%c0_49, %c217], %100 {strides = array<i32>} : memref<4x324xf32, #tpu.memory_space<vmem>>, vector<4x16xf32>,
    %c0_50 = arith.constant 0 : index
    %c0_51 = arith.constant 0 : index
    %c192 = arith.constant 192 : index
    %102 = vector.load %arg3[%c0_50, %c0_51, %c192] : memref<1x4x256xf32, #tpu.memory_space<vmem>>, vector<1x4x16xf32>
    %103 = vector.shape_cast %102 : vector<1x4x16xf32> to vector<4x16xf32>
    %c0_52 = arith.constant 0 : index
    %c235 = arith.constant 235 : index
    %104 = vector.load %arg5[%c0_52, %c235] : memref<4x324xf32, #tpu.memory_space<vmem>>, vector<4x16xf32>
    tpu.vector_store %arg5[%c0_52, %c235], %103 {strides = array<i32>} : memref<4x324xf32, #tpu.memory_space<vmem>>, vector<4x16xf32>,
    %c0_53 = arith.constant 0 : index
    %c0_54 = arith.constant 0 : index
    %c208 = arith.constant 208 : index
    %105 = vector.load %arg3[%c0_53, %c0_54, %c208] : memref<1x4x256xf32, #tpu.memory_space<vmem>>, vector<1x4x16xf32>
    %106 = vector.shape_cast %105 : vector<1x4x16xf32> to vector<4x16xf32>
    %c0_55 = arith.constant 0 : index
    %c253 = arith.constant 253 : index
    %107 = vector.load %arg5[%c0_55, %c253] : memref<4x324xf32, #tpu.memory_space<vmem>>, vector<4x16xf32>
    tpu.vector_store %arg5[%c0_55, %c253], %106 {strides = array<i32>} : memref<4x324xf32, #tpu.memory_space<vmem>>, vector<4x16xf32>,
    %c0_56 = arith.constant 0 : index
    %c0_57 = arith.constant 0 : index
    %c224 = arith.constant 224 : index
    %108 = vector.load %arg3[%c0_56, %c0_57, %c224] : memref<1x4x256xf32, #tpu.memory_space<vmem>>, vector<1x4x16xf32>
    %109 = vector.shape_cast %108 : vector<1x4x16xf32> to vector<4x16xf32>
    %c0_58 = arith.constant 0 : index
    %c271 = arith.constant 271 : index
    %110 = vector.load %arg5[%c0_58, %c271] : memref<4x324xf32, #tpu.memory_space<vmem>>, vector<4x16xf32>
    tpu.vector_store %arg5[%c0_58, %c271], %109 {strides = array<i32>} : memref<4x324xf32, #tpu.memory_space<vmem>>, vector<4x16xf32>,
    %c0_59 = arith.constant 0 : index
    %c0_60 = arith.constant 0 : index
    %c240 = arith.constant 240 : index
    %111 = vector.load %arg3[%c0_59, %c0_60, %c240] : memref<1x4x256xf32, #tpu.memory_space<vmem>>, vector<1x4x16xf32>
    %112 = vector.shape_cast %111 : vector<1x4x16xf32> to vector<4x16xf32>
    %c0_61 = arith.constant 0 : index
    %c289 = arith.constant 289 : index
    %113 = vector.load %arg5[%c0_61, %c289] : memref<4x324xf32, #tpu.memory_space<vmem>>, vector<4x16xf32>
    tpu.vector_store %arg5[%c0_61, %c289], %112 {strides = array<i32>} : memref<4x324xf32, #tpu.memory_space<vmem>>, vector<4x16xf32>,
    %cst_62 = arith.constant 0.000000e+00 : f32
    %114 = vector.broadcast %cst_62 : f32 to vector<8x286xf32>
    %c0_63 = arith.constant 0 : index
    %c0_64 = arith.constant 0 : index
    %115 = vector.load %arg5[%c0_63, %c0_64] : memref<4x324xf32, #tpu.memory_space<vmem>>, vector<1x324xf32>
    %116 = vector.extract_strided_slice %63 {offsets = [0, 0], sizes = [8, 9], strides = [1, 1]} : vector<32x9xf32> to vector<8x9xf32>
    %117 = vector.extract_strided_slice %116 {offsets = [0, 0], sizes = [8, 1], strides = [1, 1]} : vector<8x9xf32> to vector<8x1xf32>
    %118 = vector.extract_strided_slice %115 {offsets = [0, 0], sizes = [1, 286], strides = [1, 1]} : vector<1x324xf32> to vector<1x286xf32>
    %119 = vector.broadcast %117 : vector<8x1xf32> to vector<8x286xf32>
    %120 = vector.broadcast %118 : vector<1x286xf32> to vector<8x286xf32>
    %121 = arith.mulf %119, %120 : vector<8x286xf32>
    %122 = arith.addf %114, %121 : vector<8x286xf32>
    %123 = vector.extract_strided_slice %116 {offsets = [0, 1], sizes = [8, 1], strides = [1, 1]} : vector<8x9xf32> to vector<8x1xf32>
    %124 = vector.extract_strided_slice %115 {offsets = [0, 1], sizes = [1, 286], strides = [1, 1]} : vector<1x324xf32> to vector<1x286xf32>
    %125 = vector.broadcast %123 : vector<8x1xf32> to vector<8x286xf32>
    %126 = vector.broadcast %124 : vector<1x286xf32> to vector<8x286xf32>
    %127 = arith.mulf %125, %126 : vector<8x286xf32>
    %128 = arith.addf %122, %127 : vector<8x286xf32>
    %129 = vector.extract_strided_slice %116 {offsets = [0, 2], sizes = [8, 1], strides = [1, 1]} : vector<8x9xf32> to vector<8x1xf32>
    %130 = vector.extract_strided_slice %115 {offsets = [0, 2], sizes = [1, 286], strides = [1, 1]} : vector<1x324xf32> to vector<1x286xf32>
    %131 = vector.broadcast %129 : vector<8x1xf32> to vector<8x286xf32>
    %132 = vector.broadcast %130 : vector<1x286xf32> to vector<8x286xf32>
    %133 = arith.mulf %131, %132 : vector<8x286xf32>
    %134 = arith.addf %128, %133 : vector<8x286xf32>
    %135 = vector.extract_strided_slice %116 {offsets = [0, 3], sizes = [8, 1], strides = [1, 1]} : vector<8x9xf32> to vector<8x1xf32>
    %136 = vector.extract_strided_slice %115 {offsets = [0, 18], sizes = [1, 286], strides = [1, 1]} : vector<1x324xf32> to vector<1x286xf32>
    %137 = vector.broadcast %135 : vector<8x1xf32> to vector<8x286xf32>
    %138 = vector.broadcast %136 : vector<1x286xf32> to vector<8x286xf32>
    %139 = arith.mulf %137, %138 : vector<8x286xf32>
    %140 = arith.addf %134, %139 : vector<8x286xf32>
    %141 = vector.extract_strided_slice %116 {offsets = [0, 4], sizes = [8, 1], strides = [1, 1]} : vector<8x9xf32> to vector<8x1xf32>
    %142 = vector.extract_strided_slice %115 {offsets = [0, 19], sizes = [1, 286], strides = [1, 1]} : vector<1x324xf32> to vector<1x286xf32>
    %143 = vector.broadcast %141 : vector<8x1xf32> to vector<8x286xf32>
    %144 = vector.broadcast %142 : vector<1x286xf32> to vector<8x286xf32>
    %145 = arith.mulf %143, %144 : vector<8x286xf32>
    %146 = arith.addf %140, %145 : vector<8x286xf32>
    %147 = vector.extract_strided_slice %116 {offsets = [0, 5], sizes = [8, 1], strides = [1, 1]} : vector<8x9xf32> to vector<8x1xf32>
    %148 = vector.extract_strided_slice %115 {offsets = [0, 20], sizes = [1, 286], strides = [1, 1]} : vector<1x324xf32> to vector<1x286xf32>
    %149 = vector.broadcast %147 : vector<8x1xf32> to vector<8x286xf32>
    %150 = vector.broadcast %148 : vector<1x286xf32> to vector<8x286xf32>
    %151 = arith.mulf %149, %150 : vector<8x286xf32>
    %152 = arith.addf %146, %151 : vector<8x286xf32>
    %153 = vector.extract_strided_slice %116 {offsets = [0, 6], sizes = [8, 1], strides = [1, 1]} : vector<8x9xf32> to vector<8x1xf32>
    %154 = vector.extract_strided_slice %115 {offsets = [0, 36], sizes = [1, 286], strides = [1, 1]} : vector<1x324xf32> to vector<1x286xf32>
    %155 = vector.broadcast %153 : vector<8x1xf32> to vector<8x286xf32>
    %156 = vector.broadcast %154 : vector<1x286xf32> to vector<8x286xf32>
    %157 = arith.mulf %155, %156 : vector<8x286xf32>
    %158 = arith.addf %152, %157 : vector<8x286xf32>
    %159 = vector.extract_strided_slice %116 {offsets = [0, 7], sizes = [8, 1], strides = [1, 1]} : vector<8x9xf32> to vector<8x1xf32>
    %160 = vector.extract_strided_slice %115 {offsets = [0, 37], sizes = [1, 286], strides = [1, 1]} : vector<1x324xf32> to vector<1x286xf32>
    %161 = vector.broadcast %159 : vector<8x1xf32> to vector<8x286xf32>
    %162 = vector.broadcast %160 : vector<1x286xf32> to vector<8x286xf32>
    %163 = arith.mulf %161, %162 : vector<8x286xf32>
    %164 = arith.addf %158, %163 : vector<8x286xf32>
    %165 = vector.extract_strided_slice %116 {offsets = [0, 8], sizes = [8, 1], strides = [1, 1]} : vector<8x9xf32> to vector<8x1xf32>
    %166 = vector.extract_strided_slice %115 {offsets = [0, 38], sizes = [1, 286], strides = [1, 1]} : vector<1x324xf32> to vector<1x286xf32>
    %167 = vector.broadcast %165 : vector<8x1xf32> to vector<8x286xf32>
    %168 = vector.broadcast %166 : vector<1x286xf32> to vector<8x286xf32>
    %169 = arith.mulf %167, %168 : vector<8x286xf32>
    %170 = arith.addf %164, %169 : vector<8x286xf32>
    %c1_65 = arith.constant 1 : index
    %c0_66 = arith.constant 0 : index
    %171 = vector.load %arg5[%c1_65, %c0_66] : memref<4x324xf32, #tpu.memory_space<vmem>>, vector<1x324xf32>
    %172 = vector.extract_strided_slice %63 {offsets = [8, 0], sizes = [8, 9], strides = [1, 1]} : vector<32x9xf32> to vector<8x9xf32>
    %173 = vector.extract_strided_slice %172 {offsets = [0, 0], sizes = [8, 1], strides = [1, 1]} : vector<8x9xf32> to vector<8x1xf32>
    %174 = vector.extract_strided_slice %171 {offsets = [0, 0], sizes = [1, 286], strides = [1, 1]} : vector<1x324xf32> to vector<1x286xf32>
    %175 = vector.broadcast %173 : vector<8x1xf32> to vector<8x286xf32>
    %176 = vector.broadcast %174 : vector<1x286xf32> to vector<8x286xf32>
    %177 = arith.mulf %175, %176 : vector<8x286xf32>
    %178 = arith.addf %170, %177 : vector<8x286xf32>
    %179 = vector.extract_strided_slice %172 {offsets = [0, 1], sizes = [8, 1], strides = [1, 1]} : vector<8x9xf32> to vector<8x1xf32>
    %180 = vector.extract_strided_slice %171 {offsets = [0, 1], sizes = [1, 286], strides = [1, 1]} : vector<1x324xf32> to vector<1x286xf32>
    %181 = vector.broadcast %179 : vector<8x1xf32> to vector<8x286xf32>
    %182 = vector.broadcast %180 : vector<1x286xf32> to vector<8x286xf32>
    %183 = arith.mulf %181, %182 : vector<8x286xf32>
    %184 = arith.addf %178, %183 : vector<8x286xf32>
    %185 = vector.extract_strided_slice %172 {offsets = [0, 2], sizes = [8, 1], strides = [1, 1]} : vector<8x9xf32> to vector<8x1xf32>
    %186 = vector.extract_strided_slice %171 {offsets = [0, 2], sizes = [1, 286], strides = [1, 1]} : vector<1x324xf32> to vector<1x286xf32>
    %187 = vector.broadcast %185 : vector<8x1xf32> to vector<8x286xf32>
    %188 = vector.broadcast %186 : vector<1x286xf32> to vector<8x286xf32>
    %189 = arith.mulf %187, %188 : vector<8x286xf32>
    %190 = arith.addf %184, %189 : vector<8x286xf32>
    %191 = vector.extract_strided_slice %172 {offsets = [0, 3], sizes = [8, 1], strides = [1, 1]} : vector<8x9xf32> to vector<8x1xf32>
    %192 = vector.extract_strided_slice %171 {offsets = [0, 18], sizes = [1, 286], strides = [1, 1]} : vector<1x324xf32> to vector<1x286xf32>
    %193 = vector.broadcast %191 : vector<8x1xf32> to vector<8x286xf32>
    %194 = vector.broadcast %192 : vector<1x286xf32> to vector<8x286xf32>
    %195 = arith.mulf %193, %194 : vector<8x286xf32>
    %196 = arith.addf %190, %195 : vector<8x286xf32>
    %197 = vector.extract_strided_slice %172 {offsets = [0, 4], sizes = [8, 1], strides = [1, 1]} : vector<8x9xf32> to vector<8x1xf32>
    %198 = vector.extract_strided_slice %171 {offsets = [0, 19], sizes = [1, 286], strides = [1, 1]} : vector<1x324xf32> to vector<1x286xf32>
    %199 = vector.broadcast %197 : vector<8x1xf32> to vector<8x286xf32>
    %200 = vector.broadcast %198 : vector<1x286xf32> to vector<8x286xf32>
    %201 = arith.mulf %199, %200 : vector<8x286xf32>
    %202 = arith.addf %196, %201 : vector<8x286xf32>
    %203 = vector.extract_strided_slice %172 {offsets = [0, 5], sizes = [8, 1], strides = [1, 1]} : vector<8x9xf32> to vector<8x1xf32>
    %204 = vector.extract_strided_slice %171 {offsets = [0, 20], sizes = [1, 286], strides = [1, 1]} : vector<1x324xf32> to vector<1x286xf32>
    %205 = vector.broadcast %203 : vector<8x1xf32> to vector<8x286xf32>
    %206 = vector.broadcast %204 : vector<1x286xf32> to vector<8x286xf32>
    %207 = arith.mulf %205, %206 : vector<8x286xf32>
    %208 = arith.addf %202, %207 : vector<8x286xf32>
    %209 = vector.extract_strided_slice %172 {offsets = [0, 6], sizes = [8, 1], strides = [1, 1]} : vector<8x9xf32> to vector<8x1xf32>
    %210 = vector.extract_strided_slice %171 {offsets = [0, 36], sizes = [1, 286], strides = [1, 1]} : vector<1x324xf32> to vector<1x286xf32>
    %211 = vector.broadcast %209 : vector<8x1xf32> to vector<8x286xf32>
    %212 = vector.broadcast %210 : vector<1x286xf32> to vector<8x286xf32>
    %213 = arith.mulf %211, %212 : vector<8x286xf32>
    %214 = arith.addf %208, %213 : vector<8x286xf32>
    %215 = vector.extract_strided_slice %172 {offsets = [0, 7], sizes = [8, 1], strides = [1, 1]} : vector<8x9xf32> to vector<8x1xf32>
    %216 = vector.extract_strided_slice %171 {offsets = [0, 37], sizes = [1, 286], strides = [1, 1]} : vector<1x324xf32> to vector<1x286xf32>
    %217 = vector.broadcast %215 : vector<8x1xf32> to vector<8x286xf32>
    %218 = vector.broadcast %216 : vector<1x286xf32> to vector<8x286xf32>
    %219 = arith.mulf %217, %218 : vector<8x286xf32>
    %220 = arith.addf %214, %219 : vector<8x286xf32>
    %221 = vector.extract_strided_slice %172 {offsets = [0, 8], sizes = [8, 1], strides = [1, 1]} : vector<8x9xf32> to vector<8x1xf32>
    %222 = vector.extract_strided_slice %171 {offsets = [0, 38], sizes = [1, 286], strides = [1, 1]} : vector<1x324xf32> to vector<1x286xf32>
    %223 = vector.broadcast %221 : vector<8x1xf32> to vector<8x286xf32>
    %224 = vector.broadcast %222 : vector<1x286xf32> to vector<8x286xf32>
    %225 = arith.mulf %223, %224 : vector<8x286xf32>
    %226 = arith.addf %220, %225 : vector<8x286xf32>
    %c2 = arith.constant 2 : index
    %c0_67 = arith.constant 0 : index
    %227 = vector.load %arg5[%c2, %c0_67] : memref<4x324xf32, #tpu.memory_space<vmem>>, vector<1x324xf32>
    %228 = vector.extract_strided_slice %63 {offsets = [16, 0], sizes = [8, 9], strides = [1, 1]} : vector<32x9xf32> to vector<8x9xf32>
    %229 = vector.extract_strided_slice %228 {offsets = [0, 0], sizes = [8, 1], strides = [1, 1]} : vector<8x9xf32> to vector<8x1xf32>
    %230 = vector.extract_strided_slice %227 {offsets = [0, 0], sizes = [1, 286], strides = [1, 1]} : vector<1x324xf32> to vector<1x286xf32>
    %231 = vector.broadcast %229 : vector<8x1xf32> to vector<8x286xf32>
    %232 = vector.broadcast %230 : vector<1x286xf32> to vector<8x286xf32>
    %233 = arith.mulf %231, %232 : vector<8x286xf32>
    %234 = arith.addf %226, %233 : vector<8x286xf32>
    %235 = vector.extract_strided_slice %228 {offsets = [0, 1], sizes = [8, 1], strides = [1, 1]} : vector<8x9xf32> to vector<8x1xf32>
    %236 = vector.extract_strided_slice %227 {offsets = [0, 1], sizes = [1, 286], strides = [1, 1]} : vector<1x324xf32> to vector<1x286xf32>
    %237 = vector.broadcast %235 : vector<8x1xf32> to vector<8x286xf32>
    %238 = vector.broadcast %236 : vector<1x286xf32> to vector<8x286xf32>
    %239 = arith.mulf %237, %238 : vector<8x286xf32>
    %240 = arith.addf %234, %239 : vector<8x286xf32>
    %241 = vector.extract_strided_slice %228 {offsets = [0, 2], sizes = [8, 1], strides = [1, 1]} : vector<8x9xf32> to vector<8x1xf32>
    %242 = vector.extract_strided_slice %227 {offsets = [0, 2], sizes = [1, 286], strides = [1, 1]} : vector<1x324xf32> to vector<1x286xf32>
    %243 = vector.broadcast %241 : vector<8x1xf32> to vector<8x286xf32>
    %244 = vector.broadcast %242 : vector<1x286xf32> to vector<8x286xf32>
    %245 = arith.mulf %243, %244 : vector<8x286xf32>
    %246 = arith.addf %240, %245 : vector<8x286xf32>
    %247 = vector.extract_strided_slice %228 {offsets = [0, 3], sizes = [8, 1], strides = [1, 1]} : vector<8x9xf32> to vector<8x1xf32>
    %248 = vector.extract_strided_slice %227 {offsets = [0, 18], sizes = [1, 286], strides = [1, 1]} : vector<1x324xf32> to vector<1x286xf32>
    %249 = vector.broadcast %247 : vector<8x1xf32> to vector<8x286xf32>
    %250 = vector.broadcast %248 : vector<1x286xf32> to vector<8x286xf32>
    %251 = arith.mulf %249, %250 : vector<8x286xf32>
    %252 = arith.addf %246, %251 : vector<8x286xf32>
    %253 = vector.extract_strided_slice %228 {offsets = [0, 4], sizes = [8, 1], strides = [1, 1]} : vector<8x9xf32> to vector<8x1xf32>
    %254 = vector.extract_strided_slice %227 {offsets = [0, 19], sizes = [1, 286], strides = [1, 1]} : vector<1x324xf32> to vector<1x286xf32>
    %255 = vector.broadcast %253 : vector<8x1xf32> to vector<8x286xf32>
    %256 = vector.broadcast %254 : vector<1x286xf32> to vector<8x286xf32>
    %257 = arith.mulf %255, %256 : vector<8x286xf32>
    %258 = arith.addf %252, %257 : vector<8x286xf32>
    %259 = vector.extract_strided_slice %228 {offsets = [0, 5], sizes = [8, 1], strides = [1, 1]} : vector<8x9xf32> to vector<8x1xf32>
    %260 = vector.extract_strided_slice %227 {offsets = [0, 20], sizes = [1, 286], strides = [1, 1]} : vector<1x324xf32> to vector<1x286xf32>
    %261 = vector.broadcast %259 : vector<8x1xf32> to vector<8x286xf32>
    %262 = vector.broadcast %260 : vector<1x286xf32> to vector<8x286xf32>
    %263 = arith.mulf %261, %262 : vector<8x286xf32>
    %264 = arith.addf %258, %263 : vector<8x286xf32>
    %265 = vector.extract_strided_slice %228 {offsets = [0, 6], sizes = [8, 1], strides = [1, 1]} : vector<8x9xf32> to vector<8x1xf32>
    %266 = vector.extract_strided_slice %227 {offsets = [0, 36], sizes = [1, 286], strides = [1, 1]} : vector<1x324xf32> to vector<1x286xf32>
    %267 = vector.broadcast %265 : vector<8x1xf32> to vector<8x286xf32>
    %268 = vector.broadcast %266 : vector<1x286xf32> to vector<8x286xf32>
    %269 = arith.mulf %267, %268 : vector<8x286xf32>
    %270 = arith.addf %264, %269 : vector<8x286xf32>
    %271 = vector.extract_strided_slice %228 {offsets = [0, 7], sizes = [8, 1], strides = [1, 1]} : vector<8x9xf32> to vector<8x1xf32>
    %272 = vector.extract_strided_slice %227 {offsets = [0, 37], sizes = [1, 286], strides = [1, 1]} : vector<1x324xf32> to vector<1x286xf32>
    %273 = vector.broadcast %271 : vector<8x1xf32> to vector<8x286xf32>
    %274 = vector.broadcast %272 : vector<1x286xf32> to vector<8x286xf32>
    %275 = arith.mulf %273, %274 : vector<8x286xf32>
    %276 = arith.addf %270, %275 : vector<8x286xf32>
    %277 = vector.extract_strided_slice %228 {offsets = [0, 8], sizes = [8, 1], strides = [1, 1]} : vector<8x9xf32> to vector<8x1xf32>
    %278 = vector.extract_strided_slice %227 {offsets = [0, 38], sizes = [1, 286], strides = [1, 1]} : vector<1x324xf32> to vector<1x286xf32>
    %279 = vector.broadcast %277 : vector<8x1xf32> to vector<8x286xf32>
    %280 = vector.broadcast %278 : vector<1x286xf32> to vector<8x286xf32>
    %281 = arith.mulf %279, %280 : vector<8x286xf32>
    %282 = arith.addf %276, %281 : vector<8x286xf32>
    %c3 = arith.constant 3 : index
    %c0_68 = arith.constant 0 : index
    %283 = vector.load %arg5[%c3, %c0_68] : memref<4x324xf32, #tpu.memory_space<vmem>>, vector<1x324xf32>
    %284 = vector.extract_strided_slice %63 {offsets = [24, 0], sizes = [8, 9], strides = [1, 1]} : vector<32x9xf32> to vector<8x9xf32>
    %285 = vector.extract_strided_slice %284 {offsets = [0, 0], sizes = [8, 1], strides = [1, 1]} : vector<8x9xf32> to vector<8x1xf32>
    %286 = vector.extract_strided_slice %283 {offsets = [0, 0], sizes = [1, 286], strides = [1, 1]} : vector<1x324xf32> to vector<1x286xf32>
    %287 = vector.broadcast %285 : vector<8x1xf32> to vector<8x286xf32>
    %288 = vector.broadcast %286 : vector<1x286xf32> to vector<8x286xf32>
    %289 = arith.mulf %287, %288 : vector<8x286xf32>
    %290 = arith.addf %282, %289 : vector<8x286xf32>
    %291 = vector.extract_strided_slice %284 {offsets = [0, 1], sizes = [8, 1], strides = [1, 1]} : vector<8x9xf32> to vector<8x1xf32>
    %292 = vector.extract_strided_slice %283 {offsets = [0, 1], sizes = [1, 286], strides = [1, 1]} : vector<1x324xf32> to vector<1x286xf32>
    %293 = vector.broadcast %291 : vector<8x1xf32> to vector<8x286xf32>
    %294 = vector.broadcast %292 : vector<1x286xf32> to vector<8x286xf32>
    %295 = arith.mulf %293, %294 : vector<8x286xf32>
    %296 = arith.addf %290, %295 : vector<8x286xf32>
    %297 = vector.extract_strided_slice %284 {offsets = [0, 2], sizes = [8, 1], strides = [1, 1]} : vector<8x9xf32> to vector<8x1xf32>
    %298 = vector.extract_strided_slice %283 {offsets = [0, 2], sizes = [1, 286], strides = [1, 1]} : vector<1x324xf32> to vector<1x286xf32>
    %299 = vector.broadcast %297 : vector<8x1xf32> to vector<8x286xf32>
    %300 = vector.broadcast %298 : vector<1x286xf32> to vector<8x286xf32>
    %301 = arith.mulf %299, %300 : vector<8x286xf32>
    %302 = arith.addf %296, %301 : vector<8x286xf32>
    %303 = vector.extract_strided_slice %284 {offsets = [0, 3], sizes = [8, 1], strides = [1, 1]} : vector<8x9xf32> to vector<8x1xf32>
    %304 = vector.extract_strided_slice %283 {offsets = [0, 18], sizes = [1, 286], strides = [1, 1]} : vector<1x324xf32> to vector<1x286xf32>
    %305 = vector.broadcast %303 : vector<8x1xf32> to vector<8x286xf32>
    %306 = vector.broadcast %304 : vector<1x286xf32> to vector<8x286xf32>
    %307 = arith.mulf %305, %306 : vector<8x286xf32>
    %308 = arith.addf %302, %307 : vector<8x286xf32>
    %309 = vector.extract_strided_slice %284 {offsets = [0, 4], sizes = [8, 1], strides = [1, 1]} : vector<8x9xf32> to vector<8x1xf32>
    %310 = vector.extract_strided_slice %283 {offsets = [0, 19], sizes = [1, 286], strides = [1, 1]} : vector<1x324xf32> to vector<1x286xf32>
    %311 = vector.broadcast %309 : vector<8x1xf32> to vector<8x286xf32>
    %312 = vector.broadcast %310 : vector<1x286xf32> to vector<8x286xf32>
    %313 = arith.mulf %311, %312 : vector<8x286xf32>
    %314 = arith.addf %308, %313 : vector<8x286xf32>
    %315 = vector.extract_strided_slice %284 {offsets = [0, 5], sizes = [8, 1], strides = [1, 1]} : vector<8x9xf32> to vector<8x1xf32>
    %316 = vector.extract_strided_slice %283 {offsets = [0, 20], sizes = [1, 286], strides = [1, 1]} : vector<1x324xf32> to vector<1x286xf32>
    %317 = vector.broadcast %315 : vector<8x1xf32> to vector<8x286xf32>
    %318 = vector.broadcast %316 : vector<1x286xf32> to vector<8x286xf32>
    %319 = arith.mulf %317, %318 : vector<8x286xf32>
    %320 = arith.addf %314, %319 : vector<8x286xf32>
    %321 = vector.extract_strided_slice %284 {offsets = [0, 6], sizes = [8, 1], strides = [1, 1]} : vector<8x9xf32> to vector<8x1xf32>
    %322 = vector.extract_strided_slice %283 {offsets = [0, 36], sizes = [1, 286], strides = [1, 1]} : vector<1x324xf32> to vector<1x286xf32>
    %323 = vector.broadcast %321 : vector<8x1xf32> to vector<8x286xf32>
    %324 = vector.broadcast %322 : vector<1x286xf32> to vector<8x286xf32>
    %325 = arith.mulf %323, %324 : vector<8x286xf32>
    %326 = arith.addf %320, %325 : vector<8x286xf32>
    %327 = vector.extract_strided_slice %284 {offsets = [0, 7], sizes = [8, 1], strides = [1, 1]} : vector<8x9xf32> to vector<8x1xf32>
    %328 = vector.extract_strided_slice %283 {offsets = [0, 37], sizes = [1, 286], strides = [1, 1]} : vector<1x324xf32> to vector<1x286xf32>
    %329 = vector.broadcast %327 : vector<8x1xf32> to vector<8x286xf32>
    %330 = vector.broadcast %328 : vector<1x286xf32> to vector<8x286xf32>
    %331 = arith.mulf %329, %330 : vector<8x286xf32>
    %332 = arith.addf %326, %331 : vector<8x286xf32>
    %333 = vector.extract_strided_slice %284 {offsets = [0, 8], sizes = [8, 1], strides = [1, 1]} : vector<8x9xf32> to vector<8x1xf32>
    %334 = vector.extract_strided_slice %283 {offsets = [0, 38], sizes = [1, 286], strides = [1, 1]} : vector<1x324xf32> to vector<1x286xf32>
    %335 = vector.broadcast %333 : vector<8x1xf32> to vector<8x286xf32>
    %336 = vector.broadcast %334 : vector<1x286xf32> to vector<8x286xf32>
    %337 = arith.mulf %335, %336 : vector<8x286xf32>
    %338 = arith.addf %332, %337 : vector<8x286xf32>
    %339 = vector.extract_strided_slice %338 {offsets = [0, 0], sizes = [8, 16], strides = [1, 1]} : vector<8x286xf32> to vector<8x16xf32>
    %c0_69 = arith.constant 0 : index
    %c0_70 = arith.constant 0 : index
    %c0_71 = arith.constant 0 : index
    %340 = vector.load %arg4[%c0_69, %c0_70, %c0_71] : memref<1x8x256xf32, #tpu.memory_space<vmem>>, vector<1x8x16xf32>
    %341 = vector.shape_cast %340 : vector<1x8x16xf32> to vector<8x16xf32>
    %342 = vector.shape_cast %339 : vector<8x16xf32> to vector<1x8x16xf32>
    tpu.vector_store %arg4[%c0_69, %c0_70, %c0_71], %342 {strides = array<i32>} : memref<1x8x256xf32, #tpu.memory_space<vmem>>, vector<1x8x16xf32>,
    %343 = vector.extract_strided_slice %338 {offsets = [0, 18], sizes = [8, 16], strides = [1, 1]} : vector<8x286xf32> to vector<8x16xf32>
    %c0_72 = arith.constant 0 : index
    %c0_73 = arith.constant 0 : index
    %c16_74 = arith.constant 16 : index
    %344 = vector.load %arg4[%c0_72, %c0_73, %c16_74] : memref<1x8x256xf32, #tpu.memory_space<vmem>>, vector<1x8x16xf32>
    %345 = vector.shape_cast %344 : vector<1x8x16xf32> to vector<8x16xf32>
    %346 = vector.shape_cast %343 : vector<8x16xf32> to vector<1x8x16xf32>
    tpu.vector_store %arg4[%c0_72, %c0_73, %c16_74], %346 {strides = array<i32>} : memref<1x8x256xf32, #tpu.memory_space<vmem>>, vector<1x8x16xf32>,
    %347 = vector.extract_strided_slice %338 {offsets = [0, 36], sizes = [8, 16], strides = [1, 1]} : vector<8x286xf32> to vector<8x16xf32>
    %c0_75 = arith.constant 0 : index
    %c0_76 = arith.constant 0 : index
    %c32_77 = arith.constant 32 : index
    %348 = vector.load %arg4[%c0_75, %c0_76, %c32_77] : memref<1x8x256xf32, #tpu.memory_space<vmem>>, vector<1x8x16xf32>
    %349 = vector.shape_cast %348 : vector<1x8x16xf32> to vector<8x16xf32>
    %350 = vector.shape_cast %347 : vector<8x16xf32> to vector<1x8x16xf32>
    tpu.vector_store %arg4[%c0_75, %c0_76, %c32_77], %350 {strides = array<i32>} : memref<1x8x256xf32, #tpu.memory_space<vmem>>, vector<1x8x16xf32>,
    %351 = vector.extract_strided_slice %338 {offsets = [0, 54], sizes = [8, 16], strides = [1, 1]} : vector<8x286xf32> to vector<8x16xf32>
    %c0_78 = arith.constant 0 : index
    %c0_79 = arith.constant 0 : index
    %c48_80 = arith.constant 48 : index
    %352 = vector.load %arg4[%c0_78, %c0_79, %c48_80] : memref<1x8x256xf32, #tpu.memory_space<vmem>>, vector<1x8x16xf32>
    %353 = vector.shape_cast %352 : vector<1x8x16xf32> to vector<8x16xf32>
    %354 = vector.shape_cast %351 : vector<8x16xf32> to vector<1x8x16xf32>
    tpu.vector_store %arg4[%c0_78, %c0_79, %c48_80], %354 {strides = array<i32>} : memref<1x8x256xf32, #tpu.memory_space<vmem>>, vector<1x8x16xf32>,
    %355 = vector.extract_strided_slice %338 {offsets = [0, 72], sizes = [8, 16], strides = [1, 1]} : vector<8x286xf32> to vector<8x16xf32>
    %c0_81 = arith.constant 0 : index
    %c0_82 = arith.constant 0 : index
    %c64_83 = arith.constant 64 : index
    %356 = vector.load %arg4[%c0_81, %c0_82, %c64_83] : memref<1x8x256xf32, #tpu.memory_space<vmem>>, vector<1x8x16xf32>
    %357 = vector.shape_cast %356 : vector<1x8x16xf32> to vector<8x16xf32>
    %358 = vector.shape_cast %355 : vector<8x16xf32> to vector<1x8x16xf32>
    tpu.vector_store %arg4[%c0_81, %c0_82, %c64_83], %358 {strides = array<i32>} : memref<1x8x256xf32, #tpu.memory_space<vmem>>, vector<1x8x16xf32>,
    %359 = vector.extract_strided_slice %338 {offsets = [0, 90], sizes = [8, 16], strides = [1, 1]} : vector<8x286xf32> to vector<8x16xf32>
    %c0_84 = arith.constant 0 : index
    %c0_85 = arith.constant 0 : index
    %c80_86 = arith.constant 80 : index
    %360 = vector.load %arg4[%c0_84, %c0_85, %c80_86] : memref<1x8x256xf32, #tpu.memory_space<vmem>>, vector<1x8x16xf32>
    %361 = vector.shape_cast %360 : vector<1x8x16xf32> to vector<8x16xf32>
    %362 = vector.shape_cast %359 : vector<8x16xf32> to vector<1x8x16xf32>
    tpu.vector_store %arg4[%c0_84, %c0_85, %c80_86], %362 {strides = array<i32>} : memref<1x8x256xf32, #tpu.memory_space<vmem>>, vector<1x8x16xf32>,
    %363 = vector.extract_strided_slice %338 {offsets = [0, 108], sizes = [8, 16], strides = [1, 1]} : vector<8x286xf32> to vector<8x16xf32>
    %c0_87 = arith.constant 0 : index
    %c0_88 = arith.constant 0 : index
    %c96_89 = arith.constant 96 : index
    %364 = vector.load %arg4[%c0_87, %c0_88, %c96_89] : memref<1x8x256xf32, #tpu.memory_space<vmem>>, vector<1x8x16xf32>
    %365 = vector.shape_cast %364 : vector<1x8x16xf32> to vector<8x16xf32>
    %366 = vector.shape_cast %363 : vector<8x16xf32> to vector<1x8x16xf32>
    tpu.vector_store %arg4[%c0_87, %c0_88, %c96_89], %366 {strides = array<i32>} : memref<1x8x256xf32, #tpu.memory_space<vmem>>, vector<1x8x16xf32>,
    %367 = vector.extract_strided_slice %338 {offsets = [0, 126], sizes = [8, 16], strides = [1, 1]} : vector<8x286xf32> to vector<8x16xf32>
    %c0_90 = arith.constant 0 : index
    %c0_91 = arith.constant 0 : index
    %c112_92 = arith.constant 112 : index
    %368 = vector.load %arg4[%c0_90, %c0_91, %c112_92] : memref<1x8x256xf32, #tpu.memory_space<vmem>>, vector<1x8x16xf32>
    %369 = vector.shape_cast %368 : vector<1x8x16xf32> to vector<8x16xf32>
    %370 = vector.shape_cast %367 : vector<8x16xf32> to vector<1x8x16xf32>
    tpu.vector_store %arg4[%c0_90, %c0_91, %c112_92], %370 {strides = array<i32>} : memref<1x8x256xf32, #tpu.memory_space<vmem>>, vector<1x8x16xf32>,
    %371 = vector.extract_strided_slice %338 {offsets = [0, 144], sizes = [8, 16], strides = [1, 1]} : vector<8x286xf32> to vector<8x16xf32>
    %c0_93 = arith.constant 0 : index
    %c0_94 = arith.constant 0 : index
    %c128_95 = arith.constant 128 : index
    %372 = vector.load %arg4[%c0_93, %c0_94, %c128_95] : memref<1x8x256xf32, #tpu.memory_space<vmem>>, vector<1x8x16xf32>
    %373 = vector.shape_cast %372 : vector<1x8x16xf32> to vector<8x16xf32>
    %374 = vector.shape_cast %371 : vector<8x16xf32> to vector<1x8x16xf32>
    tpu.vector_store %arg4[%c0_93, %c0_94, %c128_95], %374 {strides = array<i32>} : memref<1x8x256xf32, #tpu.memory_space<vmem>>, vector<1x8x16xf32>,
    %375 = vector.extract_strided_slice %338 {offsets = [0, 162], sizes = [8, 16], strides = [1, 1]} : vector<8x286xf32> to vector<8x16xf32>
    %c0_96 = arith.constant 0 : index
    %c0_97 = arith.constant 0 : index
    %c144_98 = arith.constant 144 : index
    %376 = vector.load %arg4[%c0_96, %c0_97, %c144_98] : memref<1x8x256xf32, #tpu.memory_space<vmem>>, vector<1x8x16xf32>
    %377 = vector.shape_cast %376 : vector<1x8x16xf32> to vector<8x16xf32>
    %378 = vector.shape_cast %375 : vector<8x16xf32> to vector<1x8x16xf32>
    tpu.vector_store %arg4[%c0_96, %c0_97, %c144_98], %378 {strides = array<i32>} : memref<1x8x256xf32, #tpu.memory_space<vmem>>, vector<1x8x16xf32>,
    %379 = vector.extract_strided_slice %338 {offsets = [0, 180], sizes = [8, 16], strides = [1, 1]} : vector<8x286xf32> to vector<8x16xf32>
    %c0_99 = arith.constant 0 : index
    %c0_100 = arith.constant 0 : index
    %c160_101 = arith.constant 160 : index
    %380 = vector.load %arg4[%c0_99, %c0_100, %c160_101] : memref<1x8x256xf32, #tpu.memory_space<vmem>>, vector<1x8x16xf32>
    %381 = vector.shape_cast %380 : vector<1x8x16xf32> to vector<8x16xf32>
    %382 = vector.shape_cast %379 : vector<8x16xf32> to vector<1x8x16xf32>
    tpu.vector_store %arg4[%c0_99, %c0_100, %c160_101], %382 {strides = array<i32>} : memref<1x8x256xf32, #tpu.memory_space<vmem>>, vector<1x8x16xf32>,
    %383 = vector.extract_strided_slice %338 {offsets = [0, 198], sizes = [8, 16], strides = [1, 1]} : vector<8x286xf32> to vector<8x16xf32>
    %c0_102 = arith.constant 0 : index
    %c0_103 = arith.constant 0 : index
    %c176_104 = arith.constant 176 : index
    %384 = vector.load %arg4[%c0_102, %c0_103, %c176_104] : memref<1x8x256xf32, #tpu.memory_space<vmem>>, vector<1x8x16xf32>
    %385 = vector.shape_cast %384 : vector<1x8x16xf32> to vector<8x16xf32>
    %386 = vector.shape_cast %383 : vector<8x16xf32> to vector<1x8x16xf32>
    tpu.vector_store %arg4[%c0_102, %c0_103, %c176_104], %386 {strides = array<i32>} : memref<1x8x256xf32, #tpu.memory_space<vmem>>, vector<1x8x16xf32>,
    %387 = vector.extract_strided_slice %338 {offsets = [0, 216], sizes = [8, 16], strides = [1, 1]} : vector<8x286xf32> to vector<8x16xf32>
    %c0_105 = arith.constant 0 : index
    %c0_106 = arith.constant 0 : index
    %c192_107 = arith.constant 192 : index
    %388 = vector.load %arg4[%c0_105, %c0_106, %c192_107] : memref<1x8x256xf32, #tpu.memory_space<vmem>>, vector<1x8x16xf32>
    %389 = vector.shape_cast %388 : vector<1x8x16xf32> to vector<8x16xf32>
    %390 = vector.shape_cast %387 : vector<8x16xf32> to vector<1x8x16xf32>
    tpu.vector_store %arg4[%c0_105, %c0_106, %c192_107], %390 {strides = array<i32>} : memref<1x8x256xf32, #tpu.memory_space<vmem>>, vector<1x8x16xf32>,
    %391 = vector.extract_strided_slice %338 {offsets = [0, 234], sizes = [8, 16], strides = [1, 1]} : vector<8x286xf32> to vector<8x16xf32>
    %c0_108 = arith.constant 0 : index
    %c0_109 = arith.constant 0 : index
    %c208_110 = arith.constant 208 : index
    %392 = vector.load %arg4[%c0_108, %c0_109, %c208_110] : memref<1x8x256xf32, #tpu.memory_space<vmem>>, vector<1x8x16xf32>
    %393 = vector.shape_cast %392 : vector<1x8x16xf32> to vector<8x16xf32>
    %394 = vector.shape_cast %391 : vector<8x16xf32> to vector<1x8x16xf32>
    tpu.vector_store %arg4[%c0_108, %c0_109, %c208_110], %394 {strides = array<i32>} : memref<1x8x256xf32, #tpu.memory_space<vmem>>, vector<1x8x16xf32>,
    %395 = vector.extract_strided_slice %338 {offsets = [0, 252], sizes = [8, 16], strides = [1, 1]} : vector<8x286xf32> to vector<8x16xf32>
    %c0_111 = arith.constant 0 : index
    %c0_112 = arith.constant 0 : index
    %c224_113 = arith.constant 224 : index
    %396 = vector.load %arg4[%c0_111, %c0_112, %c224_113] : memref<1x8x256xf32, #tpu.memory_space<vmem>>, vector<1x8x16xf32>
    %397 = vector.shape_cast %396 : vector<1x8x16xf32> to vector<8x16xf32>
    %398 = vector.shape_cast %395 : vector<8x16xf32> to vector<1x8x16xf32>
    tpu.vector_store %arg4[%c0_111, %c0_112, %c224_113], %398 {strides = array<i32>} : memref<1x8x256xf32, #tpu.memory_space<vmem>>, vector<1x8x16xf32>,
    %399 = vector.extract_strided_slice %338 {offsets = [0, 270], sizes = [8, 16], strides = [1, 1]} : vector<8x286xf32> to vector<8x16xf32>
    %c0_114 = arith.constant 0 : index
    %c0_115 = arith.constant 0 : index
    %c240_116 = arith.constant 240 : index
    %400 = vector.load %arg4[%c0_114, %c0_115, %c240_116] : memref<1x8x256xf32, #tpu.memory_space<vmem>>, vector<1x8x16xf32>
    %401 = vector.shape_cast %400 : vector<1x8x16xf32> to vector<8x16xf32>
    %402 = vector.shape_cast %399 : vector<8x16xf32> to vector<1x8x16xf32>
    tpu.vector_store %arg4[%c0_114, %c0_115, %c240_116], %402 {strides = array<i32>} : memref<1x8x256xf32, #tpu.memory_space<vmem>>, vector<1x8x16xf32>,
    return
  }
  func.func @transform_0(%arg0: i32) -> (i32, i32) {
    %c0_i32 = arith.constant 0 : i32
    %c0_i32_0 = arith.constant 0 : i32
    %c0_i32_1 = arith.constant 0 : i32
    return %c0_i32, %c0_i32_0 : i32, i32
  }
  func.func @transform_1(%arg0: i32) -> (i32, i32) {
    %c0_i32 = arith.constant 0 : i32
    %c0_i32_0 = arith.constant 0 : i32
    %c0_i32_1 = arith.constant 0 : i32
    return %c0_i32, %c0_i32_0 : i32, i32
  }
  func.func @transform_2(%arg0: i32) -> (i32, i32, i32) {
    %c0_i32 = arith.constant 0 : i32
    %c0_i32_0 = arith.constant 0 : i32
    %c0_i32_1 = arith.constant 0 : i32
    return %arg0, %c0_i32, %c0_i32_0 : i32, i32, i32
  }
  func.func @transform_3(%arg0: i32) -> (i32, i32, i32) {
    %c0_i32 = arith.constant 0 : i32
    %c0_i32_0 = arith.constant 0 : i32
    %c0_i32_1 = arith.constant 0 : i32
    return %arg0, %c0_i32, %c0_i32_0 : i32, i32, i32
  }
}

</mosaic_0001>

<llo_original>
// kernel: tpu_custom_call.1
$region0: #{tpu_custom_call.1}
  #allocation0 [shape = 'u32[]', space=smem, size = 0x4, offset = 0x4, fixed_abs, tag = 'smem constant byte address 0x4 - core index']
  #allocation1 [shape = 'u32[144,128]{1,0:T(1,128)}', space=vmem, size = 0x12000, scoped, tag = 'internal scratch']
  #allocation2 [shape = 'f32[4,324]{1,0:T(4,128)}', space=vmem, size = 0x1800, scoped, tag = 'scratch operand']
  %s0 = inlined_call_operand.vmem [shape: f32[32,7], index: 0, kind: input, shape index: {}]
  %s1 = inlined_call_operand.vmem [shape: f32[2,9], index: 1, kind: input, shape index: {}]
  %s2 = inlined_call_operand.vmem [shape: f32[2,4,256], index: 2, kind: input, shape index: {}]
  %s3 = inlined_call_operand.hbm [shape: f32[2,8,256], index: 3, kind: output, shape index: {}]
  %s4 = sld [smem:[#allocation0]]
  $region45: #{tpu_custom_call.1} parent=0
    _
  %s6 = ssub.s32 1, %s4
  %s7 = scalar_select 0, %s6, %s4
  $region1: #{tpu_custom_call.1} parent=0
    #allocation3 [shape = 'u8[16384]{0}', space=vmem, size = 0x4000, scoped, tag = 'output window, operand 0']
    #allocation4 [shape = 's32[2]{0}', space=sflag, size = 0x8, scoped, tag = 'scoped memory for tpu_custom_call.1']
    %8 = vsyncpa [#allocation4], 0
    %s9 = scalar_lea.sflag [#allocation4], 1
    %10 = vsyncpa %s9, 0
    loop: start=0, step=1, limit=4
    $region2: #{tpu_custom_call.1} parent=1 // loop_pre_header
      _
    $region3: #{tpu_custom_call.1} parent=1 // loop_header
      %s12 = sphi 0, %s16
      %p13 = scmp.ge.s32.totalorder %s12, 4
      %s20 = sphi 0, %s20
      %s22 = sphi 0, %s20
      %s23 = sphi 0, %s22
      %s37 = sphi 0, %s23
      %s41 = sphi 0, %s41
      %s43 = sphi 0, %s41
      %s44 = sphi 0, %s43
      %s58 = sphi 0, %s44
      %s64 = sphi 0, %s66
      %s67 = sphi 0, %s64
      %s68 = sphi 0, %s67
      %s84 = sphi 0, %s68
      %s90 = sphi 0, %s92
      %s93 = sphi 0, %s90
      %s94 = sphi 0, %s93
      %s110 = sphi 0, %s94
    $region4: #{tpu_custom_call.1} parent=1 // loop_header_branch
      %15 = sbr.rel (%p13) target = $region8
    $region5: #{tpu_custom_call.1} parent=1 // loop_body
      %s17 = ssub.s32 %s12, 1
      %s18 = ssub.s32 %s12, 2
      %s19 = sadd.s32 %s12, 1
      %s21 = sadd.s32 %s20, 1
      %p24 = scmp.eq.s32.totalorder %s12, 1
      %p25 = scmp.ne.s32.totalorder %s20, %s22
      %p26 = scmp.eq.s32.totalorder %s12, 0
      %p27 = por %p25, %p26
      %p28 = scmp.ne.s32.totalorder %s20, %s22
      %p29 = scmp.eq.s32.totalorder %s17, 1
      %p30 = por %p28, %p29
      %p31 = scmp.ne.s32.totalorder %s22, %s23
      %p32 = scmp.eq.s32.totalorder %s17, 0
      %p33 = por %p31, %p32
      %p34 = scmp.ne.s32.totalorder %s22, %s23
      %p35 = scmp.eq.s32.totalorder %s18, 1
      %p36 = por %p34, %p35
      %p38 = scmp.ne.s32.totalorder %s23, %s37
      %p39 = scmp.eq.s32.totalorder %s18, 0
      %p40 = por %p38, %p39
      %s42 = sadd.s32 %s41, 1
      %p45 = scmp.eq.s32.totalorder %s12, 1
      %p46 = scmp.ne.s32.totalorder %s41, %s43
      %p47 = scmp.eq.s32.totalorder %s12, 0
      %p48 = por %p46, %p47
      %p49 = scmp.ne.s32.totalorder %s41, %s43
      %p50 = scmp.eq.s32.totalorder %s17, 1
      %p51 = por %p49, %p50
      %p52 = scmp.ne.s32.totalorder %s43, %s44
      %p53 = scmp.eq.s32.totalorder %s17, 0
      %p54 = por %p52, %p53
      %p55 = scmp.ne.s32.totalorder %s43, %s44
      %p56 = scmp.eq.s32.totalorder %s18, 1
      %p57 = por %p55, %p56
      %p59 = scmp.ne.s32.totalorder %s44, %s58
      %p60 = scmp.eq.s32.totalorder %s18, 0
      %p61 = por %p59, %p60
      %s62 = ssub.s32 %s12, %s19
      %p63 = scmp.eq.s32.totalorder %s62, 0
      %s65 = sadd.s32 %s64, 1
      %s66 = scalar_select %p63, %s64, %s65
      %p69 = pneg %p63
      %p70 = scmp.eq.s32.totalorder %s12, 1
      %p71 = por %p69, %p70
      %p72 = scmp.ne.s32.totalorder %s64, %s67
      %p73 = scmp.eq.s32.totalorder %s12, 0
      %p74 = por %p72, %p73
      %p75 = scmp.ne.s32.totalorder %s64, %s67
      %p76 = scmp.eq.s32.totalorder %s17, 1
      %p77 = por %p75, %p76
      %p78 = scmp.ne.s32.totalorder %s67, %s68
      %p79 = scmp.eq.s32.totalorder %s17, 0
      %p80 = por %p78, %p79
      %p81 = scmp.ne.s32.totalorder %s67, %s68
      %p82 = scmp.eq.s32.totalorder %s18, 1
      %p83 = por %p81, %p82
      %p85 = scmp.ne.s32.totalorder %s68, %s84
      %p86 = scmp.eq.s32.totalorder %s18, 0
      %p87 = por %p85, %p86
      %s88 = ssub.s32 %s12, %s19
      %p89 = scmp.eq.s32.totalorder %s88, 0
      %s91 = sadd.s32 %s90, 1
      %s92 = scalar_select %p89, %s90, %s91
      %p95 = pneg %p89
      %p96 = scmp.eq.s32.totalorder %s12, 1
      %p97 = por %p95, %p96
      %p98 = scmp.ne.s32.totalorder %s90, %s93
      %p99 = scmp.eq.s32.totalorder %s12, 0
      %p100 = por %p98, %p99
      %p101 = scmp.ne.s32.totalorder %s90, %s93
      %p102 = scmp.eq.s32.totalorder %s17, 1
      %p103 = por %p101, %p102
      %p104 = scmp.ne.s32.totalorder %s93, %s94
      %p105 = scmp.eq.s32.totalorder %s17, 0
      %p106 = por %p104, %p105
      %p107 = scmp.ne.s32.totalorder %s93, %s94
      %p108 = scmp.eq.s32.totalorder %s18, 1
      %p109 = por %p107, %p108
      %p111 = scmp.ne.s32.totalorder %s94, %s110
      %p112 = scmp.eq.s32.totalorder %s18, 0
      %p113 = por %p111, %p112
      %p114 = scmp.le.s32.totalorder 1, %s12
      %p115 = scmp.lt.s32.totalorder %s12, 3
      %p116 = pnand %p114, %p115
      %p117 = pneg %p116
      // Predicated region
      $region9: #{tpu_custom_call.1} parent=5 // pred_check
        _
      $region10: #{tpu_custom_call.1} parent=5 // pred_check_branch
        %119 = sbr.rel (%p116) target = $region12
      $region11: #{tpu_custom_call.1} parent=5 // pred_region
        %s120 = ssub.s32 %s12, 1
        // Predicated region
        $region13: #{tpu_custom_call.1} parent=11 // pred_check
          %p121 = pneg %p33
        $region14: #{tpu_custom_call.1} parent=11 // pred_check_branch
          %123 = sbr.rel (%p121) target = $region16
        $region15: #{tpu_custom_call.1} parent=11 // pred_region
          _
        $region16: #{tpu_custom_call.1} parent=11 // pred_fallthru
          _
        // Predicated region
        $region17: #{tpu_custom_call.1} parent=11 // pred_check
          %p124 = pneg %p54
        $region18: #{tpu_custom_call.1} parent=11 // pred_check_branch
          %126 = sbr.rel (%p124) target = $region20
        $region19: #{tpu_custom_call.1} parent=11 // pred_region
          _
        $region20: #{tpu_custom_call.1} parent=11 // pred_fallthru
          _
      $region12: #{tpu_custom_call.1} parent=5 // pred_fallthru
        _
      %p127 = scmp.lt.s32.totalorder %s12, 2
      // Predicated region
      $region21: #{tpu_custom_call.1} parent=5 // pred_check
        %p128 = pneg %p127
      $region22: #{tpu_custom_call.1} parent=5 // pred_check_branch
        %130 = sbr.rel (%p128) target = $region24
      $region23: #{tpu_custom_call.1} parent=5 // pred_region
        // Predicated region
        $region25: #{tpu_custom_call.1} parent=23 // pred_check
          %p131 = pneg %p74
        $region26: #{tpu_custom_call.1} parent=23 // pred_check_branch
          %133 = sbr.rel (%p131) target = $region28
        $region27: #{tpu_custom_call.1} parent=23 // pred_region
          %p134 = scmp.lt.s32.totalorder %s12, 1
          %s135 = scalar_select %p134, %s12, 1
          %s136 = smul.addr %s135, 2
          %s137 = smul.addr %s136, 4
          %s138 = scalar_lea.vmem %s2, %s137
        $region28: #{tpu_custom_call.1} parent=23 // pred_fallthru
          _
      $region24: #{tpu_custom_call.1} parent=5 // pred_fallthru
        _
      %p139 = scmp.le.s32.totalorder 1, %s12
      %p140 = scmp.lt.s32.totalorder %s12, 3
      %p141 = pnand %p139, %p140
      %p142 = pneg %p141
      // Predicated region
      $region29: #{tpu_custom_call.1} parent=5 // pred_check
        _
      $region30: #{tpu_custom_call.1} parent=5 // pred_check_branch
        %144 = sbr.rel (%p141) target = $region32
      $region31: #{tpu_custom_call.1} parent=5 // pred_region
        %s145 = ssub.s32 %s12, 1
        %p146 = pneg %p33
        %p147 = pneg %p30
        %p148 = pneg %p54
        %p149 = pneg %p51
        %p150 = scmp.lt.s32.totalorder %s17, 1
        %s151 = scalar_select %p150, %s17, 1
        %s152 = smul.addr %s151, 2
        %s153 = smul.addr %s152, 4
        %s154 = scalar_lea.vmem %s2, %s153
        %p155 = pneg %p80
        %p156 = pneg %p77
        %p157 = pneg %p106
        %p158 = pneg %p103
        %s159 = sand.u32 %s93, 1
        %s160 = scalar_lea.sflag [#allocation4], %s159
        %s161 = sand.u32 %s93, 1
        %s162 = smul.addr %s161, 16
        %s163 = scalar_lea.vmem [#allocation3], %s162
        %p164 = scmp.lt.s32.totalorder %s17, 1
        %s165 = scalar_select %p164, %s17, 1
        %s166 = smul.addr %s165, 2
        %s167 = smul.addr %s166, 4
        %s168 = scalar_lea.vmem %s2, %s167
        %v169 = vld [vmem:[%s0] sm:$0xff]
        %v170 = vld [vmem:[%s0 + $0x8] sm:$0xff]
        %v171 = vld [vmem:[%s0 + $0x10] sm:$0xff]
        %v172 = vld [vmem:[%s0 + $0x18] sm:$0xff]
        %v173 = vmul.f32 %v169, 1.442695
        %v174 = vpow.pop %v173
        %v175 = vmul.f32 %v170, 1.442695
        %v176 = vpow.pop %v175
        %v177 = vmul.f32 %v171, 1.442695
        %v178 = vpow.pop %v177
        %v179 = vmul.f32 %v172, 1.442695
        %v180 = vpow.pop %v179
        %v181 = vadd.f32 %v174, 1.0
        %v182 = vadd.f32 %v176, 1.0
        %v183 = vadd.f32 %v178, 1.0
        %v184 = vadd.f32 %v180, 1.0
        %v185 = vlog2.pop %v181
        %v186 = vmul.f32 %v185, 0.6931472
        %v187 = vlog2.pop %v182
        %v188 = vmul.f32 %v187, 0.6931472
        %v189 = vlog2.pop %v183
        %v190 = vmul.f32 %v189, 0.6931472
        %v191 = vlog2.pop %v184
        %v192 = vmul.f32 %v191, 0.6931472
        %197 = vrot.lane.b32.xlu0 %v186, 1
        %v198 = vpop.permute.xlu0 %197
        %199 = vrot.lane.b32.xlu0 %v188, 1
        %v200 = vpop.permute.xlu0 %199
        %201 = vrot.lane.b32.xlu0 %v190, 1
        %v202 = vpop.permute.xlu0 %201
        %203 = vrot.lane.b32.xlu0 %v192, 1
        %v204 = vpop.permute.xlu0 %203
        %v209 = vmul.f32 %v169, %v198
        %v210 = vmul.f32 %v170, %v200
        %v211 = vmul.f32 %v171, %v202
        %v212 = vmul.f32 %v172, %v204
        %217 = vrot.lane.b32.xlu0 %v209, 126
        %v218 = vpop.permute.xlu0 %217
        %219 = vrot.lane.b32.xlu0 %v210, 126
        %v220 = vpop.permute.xlu0 %219
        %221 = vrot.lane.b32.xlu0 %v211, 126
        %v222 = vpop.permute.xlu0 %221
        %223 = vrot.lane.b32.xlu0 %v212, 126
        %v224 = vpop.permute.xlu0 %223
        %v229 = vadd.f32 %v169, %v218
        %v230 = vadd.f32 %v170, %v220
        %v231 = vadd.f32 %v171, %v222
        %v232 = vadd.f32 %v172, %v224
        %237 = vrot.lane.b32.xlu0 %v169, 126
        %v238 = vpop.permute.xlu0 %237
        %239 = vrot.lane.b32.xlu0 %v170, 126
        %v240 = vpop.permute.xlu0 %239
        %241 = vrot.lane.b32.xlu0 %v171, 126
        %v242 = vpop.permute.xlu0 %241
        %243 = vrot.lane.b32.xlu0 %v172, 126
        %v244 = vpop.permute.xlu0 %243
        %v249 = vrcp.pop %v238
        %v250 = vmul.f32 %v169, %v249
        %v251 = vrcp.pop %v240
        %v252 = vmul.f32 %v170, %v251
        %v253 = vrcp.pop %v242
        %v254 = vmul.f32 %v171, %v253
        %v255 = vrcp.pop %v244
        %v256 = vmul.f32 %v172, %v255
        %v257 = vsub.f32 %v169, 3.1415927
        %v258 = vsub.f32 %v170, 3.1415927
        %v259 = vsub.f32 %v171, 3.1415927
        %v260 = vsub.f32 %v172, 3.1415927
        %v261 = vand.u32 2147483647, %v257
        %vm262 = vcmp.le.f32.partialorder %v261, 0.7853982
        %vm263 = vcmp.lt.s32.totalorder %v257, 0
        %v264 = vand.u32 %v257, 2139095040
        %v265 = vshrl.u32 %v264, 23
        %v266 = vsub.s32 %v265, 127
        %v267 = vand.u32 2147483647, %v257
        %v268 = vand.u32 %v267, 8388607
        %v269 = vor.u32 %v268, 8388608
        %v270 = vsub.s32 0, %v269
        %v271 = vadd.s32 %v266, 1
        %vm272 = vcmp.gt.s32.totalorder %v271, 0
        %v273 = vsel %vm272, %v271, 0
        %v274 = vshrl.u32 %v273, 5
        %v275 = vand.u32 %v273, 31
        %v276 = vsub.s32 32, %v275
        %v277 = vshrl.u32 683565275, %v276
        %v278 = vshll.u32 683565275, %v275
        %v279 = vshrl.u32 2475754826, %v276
        %v280 = vor.u32 %v278, %v279
        %v281 = vshll.u32 2475754826, %v275
        %v282 = vshrl.u32 2131351028, %v276
        %v283 = vor.u32 %v281, %v282
        %v284 = vshll.u32 2131351028, %v275
        %v285 = vshrl.u32 2102212464, %v276
        %v286 = vor.u32 %v284, %v285
        %v287 = vshll.u32 2102212464, %v275
        %v288 = vshrl.u32 920167782, %v276
        %v289 = vor.u32 %v287, %v288
        %v290 = vshll.u32 920167782, %v275
        %v291 = vshrl.u32 1326507024, %v276
        %v292 = vor.u32 %v290, %v291
        %vm293 = vcmp.lt.s32.totalorder %v274, 1
        %vm294 = vcmp.lt.s32.totalorder %v274, 2
        %vm295 = vcmp.lt.s32.totalorder %v274, 3
        %vm296 = vcmp.lt.s32.totalorder %v274, 4
        %v297 = vsel %vm293, %v277, %v280
        %v298 = vsel %vm296, %v286, 2102212464
        %v299 = vsel %vm295, %v283, %v298
        %v300 = vsel %vm294, %v297, %v299
        %v301 = vsel %vm293, %v280, %v283
        %v302 = vsel %vm296, %v289, 920167782
        %v303 = vsel %vm295, %v286, %v302
        %v304 = vsel %vm294, %v301, %v303
        %v305 = vsel %vm293, %v283, %v286
        %v306 = vsel %vm296, %v292, 1326507024
        %v307 = vsel %vm295, %v289, %v306
        %v308 = vsel %vm294, %v305, %v307
        %v309 = vshll.u32 %v269, 8
        %v310 = vmul.u32.u64.compose %v309, %v308
        %v311 = vextract.low.u32 %v310
        %v312 = vextract.high.u32 %v310
        %v313 = vmul.u32.u64.compose %v309, %v304
        %v314 = vextract.low.u32 %v313
        %v315 = vextract.high.u32 %v313
        %v316 = vmul.u32 %v309, %v300
        %v317 = vadd.s32 %v312, %v314
        %vm318 = vc.u32 %v312, %v314
        %v319 = vadd.s32 %v315, 1
        %v320 = vsel %vm318, %v319, %v315
        %v321 = vadd.s32 %v316, %v320
        %v322 = vadd.s32 %v321, 536870912
        %v323 = vshrl.u32 %v322, 30
        %v324 = vshll.u32 %v323, 30
        %v325 = vsub.s32 %v321, %v324
        %vm326 = vcmp.lt.s32.totalorder %v325, 0
        %v327 = vsub.s32 0, %v325
        %v328 = vsel %vm326, %v327, %v325
        %v329 = vclz %v328
        %v330 = vsub.s32 %v329, 2
        %vm331 = vcmp.gt.s32.totalorder 0, %v330
        %v332 = vsel %vm331, 0, %v330
        %v333 = vsub.s32 32, %v332
        %v334 = vshll.u32 %v325, %v332
        %v335 = vshrl.u32 %v317, %v333
        %v336 = vor.u32 %v334, %v335
        %v337 = vsub.s32 4294967266, %v332
        %v338 = vadd.s32 %v337, 127
        %v339 = vshll.u32 %v338, 23
        %v340 = vor.u32 4788187, %v339
        %v341 = vand.u32 2147483647, %v340
        %v343 = vcvt.s32.f32 %v336
        %v344 = vmul.f32 %v343, %v341
        %v345 = vxor.u32 %v344, 2147483648
        %v346 = vsel %vm263, %v345, %v344
        %v347 = vsub.s32 4, %v323
        %v348 = vsel %vm263, %v347, %v323
        %v349 = vsel %vm262, %v257, %v346
        %v350 = vsel %vm262, 0, %v348
        %v351 = vcosq.f32.pop %v349
        %v352 = vsinq.f32.pop %v349
        %vm353 = vweird.f32 %v257
        %v354 = vand.u32 %v350, 3
        %vm355 = vcmp.lt.s32.totalorder %v354, 2
        %vm356 = vcmp.eq.s32.totalorder %v354, 0
        %v357 = vxor.u32 %v352, 2147483648
        %v358 = vsel %vm356, %v351, %v357
        %vm359 = vcmp.eq.s32.totalorder %v354, 2
        %v360 = vxor.u32 %v351, 2147483648
        %v361 = vsel %vm359, %v360, %v352
        %v362 = vsel %vm355, %v358, %v361
        %v363 = vsel %vm353, nan, %v362
        %v364 = vand.u32 2147483647, %v258
        %vm365 = vcmp.le.f32.partialorder %v364, 0.7853982
        %vm366 = vcmp.lt.s32.totalorder %v258, 0
        %v367 = vand.u32 %v258, 2139095040
        %v368 = vshrl.u32 %v367, 23
        %v369 = vsub.s32 %v368, 127
        %v370 = vand.u32 2147483647, %v258
        %v371 = vand.u32 %v370, 8388607
        %v372 = vor.u32 %v371, 8388608
        %v373 = vsub.s32 0, %v372
        %v374 = vadd.s32 %v369, 1
        %vm375 = vcmp.gt.s32.totalorder %v374, 0
        %v376 = vsel %vm375, %v374, 0
        %v377 = vshrl.u32 %v376, 5
        %v378 = vand.u32 %v376, 31
        %v379 = vsub.s32 32, %v378
        %v380 = vshrl.u32 683565275, %v379
        %v381 = vshll.u32 683565275, %v378
        %v382 = vshrl.u32 2475754826, %v379
        %v383 = vor.u32 %v381, %v382
        %v384 = vshll.u32 2475754826, %v378
        %v385 = vshrl.u32 2131351028, %v379
        %v386 = vor.u32 %v384, %v385
        %v387 = vshll.u32 2131351028, %v378
        %v388 = vshrl.u32 2102212464, %v379
        %v389 = vor.u32 %v387, %v388
        %v390 = vshll.u32 2102212464, %v378
        %v391 = vshrl.u32 920167782, %v379
        %v392 = vor.u32 %v390, %v391
        %v393 = vshll.u32 920167782, %v378
        %v394 = vshrl.u32 1326507024, %v379
        %v395 = vor.u32 %v393, %v394
        %vm396 = vcmp.lt.s32.totalorder %v377, 1
        %vm397 = vcmp.lt.s32.totalorder %v377, 2
        %vm398 = vcmp.lt.s32.totalorder %v377, 3
        %vm399 = vcmp.lt.s32.totalorder %v377, 4
        %v400 = vsel %vm396, %v380, %v383
        %v401 = vsel %vm399, %v389, 2102212464
        %v402 = vsel %vm398, %v386, %v401
        %v403 = vsel %vm397, %v400, %v402
        %v404 = vsel %vm396, %v383, %v386
        %v405 = vsel %vm399, %v392, 920167782
        %v406 = vsel %vm398, %v389, %v405
        %v407 = vsel %vm397, %v404, %v406
        %v408 = vsel %vm396, %v386, %v389
        %v409 = vsel %vm399, %v395, 1326507024
        %v410 = vsel %vm398, %v392, %v409
        %v411 = vsel %vm397, %v408, %v410
        %v412 = vshll.u32 %v372, 8
        %v413 = vmul.u32.u64.compose %v412, %v411
        %v414 = vextract.low.u32 %v413
        %v415 = vextract.high.u32 %v413
        %v416 = vmul.u32.u64.compose %v412, %v407
        %v417 = vextract.low.u32 %v416
        %v418 = vextract.high.u32 %v416
        %v419 = vmul.u32 %v412, %v403
        %v420 = vadd.s32 %v415, %v417
        %vm421 = vc.u32 %v415, %v417
        %v422 = vadd.s32 %v418, 1
        %v423 = vsel %vm421, %v422, %v418
        %v424 = vadd.s32 %v419, %v423
        %v425 = vadd.s32 %v424, 536870912
        %v426 = vshrl.u32 %v425, 30
        %v427 = vshll.u32 %v426, 30
        %v428 = vsub.s32 %v424, %v427
        %vm429 = vcmp.lt.s32.totalorder %v428, 0
        %v430 = vsub.s32 0, %v428
        %v431 = vsel %vm429, %v430, %v428
        %v432 = vclz %v431
        %v433 = vsub.s32 %v432, 2
        %vm434 = vcmp.gt.s32.totalorder 0, %v433
        %v435 = vsel %vm434, 0, %v433
        %v436 = vsub.s32 32, %v435
        %v437 = vshll.u32 %v428, %v435
        %v438 = vshrl.u32 %v420, %v436
        %v439 = vor.u32 %v437, %v438
        %v440 = vsub.s32 4294967266, %v435
        %v441 = vadd.s32 %v440, 127
        %v442 = vshll.u32 %v441, 23
        %v443 = vor.u32 4788187, %v442
        %v444 = vand.u32 2147483647, %v443
        %v446 = vcvt.s32.f32 %v439
        %v447 = vmul.f32 %v446, %v444
        %v448 = vxor.u32 %v447, 2147483648
        %v449 = vsel %vm366, %v448, %v447
        %v450 = vsub.s32 4, %v426
        %v451 = vsel %vm366, %v450, %v426
        %v452 = vsel %vm365, %v258, %v449
        %v453 = vsel %vm365, 0, %v451
        %v454 = vcosq.f32.pop %v452
        %v455 = vsinq.f32.pop %v452
        %vm456 = vweird.f32 %v258
        %v457 = vand.u32 %v453, 3
        %vm458 = vcmp.lt.s32.totalorder %v457, 2
        %vm459 = vcmp.eq.s32.totalorder %v457, 0
        %v460 = vxor.u32 %v455, 2147483648
        %v461 = vsel %vm459, %v454, %v460
        %vm462 = vcmp.eq.s32.totalorder %v457, 2
        %v463 = vxor.u32 %v454, 2147483648
        %v464 = vsel %vm462, %v463, %v455
        %v465 = vsel %vm458, %v461, %v464
        %v466 = vsel %vm456, nan, %v465
        %v467 = vand.u32 2147483647, %v259
        %vm468 = vcmp.le.f32.partialorder %v467, 0.7853982
        %vm469 = vcmp.lt.s32.totalorder %v259, 0
        %v470 = vand.u32 %v259, 2139095040
        %v471 = vshrl.u32 %v470, 23
        %v472 = vsub.s32 %v471, 127
        %v473 = vand.u32 2147483647, %v259
        %v474 = vand.u32 %v473, 8388607
        %v475 = vor.u32 %v474, 8388608
        %v476 = vsub.s32 0, %v475
        %v477 = vadd.s32 %v472, 1
        %vm478 = vcmp.gt.s32.totalorder %v477, 0
        %v479 = vsel %vm478, %v477, 0
        %v480 = vshrl.u32 %v479, 5
        %v481 = vand.u32 %v479, 31
        %v482 = vsub.s32 32, %v481
        %v483 = vshrl.u32 683565275, %v482
        %v484 = vshll.u32 683565275, %v481
        %v485 = vshrl.u32 2475754826, %v482
        %v486 = vor.u32 %v484, %v485
        %v487 = vshll.u32 2475754826, %v481
        %v488 = vshrl.u32 2131351028, %v482
        %v489 = vor.u32 %v487, %v488
        %v490 = vshll.u32 2131351028, %v481
        %v491 = vshrl.u32 2102212464, %v482
        %v492 = vor.u32 %v490, %v491
        %v493 = vshll.u32 2102212464, %v481
        %v494 = vshrl.u32 920167782, %v482
        %v495 = vor.u32 %v493, %v494
        %v496 = vshll.u32 920167782, %v481
        %v497 = vshrl.u32 1326507024, %v482
        %v498 = vor.u32 %v496, %v497
        %vm499 = vcmp.lt.s32.totalorder %v480, 1
        %vm500 = vcmp.lt.s32.totalorder %v480, 2
        %vm501 = vcmp.lt.s32.totalorder %v480, 3
        %vm502 = vcmp.lt.s32.totalorder %v480, 4
        %v503 = vsel %vm499, %v483, %v486
        %v504 = vsel %vm502, %v492, 2102212464
        %v505 = vsel %vm501, %v489, %v504
        %v506 = vsel %vm500, %v503, %v505
        %v507 = vsel %vm499, %v486, %v489
        %v508 = vsel %vm502, %v495, 920167782
        %v509 = vsel %vm501, %v492, %v508
        %v510 = vsel %vm500, %v507, %v509
        %v511 = vsel %vm499, %v489, %v492
        %v512 = vsel %vm502, %v498, 1326507024
        %v513 = vsel %vm501, %v495, %v512
        %v514 = vsel %vm500, %v511, %v513
        %v515 = vshll.u32 %v475, 8
        %v516 = vmul.u32.u64.compose %v515, %v514
        %v517 = vextract.low.u32 %v516
        %v518 = vextract.high.u32 %v516
        %v519 = vmul.u32.u64.compose %v515, %v510
        %v520 = vextract.low.u32 %v519
        %v521 = vextract.high.u32 %v519
        %v522 = vmul.u32 %v515, %v506
        %v523 = vadd.s32 %v518, %v520
        %vm524 = vc.u32 %v518, %v520
        %v525 = vadd.s32 %v521, 1
        %v526 = vsel %vm524, %v525, %v521
        %v527 = vadd.s32 %v522, %v526
        %v528 = vadd.s32 %v527, 536870912
        %v529 = vshrl.u32 %v528, 30
        %v530 = vshll.u32 %v529, 30
        %v531 = vsub.s32 %v527, %v530
        %vm532 = vcmp.lt.s32.totalorder %v531, 0
        %v533 = vsub.s32 0, %v531
        %v534 = vsel %vm532, %v533, %v531
        %v535 = vclz %v534
        %v536 = vsub.s32 %v535, 2
        %vm537 = vcmp.gt.s32.totalorder 0, %v536
        %v538 = vsel %vm537, 0, %v536
        %v539 = vsub.s32 32, %v538
        %v540 = vshll.u32 %v531, %v538
        %v541 = vshrl.u32 %v523, %v539
        %v542 = vor.u32 %v540, %v541
        %v543 = vsub.s32 4294967266, %v538
        %v544 = vadd.s32 %v543, 127
        %v545 = vshll.u32 %v544, 23
        %v546 = vor.u32 4788187, %v545
        %v547 = vand.u32 2147483647, %v546
        %v549 = vcvt.s32.f32 %v542
        %v550 = vmul.f32 %v549, %v547
        %v551 = vxor.u32 %v550, 2147483648
        %v552 = vsel %vm469, %v551, %v550
        %v553 = vsub.s32 4, %v529
        %v554 = vsel %vm469, %v553, %v529
        %v555 = vsel %vm468, %v259, %v552
        %v556 = vsel %vm468, 0, %v554
        %v557 = vcosq.f32.pop %v555
        %v558 = vsinq.f32.pop %v555
        %vm559 = vweird.f32 %v259
        %v560 = vand.u32 %v556, 3
        %vm561 = vcmp.lt.s32.totalorder %v560, 2
        %vm562 = vcmp.eq.s32.totalorder %v560, 0
        %v563 = vxor.u32 %v558, 2147483648
        %v564 = vsel %vm562, %v557, %v563
        %vm565 = vcmp.eq.s32.totalorder %v560, 2
        %v566 = vxor.u32 %v557, 2147483648
        %v567 = vsel %vm565, %v566, %v558
        %v568 = vsel %vm561, %v564, %v567
        %v569 = vsel %vm559, nan, %v568
        %v570 = vand.u32 2147483647, %v260
        %vm571 = vcmp.le.f32.partialorder %v570, 0.7853982
        %vm572 = vcmp.lt.s32.totalorder %v260, 0
        %v573 = vand.u32 %v260, 2139095040
        %v574 = vshrl.u32 %v573, 23
        %v575 = vsub.s32 %v574, 127
        %v576 = vand.u32 2147483647, %v260
        %v577 = vand.u32 %v576, 8388607
        %v578 = vor.u32 %v577, 8388608
        %v579 = vsub.s32 0, %v578
        %v580 = vadd.s32 %v575, 1
        %vm581 = vcmp.gt.s32.totalorder %v580, 0
        %v582 = vsel %vm581, %v580, 0
        %v583 = vshrl.u32 %v582, 5
        %v584 = vand.u32 %v582, 31
        %v585 = vsub.s32 32, %v584
        %v586 = vshrl.u32 683565275, %v585
        %v587 = vshll.u32 683565275, %v584
        %v588 = vshrl.u32 2475754826, %v585
        %v589 = vor.u32 %v587, %v588
        %v590 = vshll.u32 2475754826, %v584
        %v591 = vshrl.u32 2131351028, %v585
        %v592 = vor.u32 %v590, %v591
        %v593 = vshll.u32 2131351028, %v584
        %v594 = vshrl.u32 2102212464, %v585
        %v595 = vor.u32 %v593, %v594
        %v596 = vshll.u32 2102212464, %v584
        %v597 = vshrl.u32 920167782, %v585
        %v598 = vor.u32 %v596, %v597
        %v599 = vshll.u32 920167782, %v584
        %v600 = vshrl.u32 1326507024, %v585
        %v601 = vor.u32 %v599, %v600
        %vm602 = vcmp.lt.s32.totalorder %v583, 1
        %vm603 = vcmp.lt.s32.totalorder %v583, 2
        %vm604 = vcmp.lt.s32.totalorder %v583, 3
        %vm605 = vcmp.lt.s32.totalorder %v583, 4
        %v606 = vsel %vm602, %v586, %v589
        %v607 = vsel %vm605, %v595, 2102212464
        %v608 = vsel %vm604, %v592, %v607
        %v609 = vsel %vm603, %v606, %v608
        %v610 = vsel %vm602, %v589, %v592
        %v611 = vsel %vm605, %v598, 920167782
        %v612 = vsel %vm604, %v595, %v611
        %v613 = vsel %vm603, %v610, %v612
        %v614 = vsel %vm602, %v592, %v595
        %v615 = vsel %vm605, %v601, 1326507024
        %v616 = vsel %vm604, %v598, %v615
        %v617 = vsel %vm603, %v614, %v616
        %v618 = vshll.u32 %v578, 8
        %v619 = vmul.u32.u64.compose %v618, %v617
        %v620 = vextract.low.u32 %v619
        %v621 = vextract.high.u32 %v619
        %v622 = vmul.u32.u64.compose %v618, %v613
        %v623 = vextract.low.u32 %v622
        %v624 = vextract.high.u32 %v622
        %v625 = vmul.u32 %v618, %v609
        %v626 = vadd.s32 %v621, %v623
        %vm627 = vc.u32 %v621, %v623
        %v628 = vadd.s32 %v624, 1
        %v629 = vsel %vm627, %v628, %v624
        %v630 = vadd.s32 %v625, %v629
        %v631 = vadd.s32 %v630, 536870912
        %v632 = vshrl.u32 %v631, 30
        %v633 = vshll.u32 %v632, 30
        %v634 = vsub.s32 %v630, %v633
        %vm635 = vcmp.lt.s32.totalorder %v634, 0
        %v636 = vsub.s32 0, %v634
        %v637 = vsel %vm635, %v636, %v634
        %v638 = vclz %v637
        %v639 = vsub.s32 %v638, 2
        %vm640 = vcmp.gt.s32.totalorder 0, %v639
        %v641 = vsel %vm640, 0, %v639
        %v642 = vsub.s32 32, %v641
        %v643 = vshll.u32 %v634, %v641
        %v644 = vshrl.u32 %v626, %v642
        %v645 = vor.u32 %v643, %v644
        %v646 = vsub.s32 4294967266, %v641
        %v647 = vadd.s32 %v646, 127
        %v648 = vshll.u32 %v647, 23
        %v649 = vor.u32 4788187, %v648
        %v650 = vand.u32 2147483647, %v649
        %v652 = vcvt.s32.f32 %v645
        %v653 = vmul.f32 %v652, %v650
        %v654 = vxor.u32 %v653, 2147483648
        %v655 = vsel %vm572, %v654, %v653
        %v656 = vsub.s32 4, %v632
        %v657 = vsel %vm572, %v656, %v632
        %v658 = vsel %vm571, %v260, %v655
        %v659 = vsel %vm571, 0, %v657
        %v660 = vcosq.f32.pop %v658
        %v661 = vsinq.f32.pop %v658
        %vm662 = vweird.f32 %v260
        %v663 = vand.u32 %v659, 3
        %vm664 = vcmp.lt.s32.totalorder %v663, 2
        %vm665 = vcmp.eq.s32.totalorder %v663, 0
        %v666 = vxor.u32 %v661, 2147483648
        %v667 = vsel %vm665, %v660, %v666
        %vm668 = vcmp.eq.s32.totalorder %v663, 2
        %v669 = vxor.u32 %v660, 2147483648
        %v670 = vsel %vm668, %v669, %v661
        %v671 = vsel %vm664, %v667, %v670
        %v672 = vsel %vm662, nan, %v671
        %v673 = vand.u32 2147483647, %v257
        %vm674 = vcmp.le.f32.partialorder %v673, 0.7853982
        %vm675 = vcmp.lt.s32.totalorder %v257, 0
        %v676 = vand.u32 %v257, 2139095040
        %v677 = vshrl.u32 %v676, 23
        %v678 = vsub.s32 %v677, 127
        %v679 = vand.u32 2147483647, %v257
        %v680 = vand.u32 %v679, 8388607
        %v681 = vor.u32 %v680, 8388608
        %v682 = vsub.s32 0, %v681
        %v683 = vadd.s32 %v678, 1
        %vm684 = vcmp.gt.s32.totalorder %v683, 0
        %v685 = vsel %vm684, %v683, 0
        %v686 = vshrl.u32 %v685, 5
        %v687 = vand.u32 %v685, 31
        %v688 = vsub.s32 32, %v687
        %v689 = vshrl.u32 683565275, %v688
        %v690 = vshll.u32 683565275, %v687
        %v691 = vshrl.u32 2475754826, %v688
        %v692 = vor.u32 %v690, %v691
        %v693 = vshll.u32 2475754826, %v687
        %v694 = vshrl.u32 2131351028, %v688
        %v695 = vor.u32 %v693, %v694
        %v696 = vshll.u32 2131351028, %v687
        %v697 = vshrl.u32 2102212464, %v688
        %v698 = vor.u32 %v696, %v697
        %v699 = vshll.u32 2102212464, %v687
        %v700 = vshrl.u32 920167782, %v688
        %v701 = vor.u32 %v699, %v700
        %v702 = vshll.u32 920167782, %v687
        %v703 = vshrl.u32 1326507024, %v688
        %v704 = vor.u32 %v702, %v703
        %vm705 = vcmp.lt.s32.totalorder %v686, 1
        %vm706 = vcmp.lt.s32.totalorder %v686, 2
        %vm707 = vcmp.lt.s32.totalorder %v686, 3
        %vm708 = vcmp.lt.s32.totalorder %v686, 4
        %v709 = vsel %vm705, %v689, %v692
        %v710 = vsel %vm708, %v698, 2102212464
        %v711 = vsel %vm707, %v695, %v710
        %v712 = vsel %vm706, %v709, %v711
        %v713 = vsel %vm705, %v692, %v695
        %v714 = vsel %vm708, %v701, 920167782
        %v715 = vsel %vm707, %v698, %v714
        %v716 = vsel %vm706, %v713, %v715
        %v717 = vsel %vm705, %v695, %v698
        %v718 = vsel %vm708, %v704, 1326507024
        %v719 = vsel %vm707, %v701, %v718
        %v720 = vsel %vm706, %v717, %v719
        %v721 = vshll.u32 %v681, 8
        %v722 = vmul.u32.u64.compose %v721, %v720
        %v723 = vextract.low.u32 %v722
        %v724 = vextract.high.u32 %v722
        %v725 = vmul.u32.u64.compose %v721, %v716
        %v726 = vextract.low.u32 %v725
        %v727 = vextract.high.u32 %v725
        %v728 = vmul.u32 %v721, %v712
        %v729 = vadd.s32 %v724, %v726
        %vm730 = vc.u32 %v724, %v726
        %v731 = vadd.s32 %v727, 1
        %v732 = vsel %vm730, %v731, %v727
        %v733 = vadd.s32 %v728, %v732
        %v734 = vadd.s32 %v733, 536870912
        %v735 = vshrl.u32 %v734, 30
        %v736 = vshll.u32 %v735, 30
        %v737 = vsub.s32 %v733, %v736
        %vm738 = vcmp.lt.s32.totalorder %v737, 0
        %v739 = vsub.s32 0, %v737
        %v740 = vsel %vm738, %v739, %v737
        %v741 = vclz %v740
        %v742 = vsub.s32 %v741, 2
        %vm743 = vcmp.gt.s32.totalorder 0, %v742
        %v744 = vsel %vm743, 0, %v742
        %v745 = vsub.s32 32, %v744
        %v746 = vshll.u32 %v737, %v744
        %v747 = vshrl.u32 %v729, %v745
        %v748 = vor.u32 %v746, %v747
        %v749 = vsub.s32 4294967266, %v744
        %v750 = vadd.s32 %v749, 127
        %v751 = vshll.u32 %v750, 23
        %v752 = vor.u32 4788187, %v751
        %v753 = vand.u32 2147483647, %v752
        %v755 = vcvt.s32.f32 %v748
        %v756 = vmul.f32 %v755, %v753
        %v757 = vxor.u32 %v756, 2147483648
        %v758 = vsel %vm675, %v757, %v756
        %v759 = vsub.s32 4, %v735
        %v760 = vsel %vm675, %v759, %v735
        %v761 = vsel %vm674, %v257, %v758
        %v762 = vsel %vm674, 0, %v760
        %v763 = vcosq.f32.pop %v761
        %v764 = vsinq.f32.pop %v761
        %vm765 = vweird.f32 %v257
        %v766 = vadd.s32 %v762, 3
        %v767 = vand.u32 %v766, 3
        %vm768 = vcmp.lt.s32.totalorder %v767, 2
        %vm769 = vcmp.eq.s32.totalorder %v767, 0
        %v770 = vxor.u32 %v764, 2147483648
        %v771 = vsel %vm769, %v763, %v770
        %vm772 = vcmp.eq.s32.totalorder %v767, 2
        %v773 = vxor.u32 %v763, 2147483648
        %v774 = vsel %vm772, %v773, %v764
        %v775 = vsel %vm768, %v771, %v774
        %v776 = vsel %vm765, nan, %v775
        %v777 = vand.u32 2147483647, %v258
        %vm778 = vcmp.le.f32.partialorder %v777, 0.7853982
        %vm779 = vcmp.lt.s32.totalorder %v258, 0
        %v780 = vand.u32 %v258, 2139095040
        %v781 = vshrl.u32 %v780, 23
        %v782 = vsub.s32 %v781, 127
        %v783 = vand.u32 2147483647, %v258
        %v784 = vand.u32 %v783, 8388607
        %v785 = vor.u32 %v784, 8388608
        %v786 = vsub.s32 0, %v785
        %v787 = vadd.s32 %v782, 1
        %vm788 = vcmp.gt.s32.totalorder %v787, 0
        %v789 = vsel %vm788, %v787, 0
        %v790 = vshrl.u32 %v789, 5
        %v791 = vand.u32 %v789, 31
        %v792 = vsub.s32 32, %v791
        %v793 = vshrl.u32 683565275, %v792
        %v794 = vshll.u32 683565275, %v791
        %v795 = vshrl.u32 2475754826, %v792
        %v796 = vor.u32 %v794, %v795
        %v797 = vshll.u32 2475754826, %v791
        %v798 = vshrl.u32 2131351028, %v792
        %v799 = vor.u32 %v797, %v798
        %v800 = vshll.u32 2131351028, %v791
        %v801 = vshrl.u32 2102212464, %v792
        %v802 = vor.u32 %v800, %v801
        %v803 = vshll.u32 2102212464, %v791
        %v804 = vshrl.u32 920167782, %v792
        %v805 = vor.u32 %v803, %v804
        %v806 = vshll.u32 920167782, %v791
        %v807 = vshrl.u32 1326507024, %v792
        %v808 = vor.u32 %v806, %v807
        %vm809 = vcmp.lt.s32.totalorder %v790, 1
        %vm810 = vcmp.lt.s32.totalorder %v790, 2
        %vm811 = vcmp.lt.s32.totalorder %v790, 3
        %vm812 = vcmp.lt.s32.totalorder %v790, 4
        %v813 = vsel %vm809, %v793, %v796
        %v814 = vsel %vm812, %v802, 2102212464
        %v815 = vsel %vm811, %v799, %v814
        %v816 = vsel %vm810, %v813, %v815
        %v817 = vsel %vm809, %v796, %v799
        %v818 = vsel %vm812, %v805, 920167782
        %v819 = vsel %vm811, %v802, %v818
        %v820 = vsel %vm810, %v817, %v819
        %v821 = vsel %vm809, %v799, %v802
        %v822 = vsel %vm812, %v808, 1326507024
        %v823 = vsel %vm811, %v805, %v822
        %v824 = vsel %vm810, %v821, %v823
        %v825 = vshll.u32 %v785, 8
        %v826 = vmul.u32.u64.compose %v825, %v824
        %v827 = vextract.low.u32 %v826
        %v828 = vextract.high.u32 %v826
        %v829 = vmul.u32.u64.compose %v825, %v820
        %v830 = vextract.low.u32 %v829
        %v831 = vextract.high.u32 %v829
        %v832 = vmul.u32 %v825, %v816
        %v833 = vadd.s32 %v828, %v830
        %vm834 = vc.u32 %v828, %v830
        %v835 = vadd.s32 %v831, 1
        %v836 = vsel %vm834, %v835, %v831
        %v837 = vadd.s32 %v832, %v836
        %v838 = vadd.s32 %v837, 536870912
        %v839 = vshrl.u32 %v838, 30
        %v840 = vshll.u32 %v839, 30
        %v841 = vsub.s32 %v837, %v840
        %vm842 = vcmp.lt.s32.totalorder %v841, 0
        %v843 = vsub.s32 0, %v841
        %v844 = vsel %vm842, %v843, %v841
        %v845 = vclz %v844
        %v846 = vsub.s32 %v845, 2
        %vm847 = vcmp.gt.s32.totalorder 0, %v846
        %v848 = vsel %vm847, 0, %v846
        %v849 = vsub.s32 32, %v848
        %v850 = vshll.u32 %v841, %v848
        %v851 = vshrl.u32 %v833, %v849
        %v852 = vor.u32 %v850, %v851
        %v853 = vsub.s32 4294967266, %v848
        %v854 = vadd.s32 %v853, 127
        %v855 = vshll.u32 %v854, 23
        %v856 = vor.u32 4788187, %v855
        %v857 = vand.u32 2147483647, %v856
        %v859 = vcvt.s32.f32 %v852
        %v860 = vmul.f32 %v859, %v857
        %v861 = vxor.u32 %v860, 2147483648
        %v862 = vsel %vm779, %v861, %v860
        %v863 = vsub.s32 4, %v839
        %v864 = vsel %vm779, %v863, %v839
        %v865 = vsel %vm778, %v258, %v862
        %v866 = vsel %vm778, 0, %v864
        %v867 = vcosq.f32.pop %v865
        %v868 = vsinq.f32.pop %v865
        %vm869 = vweird.f32 %v258
        %v870 = vadd.s32 %v866, 3
        %v871 = vand.u32 %v870, 3
        %vm872 = vcmp.lt.s32.totalorder %v871, 2
        %vm873 = vcmp.eq.s32.totalorder %v871, 0
        %v874 = vxor.u32 %v868, 2147483648
        %v875 = vsel %vm873, %v867, %v874
        %vm876 = vcmp.eq.s32.totalorder %v871, 2
        %v877 = vxor.u32 %v867, 2147483648
        %v878 = vsel %vm876, %v877, %v868
        %v879 = vsel %vm872, %v875, %v878
        %v880 = vsel %vm869, nan, %v879
        %v881 = vand.u32 2147483647, %v259
        %vm882 = vcmp.le.f32.partialorder %v881, 0.7853982
        %vm883 = vcmp.lt.s32.totalorder %v259, 0
        %v884 = vand.u32 %v259, 2139095040
        %v885 = vshrl.u32 %v884, 23
        %v886 = vsub.s32 %v885, 127
        %v887 = vand.u32 2147483647, %v259
        %v888 = vand.u32 %v887, 8388607
        %v889 = vor.u32 %v888, 8388608
        %v890 = vsub.s32 0, %v889
        %v891 = vadd.s32 %v886, 1
        %vm892 = vcmp.gt.s32.totalorder %v891, 0
        %v893 = vsel %vm892, %v891, 0
        %v894 = vshrl.u32 %v893, 5
        %v895 = vand.u32 %v893, 31
        %v896 = vsub.s32 32, %v895
        %v897 = vshrl.u32 683565275, %v896
        %v898 = vshll.u32 683565275, %v895
        %v899 = vshrl.u32 2475754826, %v896
        %v900 = vor.u32 %v898, %v899
        %v901 = vshll.u32 2475754826, %v895
        %v902 = vshrl.u32 2131351028, %v896
        %v903 = vor.u32 %v901, %v902
        %v904 = vshll.u32 2131351028, %v895
        %v905 = vshrl.u32 2102212464, %v896
        %v906 = vor.u32 %v904, %v905
        %v907 = vshll.u32 2102212464, %v895
        %v908 = vshrl.u32 920167782, %v896
        %v909 = vor.u32 %v907, %v908
        %v910 = vshll.u32 920167782, %v895
        %v911 = vshrl.u32 1326507024, %v896
        %v912 = vor.u32 %v910, %v911
        %vm913 = vcmp.lt.s32.totalorder %v894, 1
        %vm914 = vcmp.lt.s32.totalorder %v894, 2
        %vm915 = vcmp.lt.s32.totalorder %v894, 3
        %vm916 = vcmp.lt.s32.totalorder %v894, 4
        %v917 = vsel %vm913, %v897, %v900
        %v918 = vsel %vm916, %v906, 2102212464
        %v919 = vsel %vm915, %v903, %v918
        %v920 = vsel %vm914, %v917, %v919
        %v921 = vsel %vm913, %v900, %v903
        %v922 = vsel %vm916, %v909, 920167782
        %v923 = vsel %vm915, %v906, %v922
        %v924 = vsel %vm914, %v921, %v923
        %v925 = vsel %vm913, %v903, %v906
        %v926 = vsel %vm916, %v912, 1326507024
        %v927 = vsel %vm915, %v909, %v926
        %v928 = vsel %vm914, %v925, %v927
        %v929 = vshll.u32 %v889, 8
        %v930 = vmul.u32.u64.compose %v929, %v928
        %v931 = vextract.low.u32 %v930
        %v932 = vextract.high.u32 %v930
        %v933 = vmul.u32.u64.compose %v929, %v924
        %v934 = vextract.low.u32 %v933
        %v935 = vextract.high.u32 %v933
        %v936 = vmul.u32 %v929, %v920
        %v937 = vadd.s32 %v932, %v934
        %vm938 = vc.u32 %v932, %v934
        %v939 = vadd.s32 %v935, 1
        %v940 = vsel %vm938, %v939, %v935
        %v941 = vadd.s32 %v936, %v940
        %v942 = vadd.s32 %v941, 536870912
        %v943 = vshrl.u32 %v942, 30
        %v944 = vshll.u32 %v943, 30
        %v945 = vsub.s32 %v941, %v944
        %vm946 = vcmp.lt.s32.totalorder %v945, 0
        %v947 = vsub.s32 0, %v945
        %v948 = vsel %vm946, %v947, %v945
        %v949 = vclz %v948
        %v950 = vsub.s32 %v949, 2
        %vm951 = vcmp.gt.s32.totalorder 0, %v950
        %v952 = vsel %vm951, 0, %v950
        %v953 = vsub.s32 32, %v952
        %v954 = vshll.u32 %v945, %v952
        %v955 = vshrl.u32 %v937, %v953
        %v956 = vor.u32 %v954, %v955
        %v957 = vsub.s32 4294967266, %v952
        %v958 = vadd.s32 %v957, 127
        %v959 = vshll.u32 %v958, 23
        %v960 = vor.u32 4788187, %v959
        %v961 = vand.u32 2147483647, %v960
        %v963 = vcvt.s32.f32 %v956
        %v964 = vmul.f32 %v963, %v961
        %v965 = vxor.u32 %v964, 2147483648
        %v966 = vsel %vm883, %v965, %v964
        %v967 = vsub.s32 4, %v943
        %v968 = vsel %vm883, %v967, %v943
        %v969 = vsel %vm882, %v259, %v966
        %v970 = vsel %vm882, 0, %v968
        %v971 = vcosq.f32.pop %v969
        %v972 = vsinq.f32.pop %v969
        %vm973 = vweird.f32 %v259
        %v974 = vadd.s32 %v970, 3
        %v975 = vand.u32 %v974, 3
        %vm976 = vcmp.lt.s32.totalorder %v975, 2
        %vm977 = vcmp.eq.s32.totalorder %v975, 0
        %v978 = vxor.u32 %v972, 2147483648
        %v979 = vsel %vm977, %v971, %v978
        %vm980 = vcmp.eq.s32.totalorder %v975, 2
        %v981 = vxor.u32 %v971, 2147483648
        %v982 = vsel %vm980, %v981, %v972
        %v983 = vsel %vm976, %v979, %v982
        %v984 = vsel %vm973, nan, %v983
        %v985 = vand.u32 2147483647, %v260
        %vm986 = vcmp.le.f32.partialorder %v985, 0.7853982
        %vm987 = vcmp.lt.s32.totalorder %v260, 0
        %v988 = vand.u32 %v260, 2139095040
        %v989 = vshrl.u32 %v988, 23
        %v990 = vsub.s32 %v989, 127
        %v991 = vand.u32 2147483647, %v260
        %v992 = vand.u32 %v991, 8388607
        %v993 = vor.u32 %v992, 8388608
        %v994 = vsub.s32 0, %v993
        %v995 = vadd.s32 %v990, 1
        %vm996 = vcmp.gt.s32.totalorder %v995, 0
        %v997 = vsel %vm996, %v995, 0
        %v998 = vshrl.u32 %v997, 5
        %v999 = vand.u32 %v997, 31
        %v1000 = vsub.s32 32, %v999
        %v1001 = vshrl.u32 683565275, %v1000
        %v1002 = vshll.u32 683565275, %v999
        %v1003 = vshrl.u32 2475754826, %v1000
        %v1004 = vor.u32 %v1002, %v1003
        %v1005 = vshll.u32 2475754826, %v999
        %v1006 = vshrl.u32 2131351028, %v1000
        %v1007 = vor.u32 %v1005, %v1006
        %v1008 = vshll.u32 2131351028, %v999
        %v1009 = vshrl.u32 2102212464, %v1000
        %v1010 = vor.u32 %v1008, %v1009
        %v1011 = vshll.u32 2102212464, %v999
        %v1012 = vshrl.u32 920167782, %v1000
        %v1013 = vor.u32 %v1011, %v1012
        %v1014 = vshll.u32 920167782, %v999
        %v1015 = vshrl.u32 1326507024, %v1000
        %v1016 = vor.u32 %v1014, %v1015
        %vm1017 = vcmp.lt.s32.totalorder %v998, 1
        %vm1018 = vcmp.lt.s32.totalorder %v998, 2
        %vm1019 = vcmp.lt.s32.totalorder %v998, 3
        %vm1020 = vcmp.lt.s32.totalorder %v998, 4
        %v1021 = vsel %vm1017, %v1001, %v1004
        %v1022 = vsel %vm1020, %v1010, 2102212464
        %v1023 = vsel %vm1019, %v1007, %v1022
        %v1024 = vsel %vm1018, %v1021, %v1023
        %v1025 = vsel %vm1017, %v1004, %v1007
        %v1026 = vsel %vm1020, %v1013, 920167782
        %v1027 = vsel %vm1019, %v1010, %v1026
        %v1028 = vsel %vm1018, %v1025, %v1027
        %v1029 = vsel %vm1017, %v1007, %v1010
        %v1030 = vsel %vm1020, %v1016, 1326507024
        %v1031 = vsel %vm1019, %v1013, %v1030
        %v1032 = vsel %vm1018, %v1029, %v1031
        %v1033 = vshll.u32 %v993, 8
        %v1034 = vmul.u32.u64.compose %v1033, %v1032
        %v1035 = vextract.low.u32 %v1034
        %v1036 = vextract.high.u32 %v1034
        %v1037 = vmul.u32.u64.compose %v1033, %v1028
        %v1038 = vextract.low.u32 %v1037
        %v1039 = vextract.high.u32 %v1037
        %v1040 = vmul.u32 %v1033, %v1024
        %v1041 = vadd.s32 %v1036, %v1038
        %vm1042 = vc.u32 %v1036, %v1038
        %v1043 = vadd.s32 %v1039, 1
        %v1044 = vsel %vm1042, %v1043, %v1039
        %v1045 = vadd.s32 %v1040, %v1044
        %v1046 = vadd.s32 %v1045, 536870912
        %v1047 = vshrl.u32 %v1046, 30
        %v1048 = vshll.u32 %v1047, 30
        %v1049 = vsub.s32 %v1045, %v1048
        %vm1050 = vcmp.lt.s32.totalorder %v1049, 0
        %v1051 = vsub.s32 0, %v1049
        %v1052 = vsel %vm1050, %v1051, %v1049
        %v1053 = vclz %v1052
        %v1054 = vsub.s32 %v1053, 2
        %vm1055 = vcmp.gt.s32.totalorder 0, %v1054
        %v1056 = vsel %vm1055, 0, %v1054
        %v1057 = vsub.s32 32, %v1056
        %v1058 = vshll.u32 %v1049, %v1056
        %v1059 = vshrl.u32 %v1041, %v1057
        %v1060 = vor.u32 %v1058, %v1059
        %v1061 = vsub.s32 4294967266, %v1056
        %v1062 = vadd.s32 %v1061, 127
        %v1063 = vshll.u32 %v1062, 23
        %v1064 = vor.u32 4788187, %v1063
        %v1065 = vand.u32 2147483647, %v1064
        %v1067 = vcvt.s32.f32 %v1060
        %v1068 = vmul.f32 %v1067, %v1065
        %v1069 = vxor.u32 %v1068, 2147483648
        %v1070 = vsel %vm987, %v1069, %v1068
        %v1071 = vsub.s32 4, %v1047
        %v1072 = vsel %vm987, %v1071, %v1047
        %v1073 = vsel %vm986, %v260, %v1070
        %v1074 = vsel %vm986, 0, %v1072
        %v1075 = vcosq.f32.pop %v1073
        %v1076 = vsinq.f32.pop %v1073
        %vm1077 = vweird.f32 %v260
        %v1078 = vadd.s32 %v1074, 3
        %v1079 = vand.u32 %v1078, 3
        %vm1080 = vcmp.lt.s32.totalorder %v1079, 2
        %vm1081 = vcmp.eq.s32.totalorder %v1079, 0
        %v1082 = vxor.u32 %v1076, 2147483648
        %v1083 = vsel %vm1081, %v1075, %v1082
        %vm1084 = vcmp.eq.s32.totalorder %v1079, 2
        %v1085 = vxor.u32 %v1075, 2147483648
        %v1086 = vsel %vm1084, %v1085, %v1076
        %v1087 = vsel %vm1080, %v1083, %v1086
        %v1088 = vsel %vm1077, nan, %v1087
        %v1089 = vld [vmem:[%s1] sm:$0x1]
        %v1090 = vld [vmem:[%s1 + $0x1] sm:$0x1]
        %v1091 = vlaneseq
        %v1092 = vshrl.u32 %v1091, 7
        %v1093 = vsub.s32 0, %v1092
        %v1094 = vrot.slane %v1089, %v1093
        %1096 = vset.pattern.permute.xlu0 3
        %1097 = vperm.xlu0 %1096, %v363
        %v1098 = vpop.permute.xlu0 %1097
        %1101 = vset.pattern.permute.xlu0 3
        %1102 = vperm.xlu0 %1101, %v466
        %v1103 = vpop.permute.xlu0 %1102
        %1106 = vset.pattern.permute.xlu0 3
        %1107 = vperm.xlu0 %1106, %v569
        %v1108 = vpop.permute.xlu0 %1107
        %1111 = vset.pattern.permute.xlu0 3
        %1112 = vperm.xlu0 %1111, %v672
        %v1113 = vpop.permute.xlu0 %1112
        %v1115 = vmul.f32 %v1094, %v1098
        %v1116 = vmul.f32 %v1094, %v1103
        %v1117 = vmul.f32 %v1094, %v1108
        %v1118 = vmul.f32 %v1094, %v1113
        %v1119 = vlaneseq
        %v1120 = vshrl.u32 %v1119, 7
        %v1121 = vsub.s32 0, %v1120
        %v1122 = vrot.slane %v1090, %v1121
        %1124 = vset.pattern.permute.xlu0 3
        %1125 = vperm.xlu0 %1124, %v776
        %v1126 = vpop.permute.xlu0 %1125
        %1129 = vset.pattern.permute.xlu0 3
        %1130 = vperm.xlu0 %1129, %v880
        %v1131 = vpop.permute.xlu0 %1130
        %1134 = vset.pattern.permute.xlu0 3
        %1135 = vperm.xlu0 %1134, %v984
        %v1136 = vpop.permute.xlu0 %1135
        %1139 = vset.pattern.permute.xlu0 3
        %1140 = vperm.xlu0 %1139, %v1088
        %v1141 = vpop.permute.xlu0 %1140
        %v1143 = vmul.f32 %v1122, %v1126
        %v1144 = vmul.f32 %v1122, %v1131
        %v1145 = vmul.f32 %v1122, %v1136
        %v1146 = vmul.f32 %v1122, %v1141
        %v1147 = vadd.f32 %v1115, %v1143
        %v1148 = vadd.f32 %v1116, %v1144
        %v1149 = vadd.f32 %v1117, %v1145
        %v1150 = vadd.f32 %v1118, %v1146
        %v1151 = vsub.f32 0.0, %v1089
        %v1152 = vlaneseq
        %v1153 = vshrl.u32 %v1152, 7
        %v1154 = vsub.s32 0, %v1153
        %v1155 = vrot.slane %v1151, %v1154
        %v1156 = vmul.f32 %v1155, %v1126
        %v1157 = vmul.f32 %v1155, %v1131
        %v1158 = vmul.f32 %v1155, %v1136
        %v1159 = vmul.f32 %v1155, %v1141
        %v1160 = vmul.f32 %v1122, %v1098
        %v1161 = vmul.f32 %v1122, %v1103
        %v1162 = vmul.f32 %v1122, %v1108
        %v1163 = vmul.f32 %v1122, %v1113
        %v1164 = vadd.f32 %v1156, %v1160
        %v1165 = vadd.f32 %v1157, %v1161
        %v1166 = vadd.f32 %v1158, %v1162
        %v1167 = vadd.f32 %v1159, %v1163
        %v1168 = vmul.f32 %v1147, %v1147
        %v1169 = vmul.f32 %v1148, %v1148
        %v1170 = vmul.f32 %v1149, %v1149
        %v1171 = vmul.f32 %v1150, %v1150
        %v1172 = vmul.f32 %v169, %v169
        %v1173 = vmul.f32 %v170, %v170
        %v1174 = vmul.f32 %v171, %v171
        %v1175 = vmul.f32 %v172, %v172
        %1177 = vset.pattern.permute.xlu0 4
        %1178 = vperm.xlu0 %1177, %v1172
        %v1179 = vpop.permute.xlu0 %1178
        %1182 = vset.pattern.permute.xlu0 4
        %1183 = vperm.xlu0 %1182, %v1173
        %v1184 = vpop.permute.xlu0 %1183
        %1187 = vset.pattern.permute.xlu0 4
        %1188 = vperm.xlu0 %1187, %v1174
        %v1189 = vpop.permute.xlu0 %1188
        %1192 = vset.pattern.permute.xlu0 4
        %1193 = vperm.xlu0 %1192, %v1175
        %v1194 = vpop.permute.xlu0 %1193
        %v1196 = vrcp.pop %v1179
        %v1197 = vmul.f32 %v1168, %v1196
        %v1198 = vrcp.pop %v1184
        %v1199 = vmul.f32 %v1169, %v1198
        %v1200 = vrcp.pop %v1189
        %v1201 = vmul.f32 %v1170, %v1200
        %v1202 = vrcp.pop %v1194
        %v1203 = vmul.f32 %v1171, %v1202
        %v1204 = vmul.f32 %v1164, %v1164
        %v1205 = vmul.f32 %v1165, %v1165
        %v1206 = vmul.f32 %v1166, %v1166
        %v1207 = vmul.f32 %v1167, %v1167
        %v1208 = vmul.f32 %v250, %v250
        %v1209 = vmul.f32 %v252, %v252
        %v1210 = vmul.f32 %v254, %v254
        %v1211 = vmul.f32 %v256, %v256
        %1213 = vset.pattern.permute.xlu0 4
        %1214 = vperm.xlu0 %1213, %v1208
        %v1215 = vpop.permute.xlu0 %1214
        %1218 = vset.pattern.permute.xlu0 4
        %1219 = vperm.xlu0 %1218, %v1209
        %v1220 = vpop.permute.xlu0 %1219
        %1223 = vset.pattern.permute.xlu0 4
        %1224 = vperm.xlu0 %1223, %v1210
        %v1225 = vpop.permute.xlu0 %1224
        %1228 = vset.pattern.permute.xlu0 4
        %1229 = vperm.xlu0 %1228, %v1211
        %v1230 = vpop.permute.xlu0 %1229
        %v1232 = vrcp.pop %v1215
        %v1233 = vmul.f32 %v1204, %v1232
        %v1234 = vrcp.pop %v1220
        %v1235 = vmul.f32 %v1205, %v1234
        %v1236 = vrcp.pop %v1225
        %v1237 = vmul.f32 %v1206, %v1236
        %v1238 = vrcp.pop %v1230
        %v1239 = vmul.f32 %v1207, %v1238
        %v1240 = vadd.f32 %v1197, %v1233
        %v1241 = vadd.f32 %v1199, %v1235
        %v1242 = vadd.f32 %v1201, %v1237
        %v1243 = vadd.f32 %v1203, %v1239
        %v1244 = vmul.f32 %v1240, -0.5
        %v1245 = vmul.f32 %v1241, -0.5
        %v1246 = vmul.f32 %v1242, -0.5
        %v1247 = vmul.f32 %v1243, -0.5
        %v1248 = vmul.f32 %v1244, 1.442695
        %v1249 = vpow.pop %v1248
        %v1250 = vmul.f32 %v1245, 1.442695
        %v1251 = vpow.pop %v1250
        %v1252 = vmul.f32 %v1246, 1.442695
        %v1253 = vpow.pop %v1252
        %v1254 = vmul.f32 %v1247, 1.442695
        %v1255 = vpow.pop %v1254
        %v1256 = vmul.f32 %v169, 6.2831855
        %v1257 = vmul.f32 %v170, 6.2831855
        %v1258 = vmul.f32 %v171, 6.2831855
        %v1259 = vmul.f32 %v172, 6.2831855
        %v1260 = vmul.f32 %v1256, %v250
        %v1261 = vmul.f32 %v1257, %v252
        %v1262 = vmul.f32 %v1258, %v254
        %v1263 = vmul.f32 %v1259, %v256
        %1265 = vset.pattern.permute.xlu0 4
        %1266 = vperm.xlu0 %1265, %v1260
        %v1267 = vpop.permute.xlu0 %1266
        %1270 = vset.pattern.permute.xlu0 4
        %1271 = vperm.xlu0 %1270, %v1261
        %v1272 = vpop.permute.xlu0 %1271
        %1275 = vset.pattern.permute.xlu0 4
        %1276 = vperm.xlu0 %1275, %v1262
        %v1277 = vpop.permute.xlu0 %1276
        %1280 = vset.pattern.permute.xlu0 4
        %1281 = vperm.xlu0 %1280, %v1263
        %v1282 = vpop.permute.xlu0 %1281
        %v1284 = vrcp.pop %v1267
        %v1285 = vmul.f32 %v1249, %v1284
        %v1286 = vrcp.pop %v1272
        %v1287 = vmul.f32 %v1251, %v1286
        %v1288 = vrcp.pop %v1277
        %v1289 = vmul.f32 %v1253, %v1288
        %v1290 = vrcp.pop %v1282
        %v1291 = vmul.f32 %v1255, %v1290
        %v1292 = vrcp.pop %v169
        %v1293 = vmul.f32 6.2831855, %v1292
        %v1294 = vrcp.pop %v170
        %v1295 = vmul.f32 6.2831855, %v1294
        %v1296 = vrcp.pop %v171
        %v1297 = vmul.f32 6.2831855, %v1296
        %v1298 = vrcp.pop %v172
        %v1299 = vmul.f32 6.2831855, %v1298
        %1301 = vset.pattern.permute.xlu0 5
        %1302 = vperm.xlu0 %1301, %v1293
        %v1303 = vpop.permute.xlu0 %1302
        %1306 = vset.pattern.permute.xlu0 5
        %1307 = vperm.xlu0 %1306, %v1295
        %v1308 = vpop.permute.xlu0 %1307
        %1311 = vset.pattern.permute.xlu0 5
        %1312 = vperm.xlu0 %1311, %v1297
        %v1313 = vpop.permute.xlu0 %1312
        %1316 = vset.pattern.permute.xlu0 5
        %1317 = vperm.xlu0 %1316, %v1299
        %v1318 = vpop.permute.xlu0 %1317
        %v1320 = vmul.f32 %v1303, %v1147
        %v1321 = vmul.f32 %v1308, %v1148
        %v1322 = vmul.f32 %v1313, %v1149
        %v1323 = vmul.f32 %v1318, %v1150
        %1325 = vset.pattern.permute.xlu0 0
        %1326 = vperm.xlu0 %1325, %v229
        %v1327 = vpop.permute.xlu0 %1326
        %1330 = vset.pattern.permute.xlu0 0
        %1331 = vperm.xlu0 %1330, %v230
        %v1332 = vpop.permute.xlu0 %1331
        %1335 = vset.pattern.permute.xlu0 0
        %1336 = vperm.xlu0 %1335, %v231
        %v1337 = vpop.permute.xlu0 %1336
        %1340 = vset.pattern.permute.xlu0 0
        %1341 = vperm.xlu0 %1340, %v232
        %v1342 = vpop.permute.xlu0 %1341
        %v1344 = vadd.f32 %v1320, %v1327
        %v1345 = vadd.f32 %v1321, %v1332
        %v1346 = vadd.f32 %v1322, %v1337
        %v1347 = vadd.f32 %v1323, %v1342
        %v1348 = vand.u32 2147483647, %v1344
        %vm1349 = vcmp.le.f32.partialorder %v1348, 0.7853982
        %vm1350 = vcmp.lt.s32.totalorder %v1344, 0
        %v1351 = vand.u32 %v1344, 2139095040
        %v1352 = vshrl.u32 %v1351, 23
        %v1353 = vsub.s32 %v1352, 127
        %v1354 = vand.u32 2147483647, %v1344
        %v1355 = vand.u32 %v1354, 8388607
        %v1356 = vor.u32 %v1355, 8388608
        %v1357 = vsub.s32 0, %v1356
        %v1358 = vadd.s32 %v1353, 1
        %vm1359 = vcmp.gt.s32.totalorder %v1358, 0
        %v1360 = vsel %vm1359, %v1358, 0
        %v1361 = vshrl.u32 %v1360, 5
        %v1362 = vand.u32 %v1360, 31
        %v1363 = vsub.s32 32, %v1362
        %v1364 = vshrl.u32 683565275, %v1363
        %v1365 = vshll.u32 683565275, %v1362
        %v1366 = vshrl.u32 2475754826, %v1363
        %v1367 = vor.u32 %v1365, %v1366
        %v1368 = vshll.u32 2475754826, %v1362
        %v1369 = vshrl.u32 2131351028, %v1363
        %v1370 = vor.u32 %v1368, %v1369
        %v1371 = vshll.u32 2131351028, %v1362
        %v1372 = vshrl.u32 2102212464, %v1363
        %v1373 = vor.u32 %v1371, %v1372
        %v1374 = vshll.u32 2102212464, %v1362
        %v1375 = vshrl.u32 920167782, %v1363
        %v1376 = vor.u32 %v1374, %v1375
        %v1377 = vshll.u32 920167782, %v1362
        %v1378 = vshrl.u32 1326507024, %v1363
        %v1379 = vor.u32 %v1377, %v1378
        %vm1380 = vcmp.lt.s32.totalorder %v1361, 1
        %vm1381 = vcmp.lt.s32.totalorder %v1361, 2
        %vm1382 = vcmp.lt.s32.totalorder %v1361, 3
        %vm1383 = vcmp.lt.s32.totalorder %v1361, 4
        %v1384 = vsel %vm1380, %v1364, %v1367
        %v1385 = vsel %vm1383, %v1373, 2102212464
        %v1386 = vsel %vm1382, %v1370, %v1385
        %v1387 = vsel %vm1381, %v1384, %v1386
        %v1388 = vsel %vm1380, %v1367, %v1370
        %v1389 = vsel %vm1383, %v1376, 920167782
        %v1390 = vsel %vm1382, %v1373, %v1389
        %v1391 = vsel %vm1381, %v1388, %v1390
        %v1392 = vsel %vm1380, %v1370, %v1373
        %v1393 = vsel %vm1383, %v1379, 1326507024
        %v1394 = vsel %vm1382, %v1376, %v1393
        %v1395 = vsel %vm1381, %v1392, %v1394
        %v1396 = vshll.u32 %v1356, 8
        %v1397 = vmul.u32.u64.compose %v1396, %v1395
        %v1398 = vextract.low.u32 %v1397
        %v1399 = vextract.high.u32 %v1397
        %v1400 = vmul.u32.u64.compose %v1396, %v1391
        %v1401 = vextract.low.u32 %v1400
        %v1402 = vextract.high.u32 %v1400
        %v1403 = vmul.u32 %v1396, %v1387
        %v1404 = vadd.s32 %v1399, %v1401
        %vm1405 = vc.u32 %v1399, %v1401
        %v1406 = vadd.s32 %v1402, 1
        %v1407 = vsel %vm1405, %v1406, %v1402
        %v1408 = vadd.s32 %v1403, %v1407
        %v1409 = vadd.s32 %v1408, 536870912
        %v1410 = vshrl.u32 %v1409, 30
        %v1411 = vshll.u32 %v1410, 30
        %v1412 = vsub.s32 %v1408, %v1411
        %vm1413 = vcmp.lt.s32.totalorder %v1412, 0
        %v1414 = vsub.s32 0, %v1412
        %v1415 = vsel %vm1413, %v1414, %v1412
        %v1416 = vclz %v1415
        %v1417 = vsub.s32 %v1416, 2
        %vm1418 = vcmp.gt.s32.totalorder 0, %v1417
        %v1419 = vsel %vm1418, 0, %v1417
        %v1420 = vsub.s32 32, %v1419
        %v1421 = vshll.u32 %v1412, %v1419
        %v1422 = vshrl.u32 %v1404, %v1420
        %v1423 = vor.u32 %v1421, %v1422
        %v1424 = vsub.s32 4294967266, %v1419
        %v1425 = vadd.s32 %v1424, 127
        %v1426 = vshll.u32 %v1425, 23
        %v1427 = vor.u32 4788187, %v1426
        %v1428 = vand.u32 2147483647, %v1427
        %v1430 = vcvt.s32.f32 %v1423
        %v1431 = vmul.f32 %v1430, %v1428
        %v1432 = vxor.u32 %v1431, 2147483648
        %v1433 = vsel %vm1350, %v1432, %v1431
        %v1434 = vsub.s32 4, %v1410
        %v1435 = vsel %vm1350, %v1434, %v1410
        %v1436 = vsel %vm1349, %v1344, %v1433
        %v1437 = vsel %vm1349, 0, %v1435
        %v1438 = vcosq.f32.pop %v1436
        %v1439 = vsinq.f32.pop %v1436
        %vm1440 = vweird.f32 %v1344
        %v1441 = vand.u32 %v1437, 3
        %vm1442 = vcmp.lt.s32.totalorder %v1441, 2
        %vm1443 = vcmp.eq.s32.totalorder %v1441, 0
        %v1444 = vxor.u32 %v1439, 2147483648
        %v1445 = vsel %vm1443, %v1438, %v1444
        %vm1446 = vcmp.eq.s32.totalorder %v1441, 2
        %v1447 = vxor.u32 %v1438, 2147483648
        %v1448 = vsel %vm1446, %v1447, %v1439
        %v1449 = vsel %vm1442, %v1445, %v1448
        %v1450 = vsel %vm1440, nan, %v1449
        %v1451 = vand.u32 2147483647, %v1345
        %vm1452 = vcmp.le.f32.partialorder %v1451, 0.7853982
        %vm1453 = vcmp.lt.s32.totalorder %v1345, 0
        %v1454 = vand.u32 %v1345, 2139095040
        %v1455 = vshrl.u32 %v1454, 23
        %v1456 = vsub.s32 %v1455, 127
        %v1457 = vand.u32 2147483647, %v1345
        %v1458 = vand.u32 %v1457, 8388607
        %v1459 = vor.u32 %v1458, 8388608
        %v1460 = vsub.s32 0, %v1459
        %v1461 = vadd.s32 %v1456, 1
        %vm1462 = vcmp.gt.s32.totalorder %v1461, 0
        %v1463 = vsel %vm1462, %v1461, 0
        %v1464 = vshrl.u32 %v1463, 5
        %v1465 = vand.u32 %v1463, 31
        %v1466 = vsub.s32 32, %v1465
        %v1467 = vshrl.u32 683565275, %v1466
        %v1468 = vshll.u32 683565275, %v1465
        %v1469 = vshrl.u32 2475754826, %v1466
        %v1470 = vor.u32 %v1468, %v1469
        %v1471 = vshll.u32 2475754826, %v1465
        %v1472 = vshrl.u32 2131351028, %v1466
        %v1473 = vor.u32 %v1471, %v1472
        %v1474 = vshll.u32 2131351028, %v1465
        %v1475 = vshrl.u32 2102212464, %v1466
        %v1476 = vor.u32 %v1474, %v1475
        %v1477 = vshll.u32 2102212464, %v1465
        %v1478 = vshrl.u32 920167782, %v1466
        %v1479 = vor.u32 %v1477, %v1478
        %v1480 = vshll.u32 920167782, %v1465
        %v1481 = vshrl.u32 1326507024, %v1466
        %v1482 = vor.u32 %v1480, %v1481
        %vm1483 = vcmp.lt.s32.totalorder %v1464, 1
        %vm1484 = vcmp.lt.s32.totalorder %v1464, 2
        %vm1485 = vcmp.lt.s32.totalorder %v1464, 3
        %vm1486 = vcmp.lt.s32.totalorder %v1464, 4
        %v1487 = vsel %vm1483, %v1467, %v1470
        %v1488 = vsel %vm1486, %v1476, 2102212464
        %v1489 = vsel %vm1485, %v1473, %v1488
        %v1490 = vsel %vm1484, %v1487, %v1489
        %v1491 = vsel %vm1483, %v1470, %v1473
        %v1492 = vsel %vm1486, %v1479, 920167782
        %v1493 = vsel %vm1485, %v1476, %v1492
        %v1494 = vsel %vm1484, %v1491, %v1493
        %v1495 = vsel %vm1483, %v1473, %v1476
        %v1496 = vsel %vm1486, %v1482, 1326507024
        %v1497 = vsel %vm1485, %v1479, %v1496
        %v1498 = vsel %vm1484, %v1495, %v1497
        %v1499 = vshll.u32 %v1459, 8
        %v1500 = vmul.u32.u64.compose %v1499, %v1498
        %v1501 = vextract.low.u32 %v1500
        %v1502 = vextract.high.u32 %v1500
        %v1503 = vmul.u32.u64.compose %v1499, %v1494
        %v1504 = vextract.low.u32 %v1503
        %v1505 = vextract.high.u32 %v1503
        %v1506 = vmul.u32 %v1499, %v1490
        %v1507 = vadd.s32 %v1502, %v1504
        %vm1508 = vc.u32 %v1502, %v1504
        %v1509 = vadd.s32 %v1505, 1
        %v1510 = vsel %vm1508, %v1509, %v1505
        %v1511 = vadd.s32 %v1506, %v1510
        %v1512 = vadd.s32 %v1511, 536870912
        %v1513 = vshrl.u32 %v1512, 30
        %v1514 = vshll.u32 %v1513, 30
        %v1515 = vsub.s32 %v1511, %v1514
        %vm1516 = vcmp.lt.s32.totalorder %v1515, 0
        %v1517 = vsub.s32 0, %v1515
        %v1518 = vsel %vm1516, %v1517, %v1515
        %v1519 = vclz %v1518
        %v1520 = vsub.s32 %v1519, 2
        %vm1521 = vcmp.gt.s32.totalorder 0, %v1520
        %v1522 = vsel %vm1521, 0, %v1520
        %v1523 = vsub.s32 32, %v1522
        %v1524 = vshll.u32 %v1515, %v1522
        %v1525 = vshrl.u32 %v1507, %v1523
        %v1526 = vor.u32 %v1524, %v1525
        %v1527 = vsub.s32 4294967266, %v1522
        %v1528 = vadd.s32 %v1527, 127
        %v1529 = vshll.u32 %v1528, 23
        %v1530 = vor.u32 4788187, %v1529
        %v1531 = vand.u32 2147483647, %v1530
        %v1533 = vcvt.s32.f32 %v1526
        %v1534 = vmul.f32 %v1533, %v1531
        %v1535 = vxor.u32 %v1534, 2147483648
        %v1536 = vsel %vm1453, %v1535, %v1534
        %v1537 = vsub.s32 4, %v1513
        %v1538 = vsel %vm1453, %v1537, %v1513
        %v1539 = vsel %vm1452, %v1345, %v1536
        %v1540 = vsel %vm1452, 0, %v1538
        %v1541 = vcosq.f32.pop %v1539
        %v1542 = vsinq.f32.pop %v1539
        %vm1543 = vweird.f32 %v1345
        %v1544 = vand.u32 %v1540, 3
        %vm1545 = vcmp.lt.s32.totalorder %v1544, 2
        %vm1546 = vcmp.eq.s32.totalorder %v1544, 0
        %v1547 = vxor.u32 %v1542, 2147483648
        %v1548 = vsel %vm1546, %v1541, %v1547
        %vm1549 = vcmp.eq.s32.totalorder %v1544, 2
        %v1550 = vxor.u32 %v1541, 2147483648
        %v1551 = vsel %vm1549, %v1550, %v1542
        %v1552 = vsel %vm1545, %v1548, %v1551
        %v1553 = vsel %vm1543, nan, %v1552
        %v1554 = vand.u32 2147483647, %v1346
        %vm1555 = vcmp.le.f32.partialorder %v1554, 0.7853982
        %vm1556 = vcmp.lt.s32.totalorder %v1346, 0
        %v1557 = vand.u32 %v1346, 2139095040
        %v1558 = vshrl.u32 %v1557, 23
        %v1559 = vsub.s32 %v1558, 127
        %v1560 = vand.u32 2147483647, %v1346
        %v1561 = vand.u32 %v1560, 8388607
        %v1562 = vor.u32 %v1561, 8388608
        %v1563 = vsub.s32 0, %v1562
        %v1564 = vadd.s32 %v1559, 1
        %vm1565 = vcmp.gt.s32.totalorder %v1564, 0
        %v1566 = vsel %vm1565, %v1564, 0
        %v1567 = vshrl.u32 %v1566, 5
        %v1568 = vand.u32 %v1566, 31
        %v1569 = vsub.s32 32, %v1568
        %v1570 = vshrl.u32 683565275, %v1569
        %v1571 = vshll.u32 683565275, %v1568
        %v1572 = vshrl.u32 2475754826, %v1569
        %v1573 = vor.u32 %v1571, %v1572
        %v1574 = vshll.u32 2475754826, %v1568
        %v1575 = vshrl.u32 2131351028, %v1569
        %v1576 = vor.u32 %v1574, %v1575
        %v1577 = vshll.u32 2131351028, %v1568
        %v1578 = vshrl.u32 2102212464, %v1569
        %v1579 = vor.u32 %v1577, %v1578
        %v1580 = vshll.u32 2102212464, %v1568
        %v1581 = vshrl.u32 920167782, %v1569
        %v1582 = vor.u32 %v1580, %v1581
        %v1583 = vshll.u32 920167782, %v1568
        %v1584 = vshrl.u32 1326507024, %v1569
        %v1585 = vor.u32 %v1583, %v1584
        %vm1586 = vcmp.lt.s32.totalorder %v1567, 1
        %vm1587 = vcmp.lt.s32.totalorder %v1567, 2
        %vm1588 = vcmp.lt.s32.totalorder %v1567, 3
        %vm1589 = vcmp.lt.s32.totalorder %v1567, 4
        %v1590 = vsel %vm1586, %v1570, %v1573
        %v1591 = vsel %vm1589, %v1579, 2102212464
        %v1592 = vsel %vm1588, %v1576, %v1591
        %v1593 = vsel %vm1587, %v1590, %v1592
        %v1594 = vsel %vm1586, %v1573, %v1576
        %v1595 = vsel %vm1589, %v1582, 920167782
        %v1596 = vsel %vm1588, %v1579, %v1595
        %v1597 = vsel %vm1587, %v1594, %v1596
        %v1598 = vsel %vm1586, %v1576, %v1579
        %v1599 = vsel %vm1589, %v1585, 1326507024
        %v1600 = vsel %vm1588, %v1582, %v1599
        %v1601 = vsel %vm1587, %v1598, %v1600
        %v1602 = vshll.u32 %v1562, 8
        %v1603 = vmul.u32.u64.compose %v1602, %v1601
        %v1604 = vextract.low.u32 %v1603
        %v1605 = vextract.high.u32 %v1603
        %v1606 = vmul.u32.u64.compose %v1602, %v1597
        %v1607 = vextract.low.u32 %v1606
        %v1608 = vextract.high.u32 %v1606
        %v1609 = vmul.u32 %v1602, %v1593
        %v1610 = vadd.s32 %v1605, %v1607
        %vm1611 = vc.u32 %v1605, %v1607
        %v1612 = vadd.s32 %v1608, 1
        %v1613 = vsel %vm1611, %v1612, %v1608
        %v1614 = vadd.s32 %v1609, %v1613
        %v1615 = vadd.s32 %v1614, 536870912
        %v1616 = vshrl.u32 %v1615, 30
        %v1617 = vshll.u32 %v1616, 30
        %v1618 = vsub.s32 %v1614, %v1617
        %vm1619 = vcmp.lt.s32.totalorder %v1618, 0
        %v1620 = vsub.s32 0, %v1618
        %v1621 = vsel %vm1619, %v1620, %v1618
        %v1622 = vclz %v1621
        %v1623 = vsub.s32 %v1622, 2
        %vm1624 = vcmp.gt.s32.totalorder 0, %v1623
        %v1625 = vsel %vm1624, 0, %v1623
        %v1626 = vsub.s32 32, %v1625
        %v1627 = vshll.u32 %v1618, %v1625
        %v1628 = vshrl.u32 %v1610, %v1626
        %v1629 = vor.u32 %v1627, %v1628
        %v1630 = vsub.s32 4294967266, %v1625
        %v1631 = vadd.s32 %v1630, 127
        %v1632 = vshll.u32 %v1631, 23
        %v1633 = vor.u32 4788187, %v1632
        %v1634 = vand.u32 2147483647, %v1633
        %v1636 = vcvt.s32.f32 %v1629
        %v1637 = vmul.f32 %v1636, %v1634
        %v1638 = vxor.u32 %v1637, 2147483648
        %v1639 = vsel %vm1556, %v1638, %v1637
        %v1640 = vsub.s32 4, %v1616
        %v1641 = vsel %vm1556, %v1640, %v1616
        %v1642 = vsel %vm1555, %v1346, %v1639
        %v1643 = vsel %vm1555, 0, %v1641
        %v1644 = vcosq.f32.pop %v1642
        %v1645 = vsinq.f32.pop %v1642
        %vm1646 = vweird.f32 %v1346
        %v1647 = vand.u32 %v1643, 3
        %vm1648 = vcmp.lt.s32.totalorder %v1647, 2
        %vm1649 = vcmp.eq.s32.totalorder %v1647, 0
        %v1650 = vxor.u32 %v1645, 2147483648
        %v1651 = vsel %vm1649, %v1644, %v1650
        %vm1652 = vcmp.eq.s32.totalorder %v1647, 2
        %v1653 = vxor.u32 %v1644, 2147483648
        %v1654 = vsel %vm1652, %v1653, %v1645
        %v1655 = vsel %vm1648, %v1651, %v1654
        %v1656 = vsel %vm1646, nan, %v1655
        %v1657 = vand.u32 2147483647, %v1347
        %vm1658 = vcmp.le.f32.partialorder %v1657, 0.7853982
        %vm1659 = vcmp.lt.s32.totalorder %v1347, 0
        %v1660 = vand.u32 %v1347, 2139095040
        %v1661 = vshrl.u32 %v1660, 23
        %v1662 = vsub.s32 %v1661, 127
        %v1663 = vand.u32 2147483647, %v1347
        %v1664 = vand.u32 %v1663, 8388607
        %v1665 = vor.u32 %v1664, 8388608
        %v1666 = vsub.s32 0, %v1665
        %v1667 = vadd.s32 %v1662, 1
        %vm1668 = vcmp.gt.s32.totalorder %v1667, 0
        %v1669 = vsel %vm1668, %v1667, 0
        %v1670 = vshrl.u32 %v1669, 5
        %v1671 = vand.u32 %v1669, 31
        %v1672 = vsub.s32 32, %v1671
        %v1673 = vshrl.u32 683565275, %v1672
        %v1674 = vshll.u32 683565275, %v1671
        %v1675 = vshrl.u32 2475754826, %v1672
        %v1676 = vor.u32 %v1674, %v1675
        %v1677 = vshll.u32 2475754826, %v1671
        %v1678 = vshrl.u32 2131351028, %v1672
        %v1679 = vor.u32 %v1677, %v1678
        %v1680 = vshll.u32 2131351028, %v1671
        %v1681 = vshrl.u32 2102212464, %v1672
        %v1682 = vor.u32 %v1680, %v1681
        %v1683 = vshll.u32 2102212464, %v1671
        %v1684 = vshrl.u32 920167782, %v1672
        %v1685 = vor.u32 %v1683, %v1684
        %v1686 = vshll.u32 920167782, %v1671
        %v1687 = vshrl.u32 1326507024, %v1672
        %v1688 = vor.u32 %v1686, %v1687
        %vm1689 = vcmp.lt.s32.totalorder %v1670, 1
        %vm1690 = vcmp.lt.s32.totalorder %v1670, 2
        %vm1691 = vcmp.lt.s32.totalorder %v1670, 3
        %vm1692 = vcmp.lt.s32.totalorder %v1670, 4
        %v1693 = vsel %vm1689, %v1673, %v1676
        %v1694 = vsel %vm1692, %v1682, 2102212464
        %v1695 = vsel %vm1691, %v1679, %v1694
        %v1696 = vsel %vm1690, %v1693, %v1695
        %v1697 = vsel %vm1689, %v1676, %v1679
        %v1698 = vsel %vm1692, %v1685, 920167782
        %v1699 = vsel %vm1691, %v1682, %v1698
        %v1700 = vsel %vm1690, %v1697, %v1699
        %v1701 = vsel %vm1689, %v1679, %v1682
        %v1702 = vsel %vm1692, %v1688, 1326507024
        %v1703 = vsel %vm1691, %v1685, %v1702
        %v1704 = vsel %vm1690, %v1701, %v1703
        %v1705 = vshll.u32 %v1665, 8
        %v1706 = vmul.u32.u64.compose %v1705, %v1704
        %v1707 = vextract.low.u32 %v1706
        %v1708 = vextract.high.u32 %v1706
        %v1709 = vmul.u32.u64.compose %v1705, %v1700
        %v1710 = vextract.low.u32 %v1709
        %v1711 = vextract.high.u32 %v1709
        %v1712 = vmul.u32 %v1705, %v1696
        %v1713 = vadd.s32 %v1708, %v1710
        %vm1714 = vc.u32 %v1708, %v1710
        %v1715 = vadd.s32 %v1711, 1
        %v1716 = vsel %vm1714, %v1715, %v1711
        %v1717 = vadd.s32 %v1712, %v1716
        %v1718 = vadd.s32 %v1717, 536870912
        %v1719 = vshrl.u32 %v1718, 30
        %v1720 = vshll.u32 %v1719, 30
        %v1721 = vsub.s32 %v1717, %v1720
        %vm1722 = vcmp.lt.s32.totalorder %v1721, 0
        %v1723 = vsub.s32 0, %v1721
        %v1724 = vsel %vm1722, %v1723, %v1721
        %v1725 = vclz %v1724
        %v1726 = vsub.s32 %v1725, 2
        %vm1727 = vcmp.gt.s32.totalorder 0, %v1726
        %v1728 = vsel %vm1727, 0, %v1726
        %v1729 = vsub.s32 32, %v1728
        %v1730 = vshll.u32 %v1721, %v1728
        %v1731 = vshrl.u32 %v1713, %v1729
        %v1732 = vor.u32 %v1730, %v1731
        %v1733 = vsub.s32 4294967266, %v1728
        %v1734 = vadd.s32 %v1733, 127
        %v1735 = vshll.u32 %v1734, 23
        %v1736 = vor.u32 4788187, %v1735
        %v1737 = vand.u32 2147483647, %v1736
        %v1739 = vcvt.s32.f32 %v1732
        %v1740 = vmul.f32 %v1739, %v1737
        %v1741 = vxor.u32 %v1740, 2147483648
        %v1742 = vsel %vm1659, %v1741, %v1740
        %v1743 = vsub.s32 4, %v1719
        %v1744 = vsel %vm1659, %v1743, %v1719
        %v1745 = vsel %vm1658, %v1347, %v1742
        %v1746 = vsel %vm1658, 0, %v1744
        %v1747 = vcosq.f32.pop %v1745
        %v1748 = vsinq.f32.pop %v1745
        %vm1749 = vweird.f32 %v1347
        %v1750 = vand.u32 %v1746, 3
        %vm1751 = vcmp.lt.s32.totalorder %v1750, 2
        %vm1752 = vcmp.eq.s32.totalorder %v1750, 0
        %v1753 = vxor.u32 %v1748, 2147483648
        %v1754 = vsel %vm1752, %v1747, %v1753
        %vm1755 = vcmp.eq.s32.totalorder %v1750, 2
        %v1756 = vxor.u32 %v1747, 2147483648
        %v1757 = vsel %vm1755, %v1756, %v1748
        %v1758 = vsel %vm1751, %v1754, %v1757
        %v1759 = vsel %vm1749, nan, %v1758
        %v1760 = vmul.f32 %v1285, %v1450
        %v1761 = vmul.f32 %v1287, %v1553
        %v1762 = vmul.f32 %v1289, %v1656
        %v1763 = vmul.f32 %v1291, %v1759
        %1764 = vst [vmem:[#allocation2] sm:$0xff] 0.0
        %vm1765 = vcmask 551936
        %1766 = vst.msk [vmem:[#allocation2 + $0x8] sm:$0xf] %vm1765, 0.0
        %v1767 = vld [vmem:[%s168] sm:$0xf]
        %1769 = vrot.lane.b32.xlu0 %v1767, 19
        %v1770 = vpop.permute.xlu0 %1769
        %vm1772 = vcmask 281752
        %1773 = vst.msk [vmem:[#allocation2] sm:$0xf] %vm1772, %v1770
        %v1774 = vld [vmem:[%s168] sm:$0xf]
        %1776 = vrot.lane.b32.xlu0 %v1774, 21
        %v1777 = vpop.permute.xlu0 %1776
        %vm1779 = vcmask 429352
        %1780 = vst.msk [vmem:[#allocation2] sm:$0xf] %vm1779, %v1777
        %v1781 = vld [vmem:[%s168] sm:$0xf]
        %1783 = vrot.lane.b32.xlu0 %v1781, 23
        %v1784 = vpop.permute.xlu0 %1783
        %vm1786 = vcmask 576952
        %1787 = vst.msk [vmem:[#allocation2] sm:$0xf] %vm1786, %v1784
        %v1788 = vld [vmem:[%s168] sm:$0xf]
        %1790 = vrot.lane.b32.xlu0 %v1788, 25
        %v1791 = vpop.permute.xlu0 %1790
        %vm1793 = vcmask 724552
        %1794 = vst.msk [vmem:[#allocation2] sm:$0xf] %vm1793, %v1791
        %v1795 = vld [vmem:[%s168] sm:$0xf]
        %1797 = vrot.lane.b32.xlu0 %v1795, 27
        %v1798 = vpop.permute.xlu0 %1797
        %vm1800 = vcmask 872152
        %1801 = vst.msk [vmem:[#allocation2] sm:$0xf] %vm1800, %v1798
        %v1802 = vld [vmem:[%s168] sm:$0xf]
        %1804 = vrot.lane.b32.xlu0 %v1802, 29
        %v1805 = vpop.permute.xlu0 %1804
        %vm1807 = vcmask 1019752
        %1808 = vst.msk [vmem:[#allocation2] sm:$0xf] %vm1807, %v1805
        %v1809 = vld [vmem:[%s168] sm:$0xf]
        %1811 = vrot.lane.b32.xlu0 %v1809, 31
        %v1812 = vpop.permute.xlu0 %1811
        %v1813 = vrot.slane %v1812, 4
        %vm1814 = vcmask 252928
        %v1815 = vsel %vm1814, %v1813, %v1812
        %vm1817 = vcmask 1044472
        %vm1818 = vcmask 121860
        %vm1819 = vmor %vm1818, %vm1817
        %1820 = vst.msk [vmem:[#allocation2] sm:$0xff] %vm1819, %v1815
        %v1821 = vld [vmem:[%s168] sm:$0xf]
        %1823 = vrot.lane.b32.xlu0 %v1821, 33
        %v1824 = vpop.permute.xlu0 %1823
        %vm1826 = vcmask 265352
        %1827 = vst.msk [vmem:[#allocation2 + $0x4] sm:$0xf] %vm1826, %v1824
        %v1828 = vld [vmem:[%s168 + $0x4] sm:$0xf]
        %1830 = vrot.lane.b32.xlu0 %v1828, 35
        %v1831 = vpop.permute.xlu0 %1830
        %vm1833 = vcmask 412952
        %1834 = vst.msk [vmem:[#allocation2 + $0x4] sm:$0xf] %vm1833, %v1831
        %v1835 = vld [vmem:[%s168 + $0x4] sm:$0xf]
        %1837 = vrot.lane.b32.xlu0 %v1835, 37
        %v1838 = vpop.permute.xlu0 %1837
        %vm1840 = vcmask 560552
        %1841 = vst.msk [vmem:[#allocation2 + $0x4] sm:$0xf] %vm1840, %v1838
        %v1842 = vld [vmem:[%s168 + $0x4] sm:$0xf]
        %1844 = vrot.lane.b32.xlu0 %v1842, 39
        %v1845 = vpop.permute.xlu0 %1844
        %vm1847 = vcmask 708152
        %1848 = vst.msk [vmem:[#allocation2 + $0x4] sm:$0xf] %vm1847, %v1845
        %v1849 = vld [vmem:[%s168 + $0x4] sm:$0xf]
        %1851 = vrot.lane.b32.xlu0 %v1849, 41
        %v1852 = vpop.permute.xlu0 %1851
        %vm1854 = vcmask 855752
        %1855 = vst.msk [vmem:[#allocation2 + $0x4] sm:$0xf] %vm1854, %v1852
        %v1856 = vld [vmem:[%s168 + $0x4] sm:$0xf]
        %1858 = vrot.lane.b32.xlu0 %v1856, 43
        %v1859 = vpop.permute.xlu0 %1858
        %vm1861 = vcmask 1003352
        %1862 = vst.msk [vmem:[#allocation2 + $0x4] sm:$0xf] %vm1861, %v1859
        %v1863 = vld [vmem:[%s168 + $0x4] sm:$0xf]
        %1865 = vrot.lane.b32.xlu0 %v1863, 45
        %v1866 = vpop.permute.xlu0 %1865
        %v1867 = vrot.slane %v1866, 4
        %vm1868 = vcmask 367616
        %v1869 = vsel %vm1868, %v1867, %v1866
        %vm1871 = vcmask 1044456
        %vm1872 = vcmask 105476
        %vm1873 = vmor %vm1872, %vm1871
        %1874 = vst.msk [vmem:[#allocation2 + $0x4] sm:$0xff] %vm1873, %v1869
        %v1875 = vld [vmem:[%s168 + $0x4] sm:$0xf]
        %1877 = vrot.lane.b32.xlu0 %v1875, 47
        %v1878 = vpop.permute.xlu0 %1877
        %vm1880 = vcmask 248952
        %1881 = vst.msk [vmem:[#allocation2 + $0x8] sm:$0xf] %vm1880, %v1878
        %v1882 = vld [vmem:[%s168 + $0x4] sm:$0xf]
        %1884 = vrot.lane.b32.xlu0 %v1882, 49
        %v1885 = vpop.permute.xlu0 %1884
        %vm1887 = vcmask 396552
        %1888 = vst.msk [vmem:[#allocation2 + $0x8] sm:$0xf] %vm1887, %v1885
        %v1889 = vld [vmem:[#allocation2] ss:$4 sm:$0x7]
        %1891 = vset.pattern.permute.xlu0 0
        %1892 = vperm.xlu0 %1891, %v1760
        %v1893 = vpop.permute.xlu0 %1892
        %v1896 = vlaneseq
        %v1897 = vshrl.u32 %v1896, 7
        %v1898 = vsub.s32 0, %v1897
        %v1899 = vrot.slane %v1889, %v1898
        %v1900 = vlaneseq
        %v1901 = vshrl.u32 %v1900, 7
        %v1902 = vsub.s32 1, %v1901
        %v1903 = vrot.slane %v1889, %v1902
        %v1904 = vlaneseq
        %v1905 = vshrl.u32 %v1904, 7
        %v1906 = vsub.s32 2, %v1905
        %v1907 = vrot.slane %v1889, %v1906
        %v1911 = vmul.f32 %v1893, %v1899
        %v1912 = vmul.f32 %v1893, %v1903
        %v1913 = vmul.f32 %v1893, %v1907
        %v1914 = vadd.f32 %v1911, 0.0
        %v1915 = vadd.f32 %v1912, 0.0
        %v1916 = vadd.f32 %v1913, 0.0
        %1917 = vset.pattern.permute.xlu0 1
        %1918 = vperm.xlu0 %1917, %v1760
        %v1919 = vpop.permute.xlu0 %1918
        %v1921 = vmul.f32 %v1919, %v1899
        %v1922 = vmul.f32 %v1919, %v1903
        %v1923 = vmul.f32 %v1919, %v1907
        %1927 = vrot.lane.b32.xlu0 %v1921, 127
        %v1928 = vpop.permute.xlu0 %1927
        %1929 = vrot.lane.b32.xlu0 %v1922, 127
        %v1930 = vpop.permute.xlu0 %1929
        %1931 = vrot.lane.b32.xlu0 %v1923, 127
        %v1932 = vpop.permute.xlu0 %1931
        %vm1933 = vcmask 1039360
        %v1934 = vsel %vm1933, %v1928, %v1930
        %v1935 = vsel %vm1933, %v1930, %v1932
        %v1939 = vadd.f32 %v1914, %v1934
        %v1940 = vadd.f32 %v1915, %v1935
        %v1941 = vadd.f32 %v1916, %v1932
        %1942 = vset.pattern.permute.xlu0 2
        %1943 = vperm.xlu0 %1942, %v1760
        %v1944 = vpop.permute.xlu0 %1943
        %v1946 = vmul.f32 %v1944, %v1899
        %v1947 = vmul.f32 %v1944, %v1903
        %v1948 = vmul.f32 %v1944, %v1907
        %1952 = vrot.lane.b32.xlu0 %v1946, 126
        %v1953 = vpop.permute.xlu0 %1952
        %1954 = vrot.lane.b32.xlu0 %v1947, 126
        %v1955 = vpop.permute.xlu0 %1954
        %1956 = vrot.lane.b32.xlu0 %v1948, 126
        %v1957 = vpop.permute.xlu0 %1956
        %vm1958 = vcmask 1031168
        %v1959 = vsel %vm1958, %v1953, %v1955
        %v1960 = vsel %vm1958, %v1955, %v1957
        %v1964 = vadd.f32 %v1939, %v1959
        %v1965 = vadd.f32 %v1940, %v1960
        %v1966 = vadd.f32 %v1941, %v1957
        %1967 = vset.pattern.permute.xlu0 3
        %1968 = vperm.xlu0 %1967, %v1760
        %v1969 = vpop.permute.xlu0 %1968
        %v1971 = vmul.f32 %v1969, %v1899
        %v1972 = vmul.f32 %v1969, %v1903
        %v1973 = vmul.f32 %v1969, %v1907
        %1977 = vrot.lane.b32.xlu0 %v1971, 110
        %v1978 = vpop.permute.xlu0 %1977
        %1979 = vrot.lane.b32.xlu0 %v1972, 110
        %v1980 = vpop.permute.xlu0 %1979
        %1981 = vrot.lane.b32.xlu0 %v1973, 110
        %v1982 = vpop.permute.xlu0 %1981
        %vm1983 = vcmask 900096
        %v1984 = vsel %vm1983, %v1978, %v1980
        %v1985 = vsel %vm1983, %v1980, %v1982
        %v1989 = vadd.f32 %v1964, %v1984
        %v1990 = vadd.f32 %v1965, %v1985
        %v1991 = vadd.f32 %v1966, %v1982
        %1992 = vset.pattern.permute.xlu0 4
        %1993 = vperm.xlu0 %1992, %v1760
        %v1994 = vpop.permute.xlu0 %1993
        %v1996 = vmul.f32 %v1994, %v1899
        %v1997 = vmul.f32 %v1994, %v1903
        %v1998 = vmul.f32 %v1994, %v1907
        %2002 = vrot.lane.b32.xlu0 %v1996, 109
        %v2003 = vpop.permute.xlu0 %2002
        %2004 = vrot.lane.b32.xlu0 %v1997, 109
        %v2005 = vpop.permute.xlu0 %2004
        %2006 = vrot.lane.b32.xlu0 %v1998, 109
        %v2007 = vpop.permute.xlu0 %2006
        %vm2008 = vcmask 891904
        %v2009 = vsel %vm2008, %v2003, %v2005
        %v2010 = vsel %vm2008, %v2005, %v2007
        %v2014 = vadd.f32 %v1989, %v2009
        %v2015 = vadd.f32 %v1990, %v2010
        %v2016 = vadd.f32 %v1991, %v2007
        %2017 = vset.pattern.permute.xlu0 5
        %2018 = vperm.xlu0 %2017, %v1760
        %v2019 = vpop.permute.xlu0 %2018
        %v2021 = vmul.f32 %v2019, %v1899
        %v2022 = vmul.f32 %v2019, %v1903
        %v2023 = vmul.f32 %v2019, %v1907
        %2027 = vrot.lane.b32.xlu0 %v2021, 108
        %v2028 = vpop.permute.xlu0 %2027
        %2029 = vrot.lane.b32.xlu0 %v2022, 108
        %v2030 = vpop.permute.xlu0 %2029
        %2031 = vrot.lane.b32.xlu0 %v2023, 108
        %v2032 = vpop.permute.xlu0 %2031
        %vm2033 = vcmask 883712
        %v2034 = vsel %vm2033, %v2028, %v2030
        %v2035 = vsel %vm2033, %v2030, %v2032
        %v2039 = vadd.f32 %v2014, %v2034
        %v2040 = vadd.f32 %v2015, %v2035
        %v2041 = vadd.f32 %v2016, %v2032
        %2042 = vset.pattern.permute.xlu0 6
        %2043 = vperm.xlu0 %2042, %v1760
        %v2044 = vpop.permute.xlu0 %2043
        %v2046 = vmul.f32 %v2044, %v1899
        %v2047 = vmul.f32 %v2044, %v1903
        %v2048 = vmul.f32 %v2044, %v1907
        %2052 = vrot.lane.b32.xlu0 %v2046, 92
        %v2053 = vpop.permute.xlu0 %2052
        %2054 = vrot.lane.b32.xlu0 %v2047, 92
        %v2055 = vpop.permute.xlu0 %2054
        %2056 = vrot.lane.b32.xlu0 %v2048, 92
        %v2057 = vpop.permute.xlu0 %2056
        %vm2058 = vcmask 752640
        %v2059 = vsel %vm2058, %v2053, %v2055
        %v2060 = vsel %vm2058, %v2055, %v2057
        %v2064 = vadd.f32 %v2039, %v2059
        %v2065 = vadd.f32 %v2040, %v2060
        %v2066 = vadd.f32 %v2041, %v2057
        %2067 = vset.pattern.permute.xlu0 7
        %2068 = vperm.xlu0 %2067, %v1760
        %v2069 = vpop.permute.xlu0 %2068
        %v2071 = vmul.f32 %v2069, %v1899
        %v2072 = vmul.f32 %v2069, %v1903
        %v2073 = vmul.f32 %v2069, %v1907
        %2077 = vrot.lane.b32.xlu0 %v2071, 91
        %v2078 = vpop.permute.xlu0 %2077
        %2079 = vrot.lane.b32.xlu0 %v2072, 91
        %v2080 = vpop.permute.xlu0 %2079
        %2081 = vrot.lane.b32.xlu0 %v2073, 91
        %v2082 = vpop.permute.xlu0 %2081
        %vm2083 = vcmask 744448
        %v2084 = vsel %vm2083, %v2078, %v2080
        %v2085 = vsel %vm2083, %v2080, %v2082
        %v2089 = vadd.f32 %v2064, %v2084
        %v2090 = vadd.f32 %v2065, %v2085
        %v2091 = vadd.f32 %v2066, %v2082
        %2092 = vset.pattern.permute.xlu0 8
        %2093 = vperm.xlu0 %2092, %v1760
        %v2094 = vpop.permute.xlu0 %2093
        %v2096 = vmul.f32 %v2094, %v1899
        %v2097 = vmul.f32 %v2094, %v1903
        %v2098 = vmul.f32 %v2094, %v1907
        %2102 = vrot.lane.b32.xlu0 %v2096, 90
        %v2103 = vpop.permute.xlu0 %2102
        %2104 = vrot.lane.b32.xlu0 %v2097, 90
        %v2105 = vpop.permute.xlu0 %2104
        %2106 = vrot.lane.b32.xlu0 %v2098, 90
        %v2107 = vpop.permute.xlu0 %2106
        %vm2108 = vcmask 736256
        %v2109 = vsel %vm2108, %v2103, %v2105
        %v2110 = vsel %vm2108, %v2105, %v2107
        %v2114 = vadd.f32 %v2089, %v2109
        %v2115 = vadd.f32 %v2090, %v2110
        %v2116 = vadd.f32 %v2091, %v2107
        %s2117 = scalar_lea.vmem [#allocation2], 1
        %v2118 = vld [vmem:[%s2117] ss:$4 sm:$0x7]
        %2120 = vset.pattern.permute.xlu0 0
        %2121 = vperm.xlu0 %2120, %v1761
        %v2122 = vpop.permute.xlu0 %2121
        %v2125 = vlaneseq
        %v2126 = vshrl.u32 %v2125, 7
        %v2127 = vsub.s32 0, %v2126
        %v2128 = vrot.slane %v2118, %v2127
        %v2129 = vlaneseq
        %v2130 = vshrl.u32 %v2129, 7
        %v2131 = vsub.s32 1, %v2130
        %v2132 = vrot.slane %v2118, %v2131
        %v2133 = vlaneseq
        %v2134 = vshrl.u32 %v2133, 7
        %v2135 = vsub.s32 2, %v2134
        %v2136 = vrot.slane %v2118, %v2135
        %v2140 = vmul.f32 %v2122, %v2128
        %v2141 = vmul.f32 %v2122, %v2132
        %v2142 = vmul.f32 %v2122, %v2136
        %v2143 = vadd.f32 %v2114, %v2140
        %v2144 = vadd.f32 %v2115, %v2141
        %v2145 = vadd.f32 %v2116, %v2142
        %2146 = vset.pattern.permute.xlu0 1
        %2147 = vperm.xlu0 %2146, %v1761
        %v2148 = vpop.permute.xlu0 %2147
        %v2150 = vmul.f32 %v2148, %v2128
        %v2151 = vmul.f32 %v2148, %v2132
        %v2152 = vmul.f32 %v2148, %v2136
        %2156 = vrot.lane.b32.xlu0 %v2150, 127
        %v2157 = vpop.permute.xlu0 %2156
        %2158 = vrot.lane.b32.xlu0 %v2151, 127
        %v2159 = vpop.permute.xlu0 %2158
        %2160 = vrot.lane.b32.xlu0 %v2152, 127
        %v2161 = vpop.permute.xlu0 %2160
        %v2162 = vsel %vm1933, %v2157, %v2159
        %v2163 = vsel %vm1933, %v2159, %v2161
        %v2167 = vadd.f32 %v2143, %v2162
        %v2168 = vadd.f32 %v2144, %v2163
        %v2169 = vadd.f32 %v2145, %v2161
        %2170 = vset.pattern.permute.xlu0 2
        %2171 = vperm.xlu0 %2170, %v1761
        %v2172 = vpop.permute.xlu0 %2171
        %v2174 = vmul.f32 %v2172, %v2128
        %v2175 = vmul.f32 %v2172, %v2132
        %v2176 = vmul.f32 %v2172, %v2136
        %2180 = vrot.lane.b32.xlu0 %v2174, 126
        %v2181 = vpop.permute.xlu0 %2180
        %2182 = vrot.lane.b32.xlu0 %v2175, 126
        %v2183 = vpop.permute.xlu0 %2182
        %2184 = vrot.lane.b32.xlu0 %v2176, 126
        %v2185 = vpop.permute.xlu0 %2184
        %v2186 = vsel %vm1958, %v2181, %v2183
        %v2187 = vsel %vm1958, %v2183, %v2185
        %v2191 = vadd.f32 %v2167, %v2186
        %v2192 = vadd.f32 %v2168, %v2187
        %v2193 = vadd.f32 %v2169, %v2185
        %2194 = vset.pattern.permute.xlu0 3
        %2195 = vperm.xlu0 %2194, %v1761
        %v2196 = vpop.permute.xlu0 %2195
        %v2198 = vmul.f32 %v2196, %v2128
        %v2199 = vmul.f32 %v2196, %v2132
        %v2200 = vmul.f32 %v2196, %v2136
        %2204 = vrot.lane.b32.xlu0 %v2198, 110
        %v2205 = vpop.permute.xlu0 %2204
        %2206 = vrot.lane.b32.xlu0 %v2199, 110
        %v2207 = vpop.permute.xlu0 %2206
        %2208 = vrot.lane.b32.xlu0 %v2200, 110
        %v2209 = vpop.permute.xlu0 %2208
        %v2210 = vsel %vm1983, %v2205, %v2207
        %v2211 = vsel %vm1983, %v2207, %v2209
        %v2215 = vadd.f32 %v2191, %v2210
        %v2216 = vadd.f32 %v2192, %v2211
        %v2217 = vadd.f32 %v2193, %v2209
        %2218 = vset.pattern.permute.xlu0 4
        %2219 = vperm.xlu0 %2218, %v1761
        %v2220 = vpop.permute.xlu0 %2219
        %v2222 = vmul.f32 %v2220, %v2128
        %v2223 = vmul.f32 %v2220, %v2132
        %v2224 = vmul.f32 %v2220, %v2136
        %2228 = vrot.lane.b32.xlu0 %v2222, 109
        %v2229 = vpop.permute.xlu0 %2228
        %2230 = vrot.lane.b32.xlu0 %v2223, 109
        %v2231 = vpop.permute.xlu0 %2230
        %2232 = vrot.lane.b32.xlu0 %v2224, 109
        %v2233 = vpop.permute.xlu0 %2232
        %v2234 = vsel %vm2008, %v2229, %v2231
        %v2235 = vsel %vm2008, %v2231, %v2233
        %v2239 = vadd.f32 %v2215, %v2234
        %v2240 = vadd.f32 %v2216, %v2235
        %v2241 = vadd.f32 %v2217, %v2233
        %2242 = vset.pattern.permute.xlu0 5
        %2243 = vperm.xlu0 %2242, %v1761
        %v2244 = vpop.permute.xlu0 %2243
        %v2246 = vmul.f32 %v2244, %v2128
        %v2247 = vmul.f32 %v2244, %v2132
        %v2248 = vmul.f32 %v2244, %v2136
        %2252 = vrot.lane.b32.xlu0 %v2246, 108
        %v2253 = vpop.permute.xlu0 %2252
        %2254 = vrot.lane.b32.xlu0 %v2247, 108
        %v2255 = vpop.permute.xlu0 %2254
        %2256 = vrot.lane.b32.xlu0 %v2248, 108
        %v2257 = vpop.permute.xlu0 %2256
        %v2258 = vsel %vm2033, %v2253, %v2255
        %v2259 = vsel %vm2033, %v2255, %v2257
        %v2263 = vadd.f32 %v2239, %v2258
        %v2264 = vadd.f32 %v2240, %v2259
        %v2265 = vadd.f32 %v2241, %v2257
        %2266 = vset.pattern.permute.xlu0 6
        %2267 = vperm.xlu0 %2266, %v1761
        %v2268 = vpop.permute.xlu0 %2267
        %v2270 = vmul.f32 %v2268, %v2128
        %v2271 = vmul.f32 %v2268, %v2132
        %v2272 = vmul.f32 %v2268, %v2136
        %2276 = vrot.lane.b32.xlu0 %v2270, 92
        %v2277 = vpop.permute.xlu0 %2276
        %2278 = vrot.lane.b32.xlu0 %v2271, 92
        %v2279 = vpop.permute.xlu0 %2278
        %2280 = vrot.lane.b32.xlu0 %v2272, 92
        %v2281 = vpop.permute.xlu0 %2280
        %v2282 = vsel %vm2058, %v2277, %v2279
        %v2283 = vsel %vm2058, %v2279, %v2281
        %v2287 = vadd.f32 %v2263, %v2282
        %v2288 = vadd.f32 %v2264, %v2283
        %v2289 = vadd.f32 %v2265, %v2281
        %2290 = vset.pattern.permute.xlu0 7
        %2291 = vperm.xlu0 %2290, %v1761
        %v2292 = vpop.permute.xlu0 %2291
        %v2294 = vmul.f32 %v2292, %v2128
        %v2295 = vmul.f32 %v2292, %v2132
        %v2296 = vmul.f32 %v2292, %v2136
        %2300 = vrot.lane.b32.xlu0 %v2294, 91
        %v2301 = vpop.permute.xlu0 %2300
        %2302 = vrot.lane.b32.xlu0 %v2295, 91
        %v2303 = vpop.permute.xlu0 %2302
        %2304 = vrot.lane.b32.xlu0 %v2296, 91
        %v2305 = vpop.permute.xlu0 %2304
        %v2306 = vsel %vm2083, %v2301, %v2303
        %v2307 = vsel %vm2083, %v2303, %v2305
        %v2311 = vadd.f32 %v2287, %v2306
        %v2312 = vadd.f32 %v2288, %v2307
        %v2313 = vadd.f32 %v2289, %v2305
        %2314 = vset.pattern.permute.xlu0 8
        %2315 = vperm.xlu0 %2314, %v1761
        %v2316 = vpop.permute.xlu0 %2315
        %v2318 = vmul.f32 %v2316, %v2128
        %v2319 = vmul.f32 %v2316, %v2132
        %v2320 = vmul.f32 %v2316, %v2136
        %2324 = vrot.lane.b32.xlu0 %v2318, 90
        %v2325 = vpop.permute.xlu0 %2324
        %2326 = vrot.lane.b32.xlu0 %v2319, 90
        %v2327 = vpop.permute.xlu0 %2326
        %2328 = vrot.lane.b32.xlu0 %v2320, 90
        %v2329 = vpop.permute.xlu0 %2328
        %v2330 = vsel %vm2108, %v2325, %v2327
        %v2331 = vsel %vm2108, %v2327, %v2329
        %v2335 = vadd.f32 %v2311, %v2330
        %v2336 = vadd.f32 %v2312, %v2331
        %v2337 = vadd.f32 %v2313, %v2329
        %s2338 = scalar_lea.vmem [#allocation2], 2
        %v2339 = vld [vmem:[%s2338] ss:$4 sm:$0x7]
        %2341 = vset.pattern.permute.xlu0 0
        %2342 = vperm.xlu0 %2341, %v1762
        %v2343 = vpop.permute.xlu0 %2342
        %v2346 = vlaneseq
        %v2347 = vshrl.u32 %v2346, 7
        %v2348 = vsub.s32 0, %v2347
        %v2349 = vrot.slane %v2339, %v2348
        %v2350 = vlaneseq
        %v2351 = vshrl.u32 %v2350, 7
        %v2352 = vsub.s32 1, %v2351
        %v2353 = vrot.slane %v2339, %v2352
        %v2354 = vlaneseq
        %v2355 = vshrl.u32 %v2354, 7
        %v2356 = vsub.s32 2, %v2355
        %v2357 = vrot.slane %v2339, %v2356
        %v2361 = vmul.f32 %v2343, %v2349
        %v2362 = vmul.f32 %v2343, %v2353
        %v2363 = vmul.f32 %v2343, %v2357
        %v2364 = vadd.f32 %v2335, %v2361
        %v2365 = vadd.f32 %v2336, %v2362
        %v2366 = vadd.f32 %v2337, %v2363
        %2367 = vset.pattern.permute.xlu0 1
        %2368 = vperm.xlu0 %2367, %v1762
        %v2369 = vpop.permute.xlu0 %2368
        %v2371 = vmul.f32 %v2369, %v2349
        %v2372 = vmul.f32 %v2369, %v2353
        %v2373 = vmul.f32 %v2369, %v2357
        %2377 = vrot.lane.b32.xlu0 %v2371, 127
        %v2378 = vpop.permute.xlu0 %2377
        %2379 = vrot.lane.b32.xlu0 %v2372, 127
        %v2380 = vpop.permute.xlu0 %2379
        %2381 = vrot.lane.b32.xlu0 %v2373, 127
        %v2382 = vpop.permute.xlu0 %2381
        %v2383 = vsel %vm1933, %v2378, %v2380
        %v2384 = vsel %vm1933, %v2380, %v2382
        %v2388 = vadd.f32 %v2364, %v2383
        %v2389 = vadd.f32 %v2365, %v2384
        %v2390 = vadd.f32 %v2366, %v2382
        %2391 = vset.pattern.permute.xlu0 2
        %2392 = vperm.xlu0 %2391, %v1762
        %v2393 = vpop.permute.xlu0 %2392
        %v2395 = vmul.f32 %v2393, %v2349
        %v2396 = vmul.f32 %v2393, %v2353
        %v2397 = vmul.f32 %v2393, %v2357
        %2401 = vrot.lane.b32.xlu0 %v2395, 126
        %v2402 = vpop.permute.xlu0 %2401
        %2403 = vrot.lane.b32.xlu0 %v2396, 126
        %v2404 = vpop.permute.xlu0 %2403
        %2405 = vrot.lane.b32.xlu0 %v2397, 126
        %v2406 = vpop.permute.xlu0 %2405
        %v2407 = vsel %vm1958, %v2402, %v2404
        %v2408 = vsel %vm1958, %v2404, %v2406
        %v2412 = vadd.f32 %v2388, %v2407
        %v2413 = vadd.f32 %v2389, %v2408
        %v2414 = vadd.f32 %v2390, %v2406
        %2415 = vset.pattern.permute.xlu0 3
        %2416 = vperm.xlu0 %2415, %v1762
        %v2417 = vpop.permute.xlu0 %2416
        %v2419 = vmul.f32 %v2417, %v2349
        %v2420 = vmul.f32 %v2417, %v2353
        %v2421 = vmul.f32 %v2417, %v2357
        %2425 = vrot.lane.b32.xlu0 %v2419, 110
        %v2426 = vpop.permute.xlu0 %2425
        %2427 = vrot.lane.b32.xlu0 %v2420, 110
        %v2428 = vpop.permute.xlu0 %2427
        %2429 = vrot.lane.b32.xlu0 %v2421, 110
        %v2430 = vpop.permute.xlu0 %2429
        %v2431 = vsel %vm1983, %v2426, %v2428
        %v2432 = vsel %vm1983, %v2428, %v2430
        %v2436 = vadd.f32 %v2412, %v2431
        %v2437 = vadd.f32 %v2413, %v2432
        %v2438 = vadd.f32 %v2414, %v2430
        %2439 = vset.pattern.permute.xlu0 4
        %2440 = vperm.xlu0 %2439, %v1762
        %v2441 = vpop.permute.xlu0 %2440
        %v2443 = vmul.f32 %v2441, %v2349
        %v2444 = vmul.f32 %v2441, %v2353
        %v2445 = vmul.f32 %v2441, %v2357
        %2449 = vrot.lane.b32.xlu0 %v2443, 109
        %v2450 = vpop.permute.xlu0 %2449
        %2451 = vrot.lane.b32.xlu0 %v2444, 109
        %v2452 = vpop.permute.xlu0 %2451
        %2453 = vrot.lane.b32.xlu0 %v2445, 109
        %v2454 = vpop.permute.xlu0 %2453
        %v2455 = vsel %vm2008, %v2450, %v2452
        %v2456 = vsel %vm2008, %v2452, %v2454
        %v2460 = vadd.f32 %v2436, %v2455
        %v2461 = vadd.f32 %v2437, %v2456
        %v2462 = vadd.f32 %v2438, %v2454
        %2463 = vset.pattern.permute.xlu0 5
        %2464 = vperm.xlu0 %2463, %v1762
        %v2465 = vpop.permute.xlu0 %2464
        %v2467 = vmul.f32 %v2465, %v2349
        %v2468 = vmul.f32 %v2465, %v2353
        %v2469 = vmul.f32 %v2465, %v2357
        %2473 = vrot.lane.b32.xlu0 %v2467, 108
        %v2474 = vpop.permute.xlu0 %2473
        %2475 = vrot.lane.b32.xlu0 %v2468, 108
        %v2476 = vpop.permute.xlu0 %2475
        %2477 = vrot.lane.b32.xlu0 %v2469, 108
        %v2478 = vpop.permute.xlu0 %2477
        %v2479 = vsel %vm2033, %v2474, %v2476
        %v2480 = vsel %vm2033, %v2476, %v2478
        %v2484 = vadd.f32 %v2460, %v2479
        %v2485 = vadd.f32 %v2461, %v2480
        %v2486 = vadd.f32 %v2462, %v2478
        %2487 = vset.pattern.permute.xlu0 6
        %2488 = vperm.xlu0 %2487, %v1762
        %v2489 = vpop.permute.xlu0 %2488
        %v2491 = vmul.f32 %v2489, %v2349
        %v2492 = vmul.f32 %v2489, %v2353
        %v2493 = vmul.f32 %v2489, %v2357
        %2497 = vrot.lane.b32.xlu0 %v2491, 92
        %v2498 = vpop.permute.xlu0 %2497
        %2499 = vrot.lane.b32.xlu0 %v2492, 92
        %v2500 = vpop.permute.xlu0 %2499
        %2501 = vrot.lane.b32.xlu0 %v2493, 92
        %v2502 = vpop.permute.xlu0 %2501
        %v2503 = vsel %vm2058, %v2498, %v2500
        %v2504 = vsel %vm2058, %v2500, %v2502
        %v2508 = vadd.f32 %v2484, %v2503
        %v2509 = vadd.f32 %v2485, %v2504
        %v2510 = vadd.f32 %v2486, %v2502
        %2511 = vset.pattern.permute.xlu0 7
        %2512 = vperm.xlu0 %2511, %v1762
        %v2513 = vpop.permute.xlu0 %2512
        %v2515 = vmul.f32 %v2513, %v2349
        %v2516 = vmul.f32 %v2513, %v2353
        %v2517 = vmul.f32 %v2513, %v2357
        %2521 = vrot.lane.b32.xlu0 %v2515, 91
        %v2522 = vpop.permute.xlu0 %2521
        %2523 = vrot.lane.b32.xlu0 %v2516, 91
        %v2524 = vpop.permute.xlu0 %2523
        %2525 = vrot.lane.b32.xlu0 %v2517, 91
        %v2526 = vpop.permute.xlu0 %2525
        %v2527 = vsel %vm2083, %v2522, %v2524
        %v2528 = vsel %vm2083, %v2524, %v2526
        %v2532 = vadd.f32 %v2508, %v2527
        %v2533 = vadd.f32 %v2509, %v2528
        %v2534 = vadd.f32 %v2510, %v2526
        %2535 = vset.pattern.permute.xlu0 8
        %2536 = vperm.xlu0 %2535, %v1762
        %v2537 = vpop.permute.xlu0 %2536
        %v2539 = vmul.f32 %v2537, %v2349
        %v2540 = vmul.f32 %v2537, %v2353
        %v2541 = vmul.f32 %v2537, %v2357
        %2545 = vrot.lane.b32.xlu0 %v2539, 90
        %v2546 = vpop.permute.xlu0 %2545
        %2547 = vrot.lane.b32.xlu0 %v2540, 90
        %v2548 = vpop.permute.xlu0 %2547
        %2549 = vrot.lane.b32.xlu0 %v2541, 90
        %v2550 = vpop.permute.xlu0 %2549
        %v2551 = vsel %vm2108, %v2546, %v2548
        %v2552 = vsel %vm2108, %v2548, %v2550
        %v2556 = vadd.f32 %v2532, %v2551
        %v2557 = vadd.f32 %v2533, %v2552
        %v2558 = vadd.f32 %v2534, %v2550
        %s2559 = scalar_lea.vmem [#allocation2], 3
        %v2560 = vld [vmem:[%s2559] ss:$4 sm:$0x7]
        %2562 = vset.pattern.permute.xlu0 0
        %2563 = vperm.xlu0 %2562, %v1763
        %v2564 = vpop.permute.xlu0 %2563
        %v2567 = vlaneseq
        %v2568 = vshrl.u32 %v2567, 7
        %v2569 = vsub.s32 0, %v2568
        %v2570 = vrot.slane %v2560, %v2569
        %v2571 = vlaneseq
        %v2572 = vshrl.u32 %v2571, 7
        %v2573 = vsub.s32 1, %v2572
        %v2574 = vrot.slane %v2560, %v2573
        %v2575 = vlaneseq
        %v2576 = vshrl.u32 %v2575, 7
        %v2577 = vsub.s32 2, %v2576
        %v2578 = vrot.slane %v2560, %v2577
        %v2582 = vmul.f32 %v2564, %v2570
        %v2583 = vmul.f32 %v2564, %v2574
        %v2584 = vmul.f32 %v2564, %v2578
        %v2585 = vadd.f32 %v2556, %v2582
        %v2586 = vadd.f32 %v2557, %v2583
        %v2587 = vadd.f32 %v2558, %v2584
        %2588 = vset.pattern.permute.xlu0 1
        %2589 = vperm.xlu0 %2588, %v1763
        %v2590 = vpop.permute.xlu0 %2589
        %v2592 = vmul.f32 %v2590, %v2570
        %v2593 = vmul.f32 %v2590, %v2574
        %v2594 = vmul.f32 %v2590, %v2578
        %2598 = vrot.lane.b32.xlu0 %v2592, 127
        %v2599 = vpop.permute.xlu0 %2598
        %2600 = vrot.lane.b32.xlu0 %v2593, 127
        %v2601 = vpop.permute.xlu0 %2600
        %2602 = vrot.lane.b32.xlu0 %v2594, 127
        %v2603 = vpop.permute.xlu0 %2602
        %v2604 = vsel %vm1933, %v2599, %v2601
        %v2605 = vsel %vm1933, %v2601, %v2603
        %v2609 = vadd.f32 %v2585, %v2604
        %v2610 = vadd.f32 %v2586, %v2605
        %v2611 = vadd.f32 %v2587, %v2603
        %2612 = vset.pattern.permute.xlu0 2
        %2613 = vperm.xlu0 %2612, %v1763
        %v2614 = vpop.permute.xlu0 %2613
        %v2616 = vmul.f32 %v2614, %v2570
        %v2617 = vmul.f32 %v2614, %v2574
        %v2618 = vmul.f32 %v2614, %v2578
        %2622 = vrot.lane.b32.xlu0 %v2616, 126
        %v2623 = vpop.permute.xlu0 %2622
        %2624 = vrot.lane.b32.xlu0 %v2617, 126
        %v2625 = vpop.permute.xlu0 %2624
        %2626 = vrot.lane.b32.xlu0 %v2618, 126
        %v2627 = vpop.permute.xlu0 %2626
        %v2628 = vsel %vm1958, %v2623, %v2625
        %v2629 = vsel %vm1958, %v2625, %v2627
        %v2633 = vadd.f32 %v2609, %v2628
        %v2634 = vadd.f32 %v2610, %v2629
        %v2635 = vadd.f32 %v2611, %v2627
        %2636 = vset.pattern.permute.xlu0 3
        %2637 = vperm.xlu0 %2636, %v1763
        %v2638 = vpop.permute.xlu0 %2637
        %v2640 = vmul.f32 %v2638, %v2570
        %v2641 = vmul.f32 %v2638, %v2574
        %v2642 = vmul.f32 %v2638, %v2578
        %2646 = vrot.lane.b32.xlu0 %v2640, 110
        %v2647 = vpop.permute.xlu0 %2646
        %2648 = vrot.lane.b32.xlu0 %v2641, 110
        %v2649 = vpop.permute.xlu0 %2648
        %2650 = vrot.lane.b32.xlu0 %v2642, 110
        %v2651 = vpop.permute.xlu0 %2650
        %v2652 = vsel %vm1983, %v2647, %v2649
        %v2653 = vsel %vm1983, %v2649, %v2651
        %v2657 = vadd.f32 %v2633, %v2652
        %v2658 = vadd.f32 %v2634, %v2653
        %v2659 = vadd.f32 %v2635, %v2651
        %2660 = vset.pattern.permute.xlu0 4
        %2661 = vperm.xlu0 %2660, %v1763
        %v2662 = vpop.permute.xlu0 %2661
        %v2664 = vmul.f32 %v2662, %v2570
        %v2665 = vmul.f32 %v2662, %v2574
        %v2666 = vmul.f32 %v2662, %v2578
        %2670 = vrot.lane.b32.xlu0 %v2664, 109
        %v2671 = vpop.permute.xlu0 %2670
        %2672 = vrot.lane.b32.xlu0 %v2665, 109
        %v2673 = vpop.permute.xlu0 %2672
        %2674 = vrot.lane.b32.xlu0 %v2666, 109
        %v2675 = vpop.permute.xlu0 %2674
        %v2676 = vsel %vm2008, %v2671, %v2673
        %v2677 = vsel %vm2008, %v2673, %v2675
        %v2681 = vadd.f32 %v2657, %v2676
        %v2682 = vadd.f32 %v2658, %v2677
        %v2683 = vadd.f32 %v2659, %v2675
        %2684 = vset.pattern.permute.xlu0 5
        %2685 = vperm.xlu0 %2684, %v1763
        %v2686 = vpop.permute.xlu0 %2685
        %v2688 = vmul.f32 %v2686, %v2570
        %v2689 = vmul.f32 %v2686, %v2574
        %v2690 = vmul.f32 %v2686, %v2578
        %2694 = vrot.lane.b32.xlu0 %v2688, 108
        %v2695 = vpop.permute.xlu0 %2694
        %2696 = vrot.lane.b32.xlu0 %v2689, 108
        %v2697 = vpop.permute.xlu0 %2696
        %2698 = vrot.lane.b32.xlu0 %v2690, 108
        %v2699 = vpop.permute.xlu0 %2698
        %v2700 = vsel %vm2033, %v2695, %v2697
        %v2701 = vsel %vm2033, %v2697, %v2699
        %v2705 = vadd.f32 %v2681, %v2700
        %v2706 = vadd.f32 %v2682, %v2701
        %v2707 = vadd.f32 %v2683, %v2699
        %2708 = vset.pattern.permute.xlu0 6
        %2709 = vperm.xlu0 %2708, %v1763
        %v2710 = vpop.permute.xlu0 %2709
        %v2712 = vmul.f32 %v2710, %v2570
        %v2713 = vmul.f32 %v2710, %v2574
        %v2714 = vmul.f32 %v2710, %v2578
        %2718 = vrot.lane.b32.xlu0 %v2712, 92
        %v2719 = vpop.permute.xlu0 %2718
        %2720 = vrot.lane.b32.xlu0 %v2713, 92
        %v2721 = vpop.permute.xlu0 %2720
        %2722 = vrot.lane.b32.xlu0 %v2714, 92
        %v2723 = vpop.permute.xlu0 %2722
        %v2724 = vsel %vm2058, %v2719, %v2721
        %v2725 = vsel %vm2058, %v2721, %v2723
        %v2729 = vadd.f32 %v2705, %v2724
        %v2730 = vadd.f32 %v2706, %v2725
        %v2731 = vadd.f32 %v2707, %v2723
        %2732 = vset.pattern.permute.xlu0 7
        %2733 = vperm.xlu0 %2732, %v1763
        %v2734 = vpop.permute.xlu0 %2733
        %v2736 = vmul.f32 %v2734, %v2570
        %v2737 = vmul.f32 %v2734, %v2574
        %v2738 = vmul.f32 %v2734, %v2578
        %2742 = vrot.lane.b32.xlu0 %v2736, 91
        %v2743 = vpop.permute.xlu0 %2742
        %2744 = vrot.lane.b32.xlu0 %v2737, 91
        %v2745 = vpop.permute.xlu0 %2744
        %2746 = vrot.lane.b32.xlu0 %v2738, 91
        %v2747 = vpop.permute.xlu0 %2746
        %v2748 = vsel %vm2083, %v2743, %v2745
        %v2749 = vsel %vm2083, %v2745, %v2747
        %v2753 = vadd.f32 %v2729, %v2748
        %v2754 = vadd.f32 %v2730, %v2749
        %v2755 = vadd.f32 %v2731, %v2747
        %2756 = vset.pattern.permute.xlu0 8
        %2757 = vperm.xlu0 %2756, %v1763
        %v2758 = vpop.permute.xlu0 %2757
        %v2760 = vmul.f32 %v2758, %v2570
        %v2761 = vmul.f32 %v2758, %v2574
        %v2762 = vmul.f32 %v2758, %v2578
        %2766 = vrot.lane.b32.xlu0 %v2760, 90
        %v2767 = vpop.permute.xlu0 %2766
        %2768 = vrot.lane.b32.xlu0 %v2761, 90
        %v2769 = vpop.permute.xlu0 %2768
        %2770 = vrot.lane.b32.xlu0 %v2762, 90
        %v2771 = vpop.permute.xlu0 %2770
        %v2772 = vsel %vm2108, %v2767, %v2769
        %v2773 = vsel %vm2108, %v2769, %v2771
        %v2777 = vadd.f32 %v2753, %v2772
        %v2778 = vadd.f32 %v2754, %v2773
        %v2779 = vadd.f32 %v2755, %v2771
        %vm2780 = vcmask 130048
        %2781 = vst.msk [vmem:[%s163] sm:$0xff] %vm2780, %v2777
        %2783 = vrot.lane.b32.xlu0 %v2777, 126
        %v2784 = vpop.permute.xlu0 %2783
        %vm2786 = vcmask 261248
        %2787 = vst.msk [vmem:[%s163] sm:$0xff] %vm2786, %v2784
        %2788 = vrot.lane.b32.xlu0 %v2777, 124
        %v2789 = vpop.permute.xlu0 %2788
        %vm2791 = vcmask 392448
        %2792 = vst.msk [vmem:[%s163] sm:$0xff] %vm2791, %v2789
        %2793 = vrot.lane.b32.xlu0 %v2777, 122
        %v2794 = vpop.permute.xlu0 %2793
        %vm2796 = vcmask 523648
        %2797 = vst.msk [vmem:[%s163] sm:$0xff] %vm2796, %v2794
        %2798 = vrot.lane.b32.xlu0 %v2777, 120
        %v2799 = vpop.permute.xlu0 %2798
        %vm2801 = vcmask 654848
        %2802 = vst.msk [vmem:[%s163] sm:$0xff] %vm2801, %v2799
        %2803 = vrot.lane.b32.xlu0 %v2777, 118
        %v2804 = vpop.permute.xlu0 %2803
        %vm2806 = vcmask 786048
        %2807 = vst.msk [vmem:[%s163] sm:$0xff] %vm2806, %v2804
        %2808 = vrot.lane.b32.xlu0 %v2777, 116
        %v2809 = vpop.permute.xlu0 %2808
        %vm2811 = vcmask 917248
        %2812 = vst.msk [vmem:[%s163] sm:$0xff] %vm2811, %v2809
        %2814 = vrot.lane.b32.xlu0 %v2777, 114
        %v2815 = vpop.permute.xlu0 %2814
        %2816 = vrot.lane.b32.xlu0 %v2778, 114
        %v2817 = vpop.permute.xlu0 %2816
        %vm2818 = vcmask 932864
        %v2819 = vsel %vm2818, %v2815, %v2817
        %vm2821 = vcmask 1048448
        %2822 = vst.msk [vmem:[%s163] sm:$0xff] %vm2821, %v2819
        %2823 = vrot.lane.b32.xlu0 %v2778, 112
        %v2824 = vpop.permute.xlu0 %2823
        %2826 = vst.msk [vmem:[%s163 + $0x8] sm:$0xff] %vm2780, %v2824
        %2827 = vrot.lane.b32.xlu0 %v2778, 110
        %v2828 = vpop.permute.xlu0 %2827
        %2830 = vst.msk [vmem:[%s163 + $0x8] sm:$0xff] %vm2786, %v2828
        %2831 = vrot.lane.b32.xlu0 %v2778, 108
        %v2832 = vpop.permute.xlu0 %2831
        %2834 = vst.msk [vmem:[%s163 + $0x8] sm:$0xff] %vm2791, %v2832
        %2835 = vrot.lane.b32.xlu0 %v2778, 106
        %v2836 = vpop.permute.xlu0 %2835
        %2838 = vst.msk [vmem:[%s163 + $0x8] sm:$0xff] %vm2796, %v2836
        %2839 = vrot.lane.b32.xlu0 %v2778, 104
        %v2840 = vpop.permute.xlu0 %2839
        %2842 = vst.msk [vmem:[%s163 + $0x8] sm:$0xff] %vm2801, %v2840
        %2843 = vrot.lane.b32.xlu0 %v2778, 102
        %v2844 = vpop.permute.xlu0 %2843
        %2846 = vst.msk [vmem:[%s163 + $0x8] sm:$0xff] %vm2806, %v2844
        %2848 = vrot.lane.b32.xlu0 %v2778, 100
        %v2849 = vpop.permute.xlu0 %2848
        %2850 = vrot.lane.b32.xlu0 %v2779, 100
        %v2851 = vpop.permute.xlu0 %2850
        %vm2852 = vcmask 818176
        %v2853 = vsel %vm2852, %v2849, %v2851
        %2855 = vst.msk [vmem:[%s163 + $0x8] sm:$0xff] %vm2811, %v2853
        %2856 = vrot.lane.b32.xlu0 %v2779, 98
        %v2857 = vpop.permute.xlu0 %2856
        %2859 = vst.msk [vmem:[%s163 + $0x8] sm:$0xff] %vm2821, %v2857
        %s2860 = sand.u32 %s93, 1
        %s2861 = scalar_lea.sflag [#allocation4], %s2860
        %s2862 = sand.u32 %s93, 1
        %s2863 = smul.addr %s2862, 16
        %s2864 = scalar_lea.vmem [#allocation3], %s2863
        // Predicated region
        $region33: #{tpu_custom_call.1} parent=31 // pred_check
          %p2865 = pneg %p103
        $region34: #{tpu_custom_call.1} parent=31 // pred_check_branch
          %2867 = sbr.rel (%p2865) target = $region36
        $region35: #{tpu_custom_call.1} parent=31 // pred_region
          %s2869 = ssub.s32 256, 256
          %2870 = vsyncadd %s2861, %s2869
          %s2871 = smul.addr %s17, 2
          %s2872 = smul.addr %s2871, 128
          %s2873 = scalar_lea.hbm %s3, %s2872
          %s2875 = sshll.u32 %s2864, 4
          %s2876 = int_to_ptr.vmem [resolvable:$true] %s2875
          %2878 = dma.vmem_to_hbm [thread:$0]  %s2876, 256, %s2873, %s2861
        $region36: #{tpu_custom_call.1} parent=31 // pred_fallthru
          _
      $region32: #{tpu_custom_call.1} parent=5 // pred_fallthru
        _
      %p2879 = scmp.le.s32.totalorder 2, %s12
      // Predicated region
      $region37: #{tpu_custom_call.1} parent=5 // pred_check
        %p2880 = pneg %p2879
      $region38: #{tpu_custom_call.1} parent=5 // pred_check_branch
        %2882 = sbr.rel (%p2880) target = $region40
      $region39: #{tpu_custom_call.1} parent=5 // pred_region
        %s2883 = ssub.s32 %s12, 2
        // Predicated region
        $region41: #{tpu_custom_call.1} parent=39 // pred_check
          %p2884 = pneg %p109
        $region42: #{tpu_custom_call.1} parent=39 // pred_check_branch
          %2886 = sbr.rel (%p2884) target = $region44
        $region43: #{tpu_custom_call.1} parent=39 // pred_region
          %s2887 = sand.u32 %s94, 1
          %s2888 = scalar_lea.sflag [#allocation4], %s2887
          %s2889 = sand.u32 %s94, 1
          %s2890 = smul.addr %s2889, 16
          %s2891 = scalar_lea.vmem [#allocation3], %s2890
          %2892 = dma.done %s2888, 256
        $region44: #{tpu_custom_call.1} parent=39 // pred_fallthru
          _
      $region40: #{tpu_custom_call.1} parent=5 // pred_fallthru
        _
    $region6: #{tpu_custom_call.1} parent=1 // loop_footer
      %s16 = sadd.s32 1, %s12
    $region7: #{tpu_custom_call.1} parent=1 // loop_footer_branch
      %11 = sbr.rel target = $region3
    $region8: #{tpu_custom_call.1} parent=1 // loop_exit
      _
    %2893 = vsyncpa [#allocation4], 1
    %s2894 = scalar_lea.sflag [#allocation4], 1
    %2895 = vsyncpa %s2894, 1

</llo_original>
